<compile_context>
chip_gen: v5e
topology: v5e:2x2
jax: 0.10.0
libtpu: 0.0.40
codegen_flags: <defaults>
</compile_context>

<pallas_src>
import numpy as np
import jax
import jax.numpy as jnp
from jax.experimental import pallas as pl
from jax.experimental.pallas import tpu as pltpu

LEAKY_SLOPE = 0.01   # nn.LeakyReLU() default negative_slope
BN_EPS = 1e-5        # nn.BatchNorm1d default eps
CODE = 512           # codeword channels (module fixes fold inputs to 514/515)


def _leaky(h):
    return jnp.where(h > 0, h, LEAKY_SLOPE * h)


# ---------------------------------------------------------------------------
# Pallas kernel: one (batch, M-tile) step of the whole FBDecoder forward.
# All BN scales are pre-folded into the weights / grid table; only per-layer
# shifts (biases) remain.  Codeword biases arrive precomputed per batch.
# ---------------------------------------------------------------------------
def fbdecoder_kernel(cwb1_ref, cwb2_ref, gfeat_ref,
                     w2_ref, b2_ref, w3_ref, b3_ref,
                     w4y_ref,
                     w5_ref, b5_ref, w6_ref, b6_ref,
                     o_ref):
    # ---------------- fold1 ----------------
    # layer 1: [cw | grid] @ W1*s1 + b1  ==  grid_feat1(bf16, pre-scaled)
    #                                       + codeword bias (f32, shift folded)
    h = gfeat_ref[...].astype(jnp.float32) + cwb1_ref[0]              # (TM, 512)
    h = _leaky(h)

    h = jnp.dot(h.astype(jnp.bfloat16), w2_ref[...],
                preferred_element_type=jnp.float32)                   # MXU bf16
    h = _leaky(h + b2_ref[...])

    h = jnp.dot(h, w3_ref[...], preferred_element_type=jnp.float32)   # (TM, 3) f32
    y1 = _leaky(h + b3_ref[...])

    # ---------------- fold2 ----------------
    # layer 1: [y1 | cw] @ W4*s4 + b4  ==  3 rank-1 VPU products + cw bias
    w4y = w4y_ref[...]                                                 # (3, 512)
    h = (y1[:, 0:1] * w4y[0:1, :]
         + y1[:, 1:2] * w4y[1:2, :]
         + y1[:, 2:3] * w4y[2:3, :]) + cwb2_ref[0]                     # (TM, 512)
    h = _leaky(h)

    h = jnp.dot(h.astype(jnp.bfloat16), w5_ref[...],
                preferred_element_type=jnp.float32)
    h = _leaky(h + b5_ref[...])

    h = jnp.dot(h, w6_ref[...], preferred_element_type=jnp.float32)   # (TM, 3)
    h = _leaky(h + b6_ref[...])

    o_ref[0] = h.astype(o_ref.dtype)


# ---------------------------------------------------------------------------
# Wrapper
# ---------------------------------------------------------------------------
def _choose_tile_m(m):
    if m >= 512:
        return 512
    return ((m + 7) // 8) * 8        # single tile covering all (padded) rows


def fbdecoder_forward(codeword, kp):
    """codeword: (B, 1, 512) f32 -> (B, M, 3) f32."""
    B = codeword.shape[0]
    M = kp["m_orig"]
    TM = kp["tile_m"]
    Mpad = kp["grid_feat1"].shape[0]

    # Hoisted codeword-bias matmuls (f32; BN scale/shift already folded in).
    cw = codeword[:, 0, :]                                            # (B, 512)
    cwb1 = (jnp.dot(cw, kp["w1cw"]) + kp["b1"])[:, None, :]           # (B, 1, 512)
    cwb2 = (jnp.dot(cw, kp["w4cw"]) + kp["b4"])[:, None, :]           # (B, 1, 512)

    const_args = (kp["w2"], kp["b2"], kp["w3"], kp["b3"], kp["w4y"],
                  kp["w5"], kp["b5"], kp["w6"], kp["b6"])

    def _const2d(b, m):               # constants: full-array block, resident
        return (0, 0)

    in_specs = (
        [pl.BlockSpec((1, 1, CODE), lambda b, m: (b, 0, 0)),          # cwb1
         pl.BlockSpec((1, 1, CODE), lambda b, m: (b, 0, 0)),          # cwb2
         pl.BlockSpec((TM, CODE), lambda b, m: (m, 0))]               # grid_feat1
        + [pl.BlockSpec(a.shape, _const2d) for a in const_args]
    )

    out = pl.pallas_call(
        fbdecoder_kernel,
        out_shape=jax.ShapeDtypeStruct((B, Mpad, 3), jnp.float32),
        grid=(B, Mpad // TM),
        in_specs=in_specs,
        out_specs=pl.BlockSpec((1, TM, 3), lambda b, m: (b, m, 0)),
        compiler_params=pltpu.CompilerParams(
            dimension_semantics=("parallel", "parallel"),
            vmem_limit_bytes=48 * 1024 * 1024),
    )(cwb1, cwb2, kp["grid_feat1"], *const_args)

    return out[:, :M, :] if Mpad != M else out


# ---------------------------------------------------------------------------
# Deterministic parameter construction (synthetic weights, BN folded)
# ---------------------------------------------------------------------------
def make_folding_params(key, in_channels, out_channels):
    """One Folding block's params; BN folded to per-channel scale/shift."""
    # TODO(synk): BatchNorm1d is folded in eval (running-stats) form; PyTorch
    # training-mode batch statistics are not reproduced.
    params = []
    cin = in_channels
    for cout in out_channels:
        key, k1, k2, k3, k4, k5 = jax.random.split(key, 6)
        # Conv1d weight (out, in, 1) in PyTorch -> stored here as (in, out).
        w = jax.random.normal(k1, (cin, cout), jnp.float32) * 0.02
        gamma = jax.random.uniform(k2, (cout,), jnp.float32, 0.5, 1.5)
        beta = jax.random.normal(k3, (cout,), jnp.float32) * 0.1
        rmean = jax.random.normal(k4, (cout,), jnp.float32) * 0.1
        rvar = jax.random.uniform(k5, (cout,), jnp.float32, 0.5, 1.5)
        scale = gamma / jnp.sqrt(rvar + BN_EPS)
        shift = beta - rmean * scale
        params.append((w, scale.reshape(1, cout), shift.reshape(1, cout)))
        cin = cout
    return params, key


def make_grid(num_points):
    """Exactly reproduces the PyTorch meshgrid/reshape(-1, 2) construction."""
    lin = np.linspace(-0.5, 0.5, num_points, dtype=np.float32)
    g = np.array(np.meshgrid(lin, lin))          # (2, N, N)
    return jnp.asarray(g.reshape(-1, 2))         # (N*N, 2)


def prepare_kernel_params(grid_pts, fold1_params, fold2_params):
    """Fold BN scales into weights, pre-compute the grid table (padded, bf16),
    and split the fold layer-1 weights for the algebraic decomposition."""
    (w1, s1, b1), (w2, s2, b2), (w3, s3, b3) = fold1_params
    (w4, s4, b4), (w5, s5, b5), (w6, s6, b6) = fold2_params
    bf = jnp.bfloat16

    M = grid_pts.shape[0]
    TM = _choose_tile_m(M)
    Mpad = ((M + TM - 1) // TM) * TM

    # fold1 layer-1 input channel order was [codeword (512) | grid (2)].
    gfeat = jnp.dot(grid_pts, w1[CODE:, :]) * s1            # (M, 512), BN-scaled
    if Mpad != M:
        gfeat = jnp.pad(gfeat, ((0, Mpad - M), (0, 0)))

    return dict(
        m_orig=M, tile_m=TM,
        grid_feat1=gfeat.astype(bf),
        # wrapper-side codeword-bias weights (f32, BN scale folded; shift kept)
        w1cw=w1[:CODE, :] * s1, b1=b1,
        # fold2 layer-1 input channel order was [fold1 output (3) | codeword (512)].
        w4cw=w4[3:, :] * s4, b4=b4,
        # in-kernel layers: BN scale folded into weights, shift passed separately
        w2=(w2 * s2).astype(bf), b2=b2,
        w3=(w3 * s3), b3=b3,
        w4y=(w4[:3, :] * s4),
        w5=(w5 * s5).astype(bf), b5=b5,
        w6=(w6 * s6), b6=b6,
    )


# ---------------------------------------------------------------------------
# Pure-JAX f32 reference (original concat + full-weight formulation)
# ---------------------------------------------------------------------------
def _folding_ref(x, params):
    for (w, s, sh) in params:
        h = jnp.einsum("bmi,io->bmo", x, w) * s + sh
        x = jnp.where(h > 0, h, LEAKY_SLOPE * h)
    return x


def _fbdecoder_ref(codeword, grid_pts, p1, p2):
    B, M, C = codeword.shape[0], grid_pts.shape[0], codeword.shape[2]
    cw = jnp.broadcast_to(codeword, (B, M, C))
    g = jnp.broadcast_to(grid_pts[None], (B, M, 2))
    x = _folding_ref(jnp.concatenate([cw, g], axis=2), p1)
    x = _folding_ref(jnp.concatenate([x, cw], axis=2), p2)
    return x


if __name__ == "__main__":
    num_points = 8          # small spatial grid -> M = 64 points
    B = 2

    key = jax.random.PRNGKey(0)
    key, kcw = jax.random.split(key)
    codeword = jax.random.normal(kcw, (B, 1, CODE), jnp.float32)

    grid_pts = make_grid(num_points)                     # (64, 2)
    fold1_params, key = make_folding_params(key, CODE + 2, (512, 512, 3))
    fold2_params, key = make_folding_params(key, CODE + 3, (512, 512, 3))
    kparams = prepare_kernel_params(grid_pts, fold1_params, fold2_params)

    out = fbdecoder_forward(codeword, kparams)
    out = jax.block_until_ready(out)

    ref = _fbdecoder_ref(codeword, grid_pts, fold1_params, fold2_params)
    assert out.shape == (B, num_points * num_points, 3), out.shape
    # bf16 MXU matmuls / bf16 grid table vs. the f32 reference -> loosened tol.
    np.testing.assert_allclose(np.asarray(out), np.asarray(ref),
                               rtol=5e-2, atol=2e-2)
    print("KERNEL_OK")
</pallas_src>

<mosaic_0001>
module attributes {stable_mosaic.version = 11 : i64} {
  func.func @fbdecoder_kernel(%arg0: i32, %arg1: i32, %arg2: memref<1x1x512xf32, #tpu.memory_space<vmem>>, %arg3: memref<1x1x512xf32, #tpu.memory_space<vmem>>, %arg4: memref<64x512xbf16, #tpu.memory_space<vmem>>, %arg5: memref<512x512xbf16, #tpu.memory_space<vmem>>, %arg6: memref<1x512xf32, #tpu.memory_space<vmem>>, %arg7: memref<512x3xf32, #tpu.memory_space<vmem>>, %arg8: memref<1x3xf32, #tpu.memory_space<vmem>>, %arg9: memref<3x512xf32, #tpu.memory_space<vmem>>, %arg10: memref<512x512xbf16, #tpu.memory_space<vmem>>, %arg11: memref<1x512xf32, #tpu.memory_space<vmem>>, %arg12: memref<512x3xf32, #tpu.memory_space<vmem>>, %arg13: memref<1x3xf32, #tpu.memory_space<vmem>>, %arg14: memref<1x64x3xf32, #tpu.memory_space<vmem>>) attributes {dimension_semantics = [#tpu.dimension_semantics<parallel>, #tpu.dimension_semantics<parallel>], iteration_bounds = array<i64: 2, 1>, scalar_prefetch = 0 : i64, scratch_operands = 0 : i64, tpu.core_type = #tpu.core_type<tc>, window_params = [{transform_indices = @transform_0, window_bounds = array<i64: 1, 1, 512>}, {transform_indices = @transform_1, window_bounds = array<i64: 1, 1, 512>}, {transform_indices = @transform_2, window_bounds = array<i64: 64, 512>}, {pipeline_mode = #tpu.pipeline_mode<synchronous>, transform_indices = @transform_3, window_bounds = array<i64: 512, 512>}, {pipeline_mode = #tpu.pipeline_mode<synchronous>, transform_indices = @transform_4, window_bounds = array<i64: 1, 512>}, {pipeline_mode = #tpu.pipeline_mode<synchronous>, transform_indices = @transform_5, window_bounds = array<i64: 512, 3>}, {pipeline_mode = #tpu.pipeline_mode<synchronous>, transform_indices = @transform_6, window_bounds = array<i64: 1, 3>}, {pipeline_mode = #tpu.pipeline_mode<synchronous>, transform_indices = @transform_7, window_bounds = array<i64: 3, 512>}, {pipeline_mode = #tpu.pipeline_mode<synchronous>, transform_indices = @transform_8, window_bounds = array<i64: 512, 512>}, {pipeline_mode = #tpu.pipeline_mode<synchronous>, transform_indices = @transform_9, window_bounds = array<i64: 1, 512>}, {pipeline_mode = #tpu.pipeline_mode<synchronous>, transform_indices = @transform_10, window_bounds = array<i64: 512, 3>}, {pipeline_mode = #tpu.pipeline_mode<synchronous>, transform_indices = @transform_11, window_bounds = array<i64: 1, 3>}, {transform_indices = @transform_12, window_bounds = array<i64: 1, 64, 3>}]} {
    %c0 = arith.constant 0 : index
    %c0_0 = arith.constant 0 : index
    %0 = vector.load %arg4[%c0, %c0_0] : memref<64x512xbf16, #tpu.memory_space<vmem>>, vector<64x512xbf16>
    %1 = arith.extf %0 : vector<64x512xbf16> to vector<64x512xf32>
    %c0_1 = arith.constant 0 : index
    %c0_2 = arith.constant 0 : index
    %c0_3 = arith.constant 0 : index
    %2 = vector.load %arg2[%c0_1, %c0_2, %c0_3] : memref<1x1x512xf32, #tpu.memory_space<vmem>>, vector<1x1x512xf32>
    %3 = vector.shape_cast %2 : vector<1x1x512xf32> to vector<1x512xf32>
    %4 = vector.broadcast %3 : vector<1x512xf32> to vector<64x512xf32>
    %5 = arith.addf %1, %4 : vector<64x512xf32>
    %cst = arith.constant 0.000000e+00 : f32
    %6 = vector.broadcast %cst : f32 to vector<64x512xf32>
    %7 = arith.cmpf ogt, %5, %6 : vector<64x512xf32>
    %cst_4 = arith.constant 0.00999999977 : f32
    %8 = vector.broadcast %cst_4 : f32 to vector<64x512xf32>
    %9 = arith.mulf %8, %5 : vector<64x512xf32>
    %10 = arith.select %7, %5, %9 : vector<64x512xi1>, vector<64x512xf32>
    %11 = arith.truncf %10 : vector<64x512xf32> to vector<64x512xbf16>
    %c0_5 = arith.constant 0 : index
    %c0_6 = arith.constant 0 : index
    %12 = vector.load %arg5[%c0_5, %c0_6] : memref<512x512xbf16, #tpu.memory_space<vmem>>, vector<512x512xbf16>
    %cst_7 = arith.constant dense<0.000000e+00> : vector<64x512xf32>
    %13 = tpu.matmul %11, %12, %cst_7 {dimension_numbers = #tpu.dot_dimension_numbers<[1], [0], [0], [1], [0, 0, 1, 1], [], []>} : vector<64x512xbf16>, vector<512x512xbf16>, vector<64x512xf32> -> vector<64x512xf32>
    %c0_8 = arith.constant 0 : index
    %c0_9 = arith.constant 0 : index
    %14 = vector.load %arg6[%c0_8, %c0_9] : memref<1x512xf32, #tpu.memory_space<vmem>>, vector<1x512xf32>
    %15 = vector.broadcast %14 : vector<1x512xf32> to vector<64x512xf32>
    %16 = arith.addf %13, %15 : vector<64x512xf32>
    %cst_10 = arith.constant 0.000000e+00 : f32
    %17 = vector.broadcast %cst_10 : f32 to vector<64x512xf32>
    %18 = arith.cmpf ogt, %16, %17 : vector<64x512xf32>
    %cst_11 = arith.constant 0.00999999977 : f32
    %19 = vector.broadcast %cst_11 : f32 to vector<64x512xf32>
    %20 = arith.mulf %19, %16 : vector<64x512xf32>
    %21 = arith.select %18, %16, %20 : vector<64x512xi1>, vector<64x512xf32>
    %c0_12 = arith.constant 0 : index
    %c0_13 = arith.constant 0 : index
    %22 = vector.load %arg7[%c0_12, %c0_13] : memref<512x3xf32, #tpu.memory_space<vmem>>, vector<512x3xf32>
    %cst_14 = arith.constant dense<0.000000e+00> : vector<64x3xf32>
    %23 = tpu.matmul %21, %22, %cst_14 {dimension_numbers = #tpu.dot_dimension_numbers<[1], [0], [0], [1], [0, 0, 1, 1], [], []>} : vector<64x512xf32>, vector<512x3xf32>, vector<64x3xf32> -> vector<64x3xf32>
    %c0_15 = arith.constant 0 : index
    %c0_16 = arith.constant 0 : index
    %24 = vector.load %arg8[%c0_15, %c0_16] : memref<1x3xf32, #tpu.memory_space<vmem>>, vector<1x3xf32>
    %25 = vector.broadcast %24 : vector<1x3xf32> to vector<64x3xf32>
    %26 = arith.addf %23, %25 : vector<64x3xf32>
    %cst_17 = arith.constant 0.000000e+00 : f32
    %27 = vector.broadcast %cst_17 : f32 to vector<64x3xf32>
    %28 = arith.cmpf ogt, %26, %27 : vector<64x3xf32>
    %cst_18 = arith.constant 0.00999999977 : f32
    %29 = vector.broadcast %cst_18 : f32 to vector<64x3xf32>
    %30 = arith.mulf %29, %26 : vector<64x3xf32>
    %31 = arith.select %28, %26, %30 : vector<64x3xi1>, vector<64x3xf32>
    %c0_19 = arith.constant 0 : index
    %c0_20 = arith.constant 0 : index
    %32 = vector.load %arg9[%c0_19, %c0_20] : memref<3x512xf32, #tpu.memory_space<vmem>>, vector<3x512xf32>
    %33 = vector.extract_strided_slice %31 {offsets = [0, 0], sizes = [64, 1], strides = [1, 1]} : vector<64x3xf32> to vector<64x1xf32>
    %34 = vector.extract_strided_slice %32 {offsets = [0, 0], sizes = [1, 512], strides = [1, 1]} : vector<3x512xf32> to vector<1x512xf32>
    %35 = vector.broadcast %33 : vector<64x1xf32> to vector<64x512xf32>
    %36 = vector.broadcast %34 : vector<1x512xf32> to vector<64x512xf32>
    %37 = arith.mulf %35, %36 : vector<64x512xf32>
    %38 = vector.extract_strided_slice %31 {offsets = [0, 1], sizes = [64, 1], strides = [1, 1]} : vector<64x3xf32> to vector<64x1xf32>
    %39 = vector.extract_strided_slice %32 {offsets = [1, 0], sizes = [1, 512], strides = [1, 1]} : vector<3x512xf32> to vector<1x512xf32>
    %40 = vector.broadcast %38 : vector<64x1xf32> to vector<64x512xf32>
    %41 = vector.broadcast %39 : vector<1x512xf32> to vector<64x512xf32>
    %42 = arith.mulf %40, %41 : vector<64x512xf32>
    %43 = arith.addf %37, %42 : vector<64x512xf32>
    %44 = vector.extract_strided_slice %31 {offsets = [0, 2], sizes = [64, 1], strides = [1, 1]} : vector<64x3xf32> to vector<64x1xf32>
    %45 = vector.extract_strided_slice %32 {offsets = [2, 0], sizes = [1, 512], strides = [1, 1]} : vector<3x512xf32> to vector<1x512xf32>
    %46 = vector.broadcast %44 : vector<64x1xf32> to vector<64x512xf32>
    %47 = vector.broadcast %45 : vector<1x512xf32> to vector<64x512xf32>
    %48 = arith.mulf %46, %47 : vector<64x512xf32>
    %49 = arith.addf %43, %48 : vector<64x512xf32>
    %c0_21 = arith.constant 0 : index
    %c0_22 = arith.constant 0 : index
    %c0_23 = arith.constant 0 : index
    %50 = vector.load %arg3[%c0_21, %c0_22, %c0_23] : memref<1x1x512xf32, #tpu.memory_space<vmem>>, vector<1x1x512xf32>
    %51 = vector.shape_cast %50 : vector<1x1x512xf32> to vector<1x512xf32>
    %52 = vector.broadcast %51 : vector<1x512xf32> to vector<64x512xf32>
    %53 = arith.addf %49, %52 : vector<64x512xf32>
    %cst_24 = arith.constant 0.000000e+00 : f32
    %54 = vector.broadcast %cst_24 : f32 to vector<64x512xf32>
    %55 = arith.cmpf ogt, %53, %54 : vector<64x512xf32>
    %cst_25 = arith.constant 0.00999999977 : f32
    %56 = vector.broadcast %cst_25 : f32 to vector<64x512xf32>
    %57 = arith.mulf %56, %53 : vector<64x512xf32>
    %58 = arith.select %55, %53, %57 : vector<64x512xi1>, vector<64x512xf32>
    %59 = arith.truncf %58 : vector<64x512xf32> to vector<64x512xbf16>
    %c0_26 = arith.constant 0 : index
    %c0_27 = arith.constant 0 : index
    %60 = vector.load %arg10[%c0_26, %c0_27] : memref<512x512xbf16, #tpu.memory_space<vmem>>, vector<512x512xbf16>
    %cst_28 = arith.constant dense<0.000000e+00> : vector<64x512xf32>
    %61 = tpu.matmul %59, %60, %cst_28 {dimension_numbers = #tpu.dot_dimension_numbers<[1], [0], [0], [1], [0, 0, 1, 1], [], []>} : vector<64x512xbf16>, vector<512x512xbf16>, vector<64x512xf32> -> vector<64x512xf32>
    %c0_29 = arith.constant 0 : index
    %c0_30 = arith.constant 0 : index
    %62 = vector.load %arg11[%c0_29, %c0_30] : memref<1x512xf32, #tpu.memory_space<vmem>>, vector<1x512xf32>
    %63 = vector.broadcast %62 : vector<1x512xf32> to vector<64x512xf32>
    %64 = arith.addf %61, %63 : vector<64x512xf32>
    %cst_31 = arith.constant 0.000000e+00 : f32
    %65 = vector.broadcast %cst_31 : f32 to vector<64x512xf32>
    %66 = arith.cmpf ogt, %64, %65 : vector<64x512xf32>
    %cst_32 = arith.constant 0.00999999977 : f32
    %67 = vector.broadcast %cst_32 : f32 to vector<64x512xf32>
    %68 = arith.mulf %67, %64 : vector<64x512xf32>
    %69 = arith.select %66, %64, %68 : vector<64x512xi1>, vector<64x512xf32>
    %c0_33 = arith.constant 0 : index
    %c0_34 = arith.constant 0 : index
    %70 = vector.load %arg12[%c0_33, %c0_34] : memref<512x3xf32, #tpu.memory_space<vmem>>, vector<512x3xf32>
    %cst_35 = arith.constant dense<0.000000e+00> : vector<64x3xf32>
    %71 = tpu.matmul %69, %70, %cst_35 {dimension_numbers = #tpu.dot_dimension_numbers<[1], [0], [0], [1], [0, 0, 1, 1], [], []>} : vector<64x512xf32>, vector<512x3xf32>, vector<64x3xf32> -> vector<64x3xf32>
    %c0_36 = arith.constant 0 : index
    %c0_37 = arith.constant 0 : index
    %72 = vector.load %arg13[%c0_36, %c0_37] : memref<1x3xf32, #tpu.memory_space<vmem>>, vector<1x3xf32>
    %73 = vector.broadcast %72 : vector<1x3xf32> to vector<64x3xf32>
    %74 = arith.addf %71, %73 : vector<64x3xf32>
    %cst_38 = arith.constant 0.000000e+00 : f32
    %75 = vector.broadcast %cst_38 : f32 to vector<64x3xf32>
    %76 = arith.cmpf ogt, %74, %75 : vector<64x3xf32>
    %cst_39 = arith.constant 0.00999999977 : f32
    %77 = vector.broadcast %cst_39 : f32 to vector<64x3xf32>
    %78 = arith.mulf %77, %74 : vector<64x3xf32>
    %79 = arith.select %76, %74, %78 : vector<64x3xi1>, vector<64x3xf32>
    %c0_40 = arith.constant 0 : index
    %c0_41 = arith.constant 0 : index
    %c0_42 = arith.constant 0 : index
    %80 = vector.load %arg14[%c0_40, %c0_41, %c0_42] : memref<1x64x3xf32, #tpu.memory_space<vmem>>, vector<1x64x3xf32>
    %81 = vector.shape_cast %80 : vector<1x64x3xf32> to vector<64x3xf32>
    %82 = vector.shape_cast %79 : vector<64x3xf32> to vector<1x64x3xf32>
    tpu.vector_store %arg14[%c0_40, %c0_41, %c0_42], %82 {strides = array<i32>} : memref<1x64x3xf32, #tpu.memory_space<vmem>>, vector<1x64x3xf32>,
    return
  }
  func.func @transform_0(%arg0: i32, %arg1: i32) -> (i32, i32, i32) {
    %c0_i32 = arith.constant 0 : i32
    %c0_i32_0 = arith.constant 0 : i32
    %c0_i32_1 = arith.constant 0 : i32
    return %arg0, %c0_i32, %c0_i32_0 : i32, i32, i32
  }
  func.func @transform_1(%arg0: i32, %arg1: i32) -> (i32, i32, i32) {
    %c0_i32 = arith.constant 0 : i32
    %c0_i32_0 = arith.constant 0 : i32
    %c0_i32_1 = arith.constant 0 : i32
    return %arg0, %c0_i32, %c0_i32_0 : i32, i32, i32
  }
  func.func @transform_2(%arg0: i32, %arg1: i32) -> (i32, i32) {
    %c0_i32 = arith.constant 0 : i32
    %c0_i32_0 = arith.constant 0 : i32
    return %arg1, %c0_i32 : i32, i32
  }
  func.func @transform_3(%arg0: i32, %arg1: i32) -> (i32, i32) {
    %c0_i32 = arith.constant 0 : i32
    %c0_i32_0 = arith.constant 0 : i32
    %c0_i32_1 = arith.constant 0 : i32
    return %c0_i32, %c0_i32_0 : i32, i32
  }
  func.func @transform_4(%arg0: i32, %arg1: i32) -> (i32, i32) {
    %c0_i32 = arith.constant 0 : i32
    %c0_i32_0 = arith.constant 0 : i32
    %c0_i32_1 = arith.constant 0 : i32
    return %c0_i32, %c0_i32_0 : i32, i32
  }
  func.func @transform_5(%arg0: i32, %arg1: i32) -> (i32, i32) {
    %c0_i32 = arith.constant 0 : i32
    %c0_i32_0 = arith.constant 0 : i32
    %c0_i32_1 = arith.constant 0 : i32
    return %c0_i32, %c0_i32_0 : i32, i32
  }
  func.func @transform_6(%arg0: i32, %arg1: i32) -> (i32, i32) {
    %c0_i32 = arith.constant 0 : i32
    %c0_i32_0 = arith.constant 0 : i32
    %c0_i32_1 = arith.constant 0 : i32
    return %c0_i32, %c0_i32_0 : i32, i32
  }
  func.func @transform_7(%arg0: i32, %arg1: i32) -> (i32, i32) {
    %c0_i32 = arith.constant 0 : i32
    %c0_i32_0 = arith.constant 0 : i32
    %c0_i32_1 = arith.constant 0 : i32
    return %c0_i32, %c0_i32_0 : i32, i32
  }
  func.func @transform_8(%arg0: i32, %arg1: i32) -> (i32, i32) {
    %c0_i32 = arith.constant 0 : i32
    %c0_i32_0 = arith.constant 0 : i32
    %c0_i32_1 = arith.constant 0 : i32
    return %c0_i32, %c0_i32_0 : i32, i32
  }
  func.func @transform_9(%arg0: i32, %arg1: i32) -> (i32, i32) {
    %c0_i32 = arith.constant 0 : i32
    %c0_i32_0 = arith.constant 0 : i32
    %c0_i32_1 = arith.constant 0 : i32
    return %c0_i32, %c0_i32_0 : i32, i32
  }
  func.func @transform_10(%arg0: i32, %arg1: i32) -> (i32, i32) {
    %c0_i32 = arith.constant 0 : i32
    %c0_i32_0 = arith.constant 0 : i32
    %c0_i32_1 = arith.constant 0 : i32
    return %c0_i32, %c0_i32_0 : i32, i32
  }
  func.func @transform_11(%arg0: i32, %arg1: i32) -> (i32, i32) {
    %c0_i32 = arith.constant 0 : i32
    %c0_i32_0 = arith.constant 0 : i32
    %c0_i32_1 = arith.constant 0 : i32
    return %c0_i32, %c0_i32_0 : i32, i32
  }
  func.func @transform_12(%arg0: i32, %arg1: i32) -> (i32, i32, i32) {
    %c0_i32 = arith.constant 0 : i32
    %c0_i32_0 = arith.constant 0 : i32
    return %arg0, %arg1, %c0_i32 : i32, i32, i32
  }
}

</mosaic_0001>

<llo_original>
// kernel: tpu_custom_call.1
$region0: #{tpu_custom_call.1}
  #allocation0 [shape = 'u32[]', space=smem, size = 0x4, offset = 0x4, fixed_abs, tag = 'smem constant byte address 0x4 - core index']
  #allocation1 [shape = 'u32[72,128]{1,0:T(1,128)}', space=vmem, size = 0x9000, scoped, tag = 'internal scratch']
  %s0 = inlined_call_operand.hbm [shape: f32[2,1,512], index: 0, kind: input, shape index: {}]
  %s1 = inlined_call_operand.hbm [shape: f32[2,1,512], index: 1, kind: input, shape index: {}]
  %s2 = inlined_call_operand.hbm [shape: bf16[64,512], index: 2, kind: input, shape index: {}]
  %s3 = inlined_call_operand.vmem [shape: bf16[512,512], index: 3, kind: input, shape index: {}]
  %s4 = inlined_call_operand.hbm [shape: f32[1,512], index: 4, kind: input, shape index: {}]
  %s5 = inlined_call_operand.vmem [shape: f32[512,3], index: 5, kind: input, shape index: {}]
  %s6 = inlined_call_operand.hbm [shape: f32[1,3], index: 6, kind: input, shape index: {}]
  %s7 = inlined_call_operand.vmem [shape: f32[3,512], index: 7, kind: input, shape index: {}]
  %s8 = inlined_call_operand.hbm [shape: bf16[512,512], index: 8, kind: input, shape index: {}]
  %s9 = inlined_call_operand.hbm [shape: f32[1,512], index: 9, kind: input, shape index: {}]
  %s10 = inlined_call_operand.vmem [shape: f32[512,3], index: 10, kind: input, shape index: {}]
  %s11 = inlined_call_operand.hbm [shape: f32[1,3], index: 11, kind: input, shape index: {}]
  %s12 = inlined_call_operand.vmem [shape: f32[2,64,3], index: 12, kind: output, shape index: {}]
  %s13 = sld [smem:[#allocation0]]
  $region113: #{tpu_custom_call.1} parent=0
    _
  %s15 = ssub.s32 1, %s13
  %s16 = scalar_select 0, %s15, %s13
  $region1: #{tpu_custom_call.1} parent=0
    #allocation2 [shape = 'u8[4096]{0}', space=vmem, size = 0x1000, scoped, tag = 'input window, operand 0']
    #allocation3 [shape = 's32[2]{0}', space=sflag, size = 0x8, scoped, tag = 'scoped memory for tpu_custom_call.1']
    #allocation4 [shape = 'u8[4096]{0}', space=vmem, size = 0x1000, scoped, tag = 'input window, operand 1']
    #allocation5 [shape = 's32[2]{0}', space=sflag, size = 0x8, scoped, tag = 'scoped memory for tpu_custom_call.1']
    #allocation6 [shape = 'u8[65536]{0}', space=vmem, size = 0x10000, scoped, tag = 'input window, operand 2, single buffered']
    #allocation7 [shape = 'u8[2048]{0}', space=vmem, size = 0x800, scoped, tag = 'input window, operand 4, single buffered']
    #allocation8 [shape = 's32[1]{0}', space=sflag, size = 0x4, scoped, tag = 'scoped memory for tpu_custom_call.1']
    #allocation9 [shape = 'u8[512]{0}', space=vmem, size = 0x400, scoped, tag = 'input window, operand 6, single buffered']
    #allocation10 [shape = 'u8[524288]{0}', space=vmem, size = 0x80000, scoped, tag = 'input window, operand 8, single buffered']
    #allocation11 [shape = 's32[1]{0}', space=sflag, size = 0x4, scoped, tag = 'scoped memory for tpu_custom_call.1']
    #allocation12 [shape = 'u8[2048]{0}', space=vmem, size = 0x800, scoped, tag = 'input window, operand 9, single buffered']
    #allocation13 [shape = 'u8[512]{0}', space=vmem, size = 0x400, scoped, tag = 'input window, operand 11, single buffered']
    #allocation14 [shape = 's32[1]{0}', space=sflag, size = 0x4, scoped, tag = 'scoped memory for tpu_custom_call.1']
    %17 = vsyncpa [#allocation3], 0
    %s18 = scalar_lea.sflag [#allocation3], 1
    %19 = vsyncpa %s18, 0
    %20 = vsyncpa [#allocation5], 0
    %s21 = scalar_lea.sflag [#allocation5], 1
    %22 = vsyncpa %s21, 0
    %23 = vsyncpa [#allocation8], 0
    %24 = vsyncpa [#allocation11], 0
    %25 = vsyncpa [#allocation14], 0
    loop: start=0, step=1, limit=4
    $region2: #{tpu_custom_call.1} parent=1 // loop_pre_header
      _
    $region3: #{tpu_custom_call.1} parent=1 // loop_header
      %s27 = sphi 0, %s31
      %p28 = scmp.ge.s32.totalorder %s27, 4
      %s34 = sphi 0, %s46
      %s35 = sphi 0, %s42
      %s36 = sphi 0, %s34
      %s37 = sphi 0, %s35
      %s38 = sphi 0, %s36
      %s39 = sphi 0, %s37
      %s49 = sphi 0, %s51
      %s52 = sphi 0, %s49
      %s53 = sphi 0, %s52
      %s69 = sphi 0, %s53
      %s75 = sphi 0, %s77
      %s78 = sphi 0, %s75
      %s79 = sphi 0, %s78
      %s95 = sphi 0, %s79
      %s101 = sphi 0, %s103
      %s104 = sphi 0, %s101
      %s105 = sphi 0, %s104
      %s121 = sphi 0, %s105
      %s125 = sphi 0, %s125
      %s127 = sphi 0, %s125
      %s128 = sphi 0, %s127
      %s142 = sphi 0, %s128
      %s146 = sphi 0, %s146
      %s148 = sphi 0, %s146
      %s149 = sphi 0, %s148
      %s163 = sphi 0, %s149
      %s167 = sphi 0, %s167
      %s169 = sphi 0, %s167
      %s170 = sphi 0, %s169
      %s184 = sphi 0, %s170
      %s188 = sphi 0, %s188
      %s190 = sphi 0, %s188
      %s191 = sphi 0, %s190
      %s205 = sphi 0, %s191
      %s209 = sphi 0, %s209
      %s211 = sphi 0, %s209
      %s212 = sphi 0, %s211
      %s226 = sphi 0, %s212
      %s230 = sphi 0, %s230
      %s232 = sphi 0, %s230
      %s233 = sphi 0, %s232
      %s247 = sphi 0, %s233
      %s251 = sphi 0, %s251
      %s253 = sphi 0, %s251
      %s254 = sphi 0, %s253
      %s268 = sphi 0, %s254
      %s272 = sphi 0, %s272
      %s274 = sphi 0, %s272
      %s275 = sphi 0, %s274
      %s289 = sphi 0, %s275
      %s293 = sphi 0, %s293
      %s295 = sphi 0, %s293
      %s296 = sphi 0, %s295
      %s310 = sphi 0, %s296
      %s318 = sphi 0, %s320
      %s321 = sphi 0, %s318
      %s322 = sphi 0, %s321
      %s338 = sphi 0, %s322
    $region4: #{tpu_custom_call.1} parent=1 // loop_header_branch
      %30 = sbr.rel (%p28) target = $region8
    $region5: #{tpu_custom_call.1} parent=1 // loop_body
      %s32 = ssub.s32 %s27, 1
      %s33 = ssub.s32 %s27, 2
      %s40 = sadd.s32 1, %s35
      %p41 = scmp.ge.s32.totalorder %s40, 1
      %s42 = scalar_select %p41, 0, %s40
      %s43 = sadd.s32 1, %s34
      %s44 = scalar_select %p41, %s43, %s34
      %p45 = scmp.ge.s32.totalorder %s44, 2
      %s46 = scalar_select %p45, 0, %s44
      %s47 = ssub.s32 %s34, %s46
      %p48 = scmp.eq.s32.totalorder %s47, 0
      %s50 = sadd.s32 %s49, 1
      %s51 = scalar_select %p48, %s49, %s50
      %p54 = pneg %p48
      %p55 = scmp.eq.s32.totalorder %s27, 1
      %p56 = por %p54, %p55
      %p57 = scmp.ne.s32.totalorder %s49, %s52
      %p58 = scmp.eq.s32.totalorder %s27, 0
      %p59 = por %p57, %p58
      %p60 = scmp.ne.s32.totalorder %s49, %s52
      %p61 = scmp.eq.s32.totalorder %s32, 1
      %p62 = por %p60, %p61
      %p63 = scmp.ne.s32.totalorder %s52, %s53
      %p64 = scmp.eq.s32.totalorder %s32, 0
      %p65 = por %p63, %p64
      %p66 = scmp.ne.s32.totalorder %s52, %s53
      %p67 = scmp.eq.s32.totalorder %s33, 1
      %p68 = por %p66, %p67
      %p70 = scmp.ne.s32.totalorder %s53, %s69
      %p71 = scmp.eq.s32.totalorder %s33, 0
      %p72 = por %p70, %p71
      %s73 = ssub.s32 %s34, %s46
      %p74 = scmp.eq.s32.totalorder %s73, 0
      %s76 = sadd.s32 %s75, 1
      %s77 = scalar_select %p74, %s75, %s76
      %p80 = pneg %p74
      %p81 = scmp.eq.s32.totalorder %s27, 1
      %p82 = por %p80, %p81
      %p83 = scmp.ne.s32.totalorder %s75, %s78
      %p84 = scmp.eq.s32.totalorder %s27, 0
      %p85 = por %p83, %p84
      %p86 = scmp.ne.s32.totalorder %s75, %s78
      %p87 = scmp.eq.s32.totalorder %s32, 1
      %p88 = por %p86, %p87
      %p89 = scmp.ne.s32.totalorder %s78, %s79
      %p90 = scmp.eq.s32.totalorder %s32, 0
      %p91 = por %p89, %p90
      %p92 = scmp.ne.s32.totalorder %s78, %s79
      %p93 = scmp.eq.s32.totalorder %s33, 1
      %p94 = por %p92, %p93
      %p96 = scmp.ne.s32.totalorder %s79, %s95
      %p97 = scmp.eq.s32.totalorder %s33, 0
      %p98 = por %p96, %p97
      %s99 = ssub.s32 %s35, %s42
      %p100 = scmp.eq.s32.totalorder %s99, 0
      %s102 = sadd.s32 %s101, 1
      %s103 = scalar_select %p100, %s101, %s102
      %p106 = pneg %p100
      %p107 = scmp.eq.s32.totalorder %s27, 1
      %p108 = por %p106, %p107
      %p109 = scmp.ne.s32.totalorder %s101, %s104
      %p110 = scmp.eq.s32.totalorder %s27, 0
      %p111 = por %p109, %p110
      %p112 = scmp.ne.s32.totalorder %s101, %s104
      %p113 = scmp.eq.s32.totalorder %s32, 1
      %p114 = por %p112, %p113
      %p115 = scmp.ne.s32.totalorder %s104, %s105
      %p116 = scmp.eq.s32.totalorder %s32, 0
      %p117 = por %p115, %p116
      %p118 = scmp.ne.s32.totalorder %s104, %s105
      %p119 = scmp.eq.s32.totalorder %s33, 1
      %p120 = por %p118, %p119
      %p122 = scmp.ne.s32.totalorder %s105, %s121
      %p123 = scmp.eq.s32.totalorder %s33, 0
      %p124 = por %p122, %p123
      %s126 = sadd.s32 %s125, 1
      %p129 = scmp.eq.s32.totalorder %s27, 1
      %p130 = scmp.ne.s32.totalorder %s125, %s127
      %p131 = scmp.eq.s32.totalorder %s27, 0
      %p132 = por %p130, %p131
      %p133 = scmp.ne.s32.totalorder %s125, %s127
      %p134 = scmp.eq.s32.totalorder %s32, 1
      %p135 = por %p133, %p134
      %p136 = scmp.ne.s32.totalorder %s127, %s128
      %p137 = scmp.eq.s32.totalorder %s32, 0
      %p138 = por %p136, %p137
      %p139 = scmp.ne.s32.totalorder %s127, %s128
      %p140 = scmp.eq.s32.totalorder %s33, 1
      %p141 = por %p139, %p140
      %p143 = scmp.ne.s32.totalorder %s128, %s142
      %p144 = scmp.eq.s32.totalorder %s33, 0
      %p145 = por %p143, %p144
      %s147 = sadd.s32 %s146, 1
      %p150 = scmp.eq.s32.totalorder %s27, 1
      %p151 = scmp.ne.s32.totalorder %s146, %s148
      %p152 = scmp.eq.s32.totalorder %s27, 0
      %p153 = por %p151, %p152
      %p154 = scmp.ne.s32.totalorder %s146, %s148
      %p155 = scmp.eq.s32.totalorder %s32, 1
      %p156 = por %p154, %p155
      %p157 = scmp.ne.s32.totalorder %s148, %s149
      %p158 = scmp.eq.s32.totalorder %s32, 0
      %p159 = por %p157, %p158
      %p160 = scmp.ne.s32.totalorder %s148, %s149
      %p161 = scmp.eq.s32.totalorder %s33, 1
      %p162 = por %p160, %p161
      %p164 = scmp.ne.s32.totalorder %s149, %s163
      %p165 = scmp.eq.s32.totalorder %s33, 0
      %p166 = por %p164, %p165
      %s168 = sadd.s32 %s167, 1
      %p171 = scmp.eq.s32.totalorder %s27, 1
      %p172 = scmp.ne.s32.totalorder %s167, %s169
      %p173 = scmp.eq.s32.totalorder %s27, 0
      %p174 = por %p172, %p173
      %p175 = scmp.ne.s32.totalorder %s167, %s169
      %p176 = scmp.eq.s32.totalorder %s32, 1
      %p177 = por %p175, %p176
      %p178 = scmp.ne.s32.totalorder %s169, %s170
      %p179 = scmp.eq.s32.totalorder %s32, 0
      %p180 = por %p178, %p179
      %p181 = scmp.ne.s32.totalorder %s169, %s170
      %p182 = scmp.eq.s32.totalorder %s33, 1
      %p183 = por %p181, %p182
      %p185 = scmp.ne.s32.totalorder %s170, %s184
      %p186 = scmp.eq.s32.totalorder %s33, 0
      %p187 = por %p185, %p186
      %s189 = sadd.s32 %s188, 1
      %p192 = scmp.eq.s32.totalorder %s27, 1
      %p193 = scmp.ne.s32.totalorder %s188, %s190
      %p194 = scmp.eq.s32.totalorder %s27, 0
      %p195 = por %p193, %p194
      %p196 = scmp.ne.s32.totalorder %s188, %s190
      %p197 = scmp.eq.s32.totalorder %s32, 1
      %p198 = por %p196, %p197
      %p199 = scmp.ne.s32.totalorder %s190, %s191
      %p200 = scmp.eq.s32.totalorder %s32, 0
      %p201 = por %p199, %p200
      %p202 = scmp.ne.s32.totalorder %s190, %s191
      %p203 = scmp.eq.s32.totalorder %s33, 1
      %p204 = por %p202, %p203
      %p206 = scmp.ne.s32.totalorder %s191, %s205
      %p207 = scmp.eq.s32.totalorder %s33, 0
      %p208 = por %p206, %p207
      %s210 = sadd.s32 %s209, 1
      %p213 = scmp.eq.s32.totalorder %s27, 1
      %p214 = scmp.ne.s32.totalorder %s209, %s211
      %p215 = scmp.eq.s32.totalorder %s27, 0
      %p216 = por %p214, %p215
      %p217 = scmp.ne.s32.totalorder %s209, %s211
      %p218 = scmp.eq.s32.totalorder %s32, 1
      %p219 = por %p217, %p218
      %p220 = scmp.ne.s32.totalorder %s211, %s212
      %p221 = scmp.eq.s32.totalorder %s32, 0
      %p222 = por %p220, %p221
      %p223 = scmp.ne.s32.totalorder %s211, %s212
      %p224 = scmp.eq.s32.totalorder %s33, 1
      %p225 = por %p223, %p224
      %p227 = scmp.ne.s32.totalorder %s212, %s226
      %p228 = scmp.eq.s32.totalorder %s33, 0
      %p229 = por %p227, %p228
      %s231 = sadd.s32 %s230, 1
      %p234 = scmp.eq.s32.totalorder %s27, 1
      %p235 = scmp.ne.s32.totalorder %s230, %s232
      %p236 = scmp.eq.s32.totalorder %s27, 0
      %p237 = por %p235, %p236
      %p238 = scmp.ne.s32.totalorder %s230, %s232
      %p239 = scmp.eq.s32.totalorder %s32, 1
      %p240 = por %p238, %p239
      %p241 = scmp.ne.s32.totalorder %s232, %s233
      %p242 = scmp.eq.s32.totalorder %s32, 0
      %p243 = por %p241, %p242
      %p244 = scmp.ne.s32.totalorder %s232, %s233
      %p245 = scmp.eq.s32.totalorder %s33, 1
      %p246 = por %p244, %p245
      %p248 = scmp.ne.s32.totalorder %s233, %s247
      %p249 = scmp.eq.s32.totalorder %s33, 0
      %p250 = por %p248, %p249
      %s252 = sadd.s32 %s251, 1
      %p255 = scmp.eq.s32.totalorder %s27, 1
      %p256 = scmp.ne.s32.totalorder %s251, %s253
      %p257 = scmp.eq.s32.totalorder %s27, 0
      %p258 = por %p256, %p257
      %p259 = scmp.ne.s32.totalorder %s251, %s253
      %p260 = scmp.eq.s32.totalorder %s32, 1
      %p261 = por %p259, %p260
      %p262 = scmp.ne.s32.totalorder %s253, %s254
      %p263 = scmp.eq.s32.totalorder %s32, 0
      %p264 = por %p262, %p263
      %p265 = scmp.ne.s32.totalorder %s253, %s254
      %p266 = scmp.eq.s32.totalorder %s33, 1
      %p267 = por %p265, %p266
      %p269 = scmp.ne.s32.totalorder %s254, %s268
      %p270 = scmp.eq.s32.totalorder %s33, 0
      %p271 = por %p269, %p270
      %s273 = sadd.s32 %s272, 1
      %p276 = scmp.eq.s32.totalorder %s27, 1
      %p277 = scmp.ne.s32.totalorder %s272, %s274
      %p278 = scmp.eq.s32.totalorder %s27, 0
      %p279 = por %p277, %p278
      %p280 = scmp.ne.s32.totalorder %s272, %s274
      %p281 = scmp.eq.s32.totalorder %s32, 1
      %p282 = por %p280, %p281
      %p283 = scmp.ne.s32.totalorder %s274, %s275
      %p284 = scmp.eq.s32.totalorder %s32, 0
      %p285 = por %p283, %p284
      %p286 = scmp.ne.s32.totalorder %s274, %s275
      %p287 = scmp.eq.s32.totalorder %s33, 1
      %p288 = por %p286, %p287
      %p290 = scmp.ne.s32.totalorder %s275, %s289
      %p291 = scmp.eq.s32.totalorder %s33, 0
      %p292 = por %p290, %p291
      %s294 = sadd.s32 %s293, 1
      %p297 = scmp.eq.s32.totalorder %s27, 1
      %p298 = scmp.ne.s32.totalorder %s293, %s295
      %p299 = scmp.eq.s32.totalorder %s27, 0
      %p300 = por %p298, %p299
      %p301 = scmp.ne.s32.totalorder %s293, %s295
      %p302 = scmp.eq.s32.totalorder %s32, 1
      %p303 = por %p301, %p302
      %p304 = scmp.ne.s32.totalorder %s295, %s296
      %p305 = scmp.eq.s32.totalorder %s32, 0
      %p306 = por %p304, %p305
      %p307 = scmp.ne.s32.totalorder %s295, %s296
      %p308 = scmp.eq.s32.totalorder %s33, 1
      %p309 = por %p307, %p308
      %p311 = scmp.ne.s32.totalorder %s296, %s310
      %p312 = scmp.eq.s32.totalorder %s33, 0
      %p313 = por %p311, %p312
      %s314 = ssub.s32 %s34, %s46
      %s315 = ssub.s32 %s35, %s42
      %s316 = sor.u32 %s314, %s315
      %p317 = scmp.eq.s32.totalorder %s316, 0
      %s319 = sadd.s32 %s318, 1
      %s320 = scalar_select %p317, %s318, %s319
      %p323 = pneg %p317
      %p324 = scmp.eq.s32.totalorder %s27, 1
      %p325 = por %p323, %p324
      %p326 = scmp.ne.s32.totalorder %s318, %s321
      %p327 = scmp.eq.s32.totalorder %s27, 0
      %p328 = por %p326, %p327
      %p329 = scmp.ne.s32.totalorder %s318, %s321
      %p330 = scmp.eq.s32.totalorder %s32, 1
      %p331 = por %p329, %p330
      %p332 = scmp.ne.s32.totalorder %s321, %s322
      %p333 = scmp.eq.s32.totalorder %s32, 0
      %p334 = por %p332, %p333
      %p335 = scmp.ne.s32.totalorder %s321, %s322
      %p336 = scmp.eq.s32.totalorder %s33, 1
      %p337 = por %p335, %p336
      %p339 = scmp.ne.s32.totalorder %s322, %s338
      %p340 = scmp.eq.s32.totalorder %s33, 0
      %p341 = por %p339, %p340
      %p342 = scmp.le.s32.totalorder 1, %s27
      %p343 = scmp.lt.s32.totalorder %s27, 3
      %p344 = pnand %p342, %p343
      %p345 = pneg %p344
      // Predicated region
      $region9: #{tpu_custom_call.1} parent=5 // pred_check
        _
      $region10: #{tpu_custom_call.1} parent=5 // pred_check_branch
        %347 = sbr.rel (%p344) target = $region12
      $region11: #{tpu_custom_call.1} parent=5 // pred_region
        %s348 = ssub.s32 %s27, 1
        // Predicated region
        $region13: #{tpu_custom_call.1} parent=11 // pred_check
          %p349 = pneg %p117
        $region14: #{tpu_custom_call.1} parent=11 // pred_check_branch
          %351 = sbr.rel (%p349) target = $region16
        $region15: #{tpu_custom_call.1} parent=11 // pred_region
          %s352 = smul.u32 8, %s37
          %354 = vsyncadd [#allocation5], 0
          %s355 = smul.addr %s352, 4
          %s356 = smul.addr %s355, 4
          %s357 = scalar_lea.hbm %s2, %s356
          %s358 = sshll.u32 %s357, 4
          %s359 = int_to_ptr.hbm [resolvable:$true] %s358
          %s360 = sshll.u32 [#allocation6], 4
          %s361 = int_to_ptr.vmem [resolvable:$true] %s360
          %366 = dma.hbm_to_vmem [thread:$0]  %s359, 2048, %s361, [#allocation5], 256, 256, 16
        $region16: #{tpu_custom_call.1} parent=11 // pred_fallthru
          _
        // Predicated region
        $region17: #{tpu_custom_call.1} parent=11 // pred_check
          %p367 = pneg %p138
        $region18: #{tpu_custom_call.1} parent=11 // pred_check_branch
          %369 = sbr.rel (%p367) target = $region20
        $region19: #{tpu_custom_call.1} parent=11 // pred_region
          _
        $region20: #{tpu_custom_call.1} parent=11 // pred_fallthru
          _
        // Predicated region
        $region21: #{tpu_custom_call.1} parent=11 // pred_check
          %p370 = pneg %p159
        $region22: #{tpu_custom_call.1} parent=11 // pred_check_branch
          %372 = sbr.rel (%p370) target = $region24
        $region23: #{tpu_custom_call.1} parent=11 // pred_region
          %374 = vsyncadd [#allocation8], 0
          %s376 = sshll.u32 %s4, 4
          %s377 = int_to_ptr.hbm [resolvable:$true] %s376
          %s378 = sshll.u32 [#allocation7], 4
          %s379 = int_to_ptr.vmem [resolvable:$true] %s378
          %381 = dma.hbm_to_vmem [thread:$0]  %s377, 64, %s379, [#allocation8]
        $region24: #{tpu_custom_call.1} parent=11 // pred_fallthru
          _
        // Predicated region
        $region25: #{tpu_custom_call.1} parent=11 // pred_check
          %p382 = pneg %p180
        $region26: #{tpu_custom_call.1} parent=11 // pred_check_branch
          %384 = sbr.rel (%p382) target = $region28
        $region27: #{tpu_custom_call.1} parent=11 // pred_region
          _
        $region28: #{tpu_custom_call.1} parent=11 // pred_fallthru
          _
        // Predicated region
        $region29: #{tpu_custom_call.1} parent=11 // pred_check
          %p385 = pneg %p201
        $region30: #{tpu_custom_call.1} parent=11 // pred_check_branch
          %387 = sbr.rel (%p385) target = $region32
        $region31: #{tpu_custom_call.1} parent=11 // pred_region
          %389 = vsyncadd [#allocation8], 0
          %s391 = sshll.u32 %s6, 4
          %s392 = int_to_ptr.hbm [resolvable:$true] %s391
          %s393 = sshll.u32 [#allocation9], 4
          %s394 = int_to_ptr.vmem [resolvable:$true] %s393
          %396 = dma.hbm_to_vmem [thread:$0]  %s392, 16, %s394, [#allocation8]
        $region32: #{tpu_custom_call.1} parent=11 // pred_fallthru
          _
        // Predicated region
        $region33: #{tpu_custom_call.1} parent=11 // pred_check
          %p397 = pneg %p222
        $region34: #{tpu_custom_call.1} parent=11 // pred_check_branch
          %399 = sbr.rel (%p397) target = $region36
        $region35: #{tpu_custom_call.1} parent=11 // pred_region
          _
        $region36: #{tpu_custom_call.1} parent=11 // pred_fallthru
          _
        // Predicated region
        $region37: #{tpu_custom_call.1} parent=11 // pred_check
          %p400 = pneg %p243
        $region38: #{tpu_custom_call.1} parent=11 // pred_check_branch
          %402 = sbr.rel (%p400) target = $region40
        $region39: #{tpu_custom_call.1} parent=11 // pred_region
          %404 = vsyncadd [#allocation11], 0
          %s405 = sshll.u32 %s8, 4
          %s406 = int_to_ptr.hbm [resolvable:$true] %s405
          %s407 = sshll.u32 [#allocation10], 4
          %s408 = int_to_ptr.vmem [resolvable:$true] %s407
          %413 = dma.hbm_to_vmem [thread:$0]  %s406, 16384, %s408, [#allocation11], 256, 256, 16
        $region40: #{tpu_custom_call.1} parent=11 // pred_fallthru
          _
        // Predicated region
        $region41: #{tpu_custom_call.1} parent=11 // pred_check
          %p414 = pneg %p264
        $region42: #{tpu_custom_call.1} parent=11 // pred_check_branch
          %416 = sbr.rel (%p414) target = $region44
        $region43: #{tpu_custom_call.1} parent=11 // pred_region
          %418 = vsyncadd [#allocation11], 0
          %s420 = sshll.u32 %s9, 4
          %s421 = int_to_ptr.hbm [resolvable:$true] %s420
          %s422 = sshll.u32 [#allocation12], 4
          %s423 = int_to_ptr.vmem [resolvable:$true] %s422
          %425 = dma.hbm_to_vmem [thread:$0]  %s421, 64, %s423, [#allocation11]
        $region44: #{tpu_custom_call.1} parent=11 // pred_fallthru
          _
        // Predicated region
        $region45: #{tpu_custom_call.1} parent=11 // pred_check
          %p426 = pneg %p285
        $region46: #{tpu_custom_call.1} parent=11 // pred_check_branch
          %428 = sbr.rel (%p426) target = $region48
        $region47: #{tpu_custom_call.1} parent=11 // pred_region
          _
        $region48: #{tpu_custom_call.1} parent=11 // pred_fallthru
          _
        // Predicated region
        $region49: #{tpu_custom_call.1} parent=11 // pred_check
          %p429 = pneg %p306
        $region50: #{tpu_custom_call.1} parent=11 // pred_check_branch
          %431 = sbr.rel (%p429) target = $region52
        $region51: #{tpu_custom_call.1} parent=11 // pred_region
          %433 = vsyncadd [#allocation14], 0
          %s435 = sshll.u32 %s11, 4
          %s436 = int_to_ptr.hbm [resolvable:$true] %s435
          %s437 = sshll.u32 [#allocation13], 4
          %s438 = int_to_ptr.vmem [resolvable:$true] %s437
          %440 = dma.hbm_to_vmem [thread:$0]  %s436, 16, %s438, [#allocation14]
        $region52: #{tpu_custom_call.1} parent=11 // pred_fallthru
          _
      $region12: #{tpu_custom_call.1} parent=5 // pred_fallthru
        _
      %p441 = scmp.lt.s32.totalorder %s27, 2
      // Predicated region
      $region53: #{tpu_custom_call.1} parent=5 // pred_check
        %p442 = pneg %p441
      $region54: #{tpu_custom_call.1} parent=5 // pred_check_branch
        %444 = sbr.rel (%p442) target = $region56
      $region55: #{tpu_custom_call.1} parent=5 // pred_region
        // Predicated region
        $region57: #{tpu_custom_call.1} parent=55 // pred_check
          %p445 = pneg %p59
        $region58: #{tpu_custom_call.1} parent=55 // pred_check_branch
          %447 = sbr.rel (%p445) target = $region60
        $region59: #{tpu_custom_call.1} parent=55 // pred_region
          %s448 = sand.u32 %s49, 1
          %s449 = scalar_lea.sflag [#allocation3], %s448
          %s450 = sand.u32 %s49, 1
          %s451 = smul.addr %s450, 4
          %s452 = scalar_lea.vmem [#allocation2], %s451
          %454 = vsyncadd %s449, 0
          %s455 = smul.addr %s34, 4
          %s456 = scalar_lea.hbm %s0, %s455
          %s458 = sshll.u32 %s456, 4
          %s459 = int_to_ptr.hbm [resolvable:$true] %s458
          %s460 = sshll.u32 %s452, 4
          %s461 = int_to_ptr.vmem [resolvable:$true] %s460
          %463 = dma.hbm_to_vmem [thread:$0]  %s459, 64, %s461, %s449
        $region60: #{tpu_custom_call.1} parent=55 // pred_fallthru
          _
        // Predicated region
        $region61: #{tpu_custom_call.1} parent=55 // pred_check
          %p464 = pneg %p85
        $region62: #{tpu_custom_call.1} parent=55 // pred_check_branch
          %466 = sbr.rel (%p464) target = $region64
        $region63: #{tpu_custom_call.1} parent=55 // pred_region
          %s467 = sand.u32 %s27, 1
          %s468 = scalar_lea.sflag [#allocation5], %s467
          %s469 = sand.u32 %s75, 1
          %s470 = smul.addr %s469, 4
          %s471 = scalar_lea.vmem [#allocation4], %s470
          %473 = vsyncadd %s468, 0
          %s474 = smul.addr %s34, 4
          %s475 = scalar_lea.hbm %s1, %s474
          %s477 = sshll.u32 %s475, 4
          %s478 = int_to_ptr.hbm [resolvable:$true] %s477
          %s479 = sshll.u32 %s471, 4
          %s480 = int_to_ptr.vmem [resolvable:$true] %s479
          %482 = dma.hbm_to_vmem [thread:$0]  %s478, 64, %s480, %s468
        $region64: #{tpu_custom_call.1} parent=55 // pred_fallthru
          _
      $region56: #{tpu_custom_call.1} parent=5 // pred_fallthru
        _
      %p483 = scmp.le.s32.totalorder 1, %s27
      %p484 = scmp.lt.s32.totalorder %s27, 3
      %p485 = pnand %p483, %p484
      %p486 = pneg %p485
      // Predicated region
      $region65: #{tpu_custom_call.1} parent=5 // pred_check
        _
      $region66: #{tpu_custom_call.1} parent=5 // pred_check_branch
        %488 = sbr.rel (%p485) target = $region68
      $region67: #{tpu_custom_call.1} parent=5 // pred_region
        %s489 = ssub.s32 %s27, 1
        %s490 = sand.u32 %s52, 1
        %s491 = scalar_lea.sflag [#allocation3], %s490
        %s492 = sand.u32 %s52, 1
        %s493 = smul.addr %s492, 4
        %s494 = scalar_lea.vmem [#allocation2], %s493
        // Predicated region
        $region69: #{tpu_custom_call.1} parent=67 // pred_check
          %p495 = pneg %p65
        $region70: #{tpu_custom_call.1} parent=67 // pred_check_branch
          %497 = sbr.rel (%p495) target = $region72
        $region71: #{tpu_custom_call.1} parent=67 // pred_region
          %499 = dma.done %s491, 64
        $region72: #{tpu_custom_call.1} parent=67 // pred_fallthru
          _
        %s500 = sand.u32 %s32, 1
        %s501 = scalar_lea.sflag [#allocation5], %s500
        %s502 = sand.u32 %s78, 1
        %s503 = smul.addr %s502, 4
        %s504 = scalar_lea.vmem [#allocation4], %s503
        // Predicated region
        $region73: #{tpu_custom_call.1} parent=67 // pred_check
          %p505 = pneg %p91
        $region74: #{tpu_custom_call.1} parent=67 // pred_check_branch
          %507 = sbr.rel (%p505) target = $region76
        $region75: #{tpu_custom_call.1} parent=67 // pred_region
          %509 = dma.done %s501, 64
        $region76: #{tpu_custom_call.1} parent=67 // pred_fallthru
          _
        // Predicated region
        $region77: #{tpu_custom_call.1} parent=67 // pred_check
          %p510 = pneg %p117
        $region78: #{tpu_custom_call.1} parent=67 // pred_check_branch
          %512 = sbr.rel (%p510) target = $region80
        $region79: #{tpu_custom_call.1} parent=67 // pred_region
          %514 = dma.done [#allocation5], 2048
        $region80: #{tpu_custom_call.1} parent=67 // pred_fallthru
          _
        // Predicated region
        $region81: #{tpu_custom_call.1} parent=67 // pred_check
          %p515 = pneg %p159
        $region82: #{tpu_custom_call.1} parent=67 // pred_check_branch
          %517 = sbr.rel (%p515) target = $region84
        $region83: #{tpu_custom_call.1} parent=67 // pred_region
          %519 = dma.done [#allocation8], 64
        $region84: #{tpu_custom_call.1} parent=67 // pred_fallthru
          _
        // Predicated region
        $region85: #{tpu_custom_call.1} parent=67 // pred_check
          %p520 = pneg %p201
        $region86: #{tpu_custom_call.1} parent=67 // pred_check_branch
          %522 = sbr.rel (%p520) target = $region88
        $region87: #{tpu_custom_call.1} parent=67 // pred_region
          %524 = dma.done [#allocation8], 16
        $region88: #{tpu_custom_call.1} parent=67 // pred_fallthru
          _
        // Predicated region
        $region89: #{tpu_custom_call.1} parent=67 // pred_check
          %p525 = pneg %p243
        $region90: #{tpu_custom_call.1} parent=67 // pred_check_branch
          %527 = sbr.rel (%p525) target = $region92
        $region91: #{tpu_custom_call.1} parent=67 // pred_region
          %529 = dma.done [#allocation11], 16384
        $region92: #{tpu_custom_call.1} parent=67 // pred_fallthru
          _
        // Predicated region
        $region93: #{tpu_custom_call.1} parent=67 // pred_check
          %p530 = pneg %p264
        $region94: #{tpu_custom_call.1} parent=67 // pred_check_branch
          %532 = sbr.rel (%p530) target = $region96
        $region95: #{tpu_custom_call.1} parent=67 // pred_region
          %534 = dma.done [#allocation11], 64
        $region96: #{tpu_custom_call.1} parent=67 // pred_fallthru
          _
        // Predicated region
        $region97: #{tpu_custom_call.1} parent=67 // pred_check
          %p535 = pneg %p306
        $region98: #{tpu_custom_call.1} parent=67 // pred_check_branch
          %537 = sbr.rel (%p535) target = $region100
        $region99: #{tpu_custom_call.1} parent=67 // pred_region
          %539 = dma.done [#allocation14], 16
        $region100: #{tpu_custom_call.1} parent=67 // pred_fallthru
          _
        %s540 = sand.u32 %s52, 1
        %s541 = scalar_lea.sflag [#allocation3], %s540
        %s542 = sand.u32 %s52, 1
        %s543 = smul.addr %s542, 4
        %s544 = scalar_lea.vmem [#allocation2], %s543
        %p545 = pneg %p65
        %p546 = pneg %p62
        %s547 = sand.u32 %s32, 1
        %s548 = scalar_lea.sflag [#allocation5], %s547
        %s549 = sand.u32 %s78, 1
        %s550 = smul.addr %s549, 4
        %s551 = scalar_lea.vmem [#allocation4], %s550
        %p552 = pneg %p91
        %p553 = pneg %p88
        %p554 = pneg %p117
        %p555 = pneg %p114
        %p556 = pneg %p138
        %p557 = pneg %p135
        %p558 = pneg %p159
        %p559 = pneg %p156
        %p560 = pneg %p180
        %p561 = pneg %p177
        %p562 = pneg %p201
        %p563 = pneg %p198
        %p564 = pneg %p222
        %p565 = pneg %p219
        %p566 = pneg %p243
        %p567 = pneg %p240
        %p568 = pneg %p264
        %p569 = pneg %p261
        %p570 = pneg %p285
        %p571 = pneg %p282
        %p572 = pneg %p306
        %p573 = pneg %p303
        %p574 = pneg %p334
        %p575 = pneg %p331
        %s576 = smul.u32 8, %s37
        %p577 = scmp.lt.s32.totalorder %s36, 1
        %s578 = scalar_select %p577, %s36, 1
        %p579 = scmp.lt.s32.totalorder %s576, 7
        %s580 = scalar_select %p579, %s576, 7
        %s581 = smul.addr %s578, 8
        %s582 = sadd.s32 %s580, %s581
        %s583 = smul.addr %s582, 8
        %s584 = scalar_lea.vmem %s12, %s583
        %s585 = smul.u32 8, %s37
        %s586 = smul.u32 8, %s37
        %p587 = scmp.lt.s32.totalorder %s36, 1
        %s588 = scalar_select %p587, %s36, 1
        %p589 = scmp.lt.s32.totalorder %s586, 7
        %s590 = scalar_select %p589, %s586, 7
        %s591 = smul.addr %s588, 8
        %s592 = sadd.s32 %s590, %s591
        %s593 = smul.addr %s592, 8
        %s594 = scalar_lea.vmem %s12, %s593
        %s595 = smul.u32 8, %s37
        %v596 = vld [vmem:[#allocation6] sm:$0xff]
        %v597 = vld [vmem:[#allocation6 + $0x8] sm:$0xff]
        %v598 = vld [vmem:[#allocation6 + $0x10] sm:$0xff]
        %v599 = vld [vmem:[#allocation6 + $0x18] sm:$0xff]
        %v600 = vld [vmem:[#allocation6 + $0x20] sm:$0xff]
        %v601 = vld [vmem:[#allocation6 + $0x28] sm:$0xff]
        %v602 = vld [vmem:[#allocation6 + $0x30] sm:$0xff]
        %v603 = vld [vmem:[#allocation6 + $0x38] sm:$0xff]
        %v604 = vld [vmem:[#allocation6 + $0x40] sm:$0xff]
        %v605 = vld [vmem:[#allocation6 + $0x48] sm:$0xff]
        %v606 = vld [vmem:[#allocation6 + $0x50] sm:$0xff]
        %v607 = vld [vmem:[#allocation6 + $0x58] sm:$0xff]
        %v608 = vld [vmem:[#allocation6 + $0x60] sm:$0xff]
        %v609 = vld [vmem:[#allocation6 + $0x68] sm:$0xff]
        %v610 = vld [vmem:[#allocation6 + $0x70] sm:$0xff]
        %v611 = vld [vmem:[#allocation6 + $0x78] sm:$0xff]
        %v612 = vunpack.c.l.bf16 %v596
        %v613 = vunpack.c.h.bf16 %v596
        %v614 = vunpack.c.l.bf16 %v597
        %v615 = vunpack.c.h.bf16 %v597
        %v616 = vunpack.c.l.bf16 %v598
        %v617 = vunpack.c.h.bf16 %v598
        %v618 = vunpack.c.l.bf16 %v599
        %v619 = vunpack.c.h.bf16 %v599
        %v620 = vunpack.c.l.bf16 %v600
        %v621 = vunpack.c.h.bf16 %v600
        %v622 = vunpack.c.l.bf16 %v601
        %v623 = vunpack.c.h.bf16 %v601
        %v624 = vunpack.c.l.bf16 %v602
        %v625 = vunpack.c.h.bf16 %v602
        %v626 = vunpack.c.l.bf16 %v603
        %v627 = vunpack.c.h.bf16 %v603
        %v628 = vunpack.c.l.bf16 %v604
        %v629 = vunpack.c.h.bf16 %v604
        %v630 = vunpack.c.l.bf16 %v605
        %v631 = vunpack.c.h.bf16 %v605
        %v632 = vunpack.c.l.bf16 %v606
        %v633 = vunpack.c.h.bf16 %v606
        %v634 = vunpack.c.l.bf16 %v607
        %v635 = vunpack.c.h.bf16 %v607
        %v636 = vunpack.c.l.bf16 %v608
        %v637 = vunpack.c.h.bf16 %v608
        %v638 = vunpack.c.l.bf16 %v609
        %v639 = vunpack.c.h.bf16 %v609
        %v640 = vunpack.c.l.bf16 %v610
        %v641 = vunpack.c.h.bf16 %v610
        %v642 = vunpack.c.l.bf16 %v611
        %v643 = vunpack.c.h.bf16 %v611
        %v644 = vld [vmem:[%s494] sm:$0xf]
        %v646 = vperm.slane %v644, 0
        %v647 = vperm.slane %v644, 1
        %v648 = vperm.slane %v644, 2
        %v649 = vperm.slane %v644, 3
        %v654 = vadd.f32 %v612, %v646
        %v655 = vadd.f32 %v613, %v647
        %v656 = vadd.f32 %v614, %v648
        %v657 = vadd.f32 %v615, %v649
        %v658 = vadd.f32 %v616, %v646
        %v659 = vadd.f32 %v617, %v647
        %v660 = vadd.f32 %v618, %v648
        %v661 = vadd.f32 %v619, %v649
        %v662 = vadd.f32 %v620, %v646
        %v663 = vadd.f32 %v621, %v647
        %v664 = vadd.f32 %v622, %v648
        %v665 = vadd.f32 %v623, %v649
        %v666 = vadd.f32 %v624, %v646
        %v667 = vadd.f32 %v625, %v647
        %v668 = vadd.f32 %v626, %v648
        %v669 = vadd.f32 %v627, %v649
        %v670 = vadd.f32 %v628, %v646
        %v671 = vadd.f32 %v629, %v647
        %v672 = vadd.f32 %v630, %v648
        %v673 = vadd.f32 %v631, %v649
        %v674 = vadd.f32 %v632, %v646
        %v675 = vadd.f32 %v633, %v647
        %v676 = vadd.f32 %v634, %v648
        %v677 = vadd.f32 %v635, %v649
        %v678 = vadd.f32 %v636, %v646
        %v679 = vadd.f32 %v637, %v647
        %v680 = vadd.f32 %v638, %v648
        %v681 = vadd.f32 %v639, %v649
        %v682 = vadd.f32 %v640, %v646
        %v683 = vadd.f32 %v641, %v647
        %v684 = vadd.f32 %v642, %v648
        %v685 = vadd.f32 %v643, %v649
        %vm686 = vcmp.gt.f32.partialorder %v654, 0.0
        %vm687 = vcmp.gt.f32.partialorder %v655, 0.0
        %vm688 = vcmp.gt.f32.partialorder %v656, 0.0
        %vm689 = vcmp.gt.f32.partialorder %v657, 0.0
        %vm690 = vcmp.gt.f32.partialorder %v658, 0.0
        %vm691 = vcmp.gt.f32.partialorder %v659, 0.0
        %vm692 = vcmp.gt.f32.partialorder %v660, 0.0
        %vm693 = vcmp.gt.f32.partialorder %v661, 0.0
        %vm694 = vcmp.gt.f32.partialorder %v662, 0.0
        %vm695 = vcmp.gt.f32.partialorder %v663, 0.0
        %vm696 = vcmp.gt.f32.partialorder %v664, 0.0
        %vm697 = vcmp.gt.f32.partialorder %v665, 0.0
        %vm698 = vcmp.gt.f32.partialorder %v666, 0.0
        %vm699 = vcmp.gt.f32.partialorder %v667, 0.0
        %vm700 = vcmp.gt.f32.partialorder %v668, 0.0
        %vm701 = vcmp.gt.f32.partialorder %v669, 0.0
        %vm702 = vcmp.gt.f32.partialorder %v670, 0.0
        %vm703 = vcmp.gt.f32.partialorder %v671, 0.0
        %vm704 = vcmp.gt.f32.partialorder %v672, 0.0
        %vm705 = vcmp.gt.f32.partialorder %v673, 0.0
        %vm706 = vcmp.gt.f32.partialorder %v674, 0.0
        %vm707 = vcmp.gt.f32.partialorder %v675, 0.0
        %vm708 = vcmp.gt.f32.partialorder %v676, 0.0
        %vm709 = vcmp.gt.f32.partialorder %v677, 0.0
        %vm710 = vcmp.gt.f32.partialorder %v678, 0.0
        %vm711 = vcmp.gt.f32.partialorder %v679, 0.0
        %vm712 = vcmp.gt.f32.partialorder %v680, 0.0
        %vm713 = vcmp.gt.f32.partialorder %v681, 0.0
        %vm714 = vcmp.gt.f32.partialorder %v682, 0.0
        %vm715 = vcmp.gt.f32.partialorder %v683, 0.0
        %vm716 = vcmp.gt.f32.partialorder %v684, 0.0
        %vm717 = vcmp.gt.f32.partialorder %v685, 0.0
        %v718 = vmul.f32 %v654, 0.01
        %v719 = vmul.f32 %v655, 0.01
        %v720 = vmul.f32 %v656, 0.01
        %v721 = vmul.f32 %v657, 0.01
        %v722 = vmul.f32 %v658, 0.01
        %v723 = vmul.f32 %v659, 0.01
        %v724 = vmul.f32 %v660, 0.01
        %v725 = vmul.f32 %v661, 0.01
        %v726 = vmul.f32 %v662, 0.01
        %v727 = vmul.f32 %v663, 0.01
        %v728 = vmul.f32 %v664, 0.01
        %v729 = vmul.f32 %v665, 0.01
        %v730 = vmul.f32 %v666, 0.01
        %v731 = vmul.f32 %v667, 0.01
        %v732 = vmul.f32 %v668, 0.01
        %v733 = vmul.f32 %v669, 0.01
        %v734 = vmul.f32 %v670, 0.01
        %v735 = vmul.f32 %v671, 0.01
        %v736 = vmul.f32 %v672, 0.01
        %v737 = vmul.f32 %v673, 0.01
        %v738 = vmul.f32 %v674, 0.01
        %v739 = vmul.f32 %v675, 0.01
        %v740 = vmul.f32 %v676, 0.01
        %v741 = vmul.f32 %v677, 0.01
        %v742 = vmul.f32 %v678, 0.01
        %v743 = vmul.f32 %v679, 0.01
        %v744 = vmul.f32 %v680, 0.01
        %v745 = vmul.f32 %v681, 0.01
        %v746 = vmul.f32 %v682, 0.01
        %v747 = vmul.f32 %v683, 0.01
        %v748 = vmul.f32 %v684, 0.01
        %v749 = vmul.f32 %v685, 0.01
        %v750 = vsel %vm686, %v654, %v718
        %v751 = vsel %vm687, %v655, %v719
        %v752 = vsel %vm688, %v656, %v720
        %v753 = vsel %vm689, %v657, %v721
        %v754 = vsel %vm690, %v658, %v722
        %v755 = vsel %vm691, %v659, %v723
        %v756 = vsel %vm692, %v660, %v724
        %v757 = vsel %vm693, %v661, %v725
        %v758 = vsel %vm694, %v662, %v726
        %v759 = vsel %vm695, %v663, %v727
        %v760 = vsel %vm696, %v664, %v728
        %v761 = vsel %vm697, %v665, %v729
        %v762 = vsel %vm698, %v666, %v730
        %v763 = vsel %vm699, %v667, %v731
        %v764 = vsel %vm700, %v668, %v732
        %v765 = vsel %vm701, %v669, %v733
        %v766 = vsel %vm702, %v670, %v734
        %v767 = vsel %vm703, %v671, %v735
        %v768 = vsel %vm704, %v672, %v736
        %v769 = vsel %vm705, %v673, %v737
        %v770 = vsel %vm706, %v674, %v738
        %v771 = vsel %vm707, %v675, %v739
        %v772 = vsel %vm708, %v676, %v740
        %v773 = vsel %vm709, %v677, %v741
        %v774 = vsel %vm710, %v678, %v742
        %v775 = vsel %vm711, %v679, %v743
        %v776 = vsel %vm712, %v680, %v744
        %v777 = vsel %vm713, %v681, %v745
        %v778 = vsel %vm714, %v682, %v746
        %v779 = vsel %vm715, %v683, %v747
        %v780 = vsel %vm716, %v684, %v748
        %v781 = vsel %vm717, %v685, %v749
        %v782 = vpack.c.bf16 %v754, %v750
        %v783 = vpack.c.bf16 %v755, %v751
        %v784 = vpack.c.bf16 %v756, %v752
        %v785 = vpack.c.bf16 %v757, %v753
        %v786 = vpack.c.bf16 %v762, %v758
        %v787 = vpack.c.bf16 %v763, %v759
        %v788 = vpack.c.bf16 %v764, %v760
        %v789 = vpack.c.bf16 %v765, %v761
        %v790 = vpack.c.bf16 %v770, %v766
        %v791 = vpack.c.bf16 %v771, %v767
        %v792 = vpack.c.bf16 %v772, %v768
        %v793 = vpack.c.bf16 %v773, %v769
        %v794 = vpack.c.bf16 %v778, %v774
        %v795 = vpack.c.bf16 %v779, %v775
        %v796 = vpack.c.bf16 %v780, %v776
        %v797 = vpack.c.bf16 %v781, %v777
        %v798 = vld [vmem:[%s3] sm:$0xff]
        %v799 = vld [vmem:[%s3 + $0x8] sm:$0xff]
        %v800 = vld [vmem:[%s3 + $0x10] sm:$0xff]
        %v801 = vld [vmem:[%s3 + $0x18] sm:$0xff]
        %v802 = vld [vmem:[%s3 + $0x20] sm:$0xff]
        %v803 = vld [vmem:[%s3 + $0x28] sm:$0xff]
        %v804 = vld [vmem:[%s3 + $0x30] sm:$0xff]
        %v805 = vld [vmem:[%s3 + $0x38] sm:$0xff]
        %v806 = vld [vmem:[%s3 + $0x40] sm:$0xff]
        %v807 = vld [vmem:[%s3 + $0x48] sm:$0xff]
        %v808 = vld [vmem:[%s3 + $0x50] sm:$0xff]
        %v809 = vld [vmem:[%s3 + $0x58] sm:$0xff]
        %v810 = vld [vmem:[%s3 + $0x60] sm:$0xff]
        %v811 = vld [vmem:[%s3 + $0x68] sm:$0xff]
        %v812 = vld [vmem:[%s3 + $0x70] sm:$0xff]
        %v813 = vld [vmem:[%s3 + $0x78] sm:$0xff]
        %v814 = vld [vmem:[%s3 + $0x80] sm:$0xff]
        %v815 = vld [vmem:[%s3 + $0x88] sm:$0xff]
        %v816 = vld [vmem:[%s3 + $0x90] sm:$0xff]
        %v817 = vld [vmem:[%s3 + $0x98] sm:$0xff]
        %v818 = vld [vmem:[%s3 + $0xa0] sm:$0xff]
        %v819 = vld [vmem:[%s3 + $0xa8] sm:$0xff]
        %v820 = vld [vmem:[%s3 + $0xb0] sm:$0xff]
        %v821 = vld [vmem:[%s3 + $0xb8] sm:$0xff]
        %v822 = vld [vmem:[%s3 + $0xc0] sm:$0xff]
        %v823 = vld [vmem:[%s3 + $0xc8] sm:$0xff]
        %v824 = vld [vmem:[%s3 + $0xd0] sm:$0xff]
        %v825 = vld [vmem:[%s3 + $0xd8] sm:$0xff]
        %v826 = vld [vmem:[%s3 + $0xe0] sm:$0xff]
        %v827 = vld [vmem:[%s3 + $0xe8] sm:$0xff]
        %v828 = vld [vmem:[%s3 + $0xf0] sm:$0xff]
        %v829 = vld [vmem:[%s3 + $0xf8] sm:$0xff]
        %v830 = vld [vmem:[%s3 + $0x100] sm:$0xff]
        %v831 = vld [vmem:[%s3 + $0x108] sm:$0xff]
        %v832 = vld [vmem:[%s3 + $0x110] sm:$0xff]
        %v833 = vld [vmem:[%s3 + $0x118] sm:$0xff]
        %v834 = vld [vmem:[%s3 + $0x120] sm:$0xff]
        %v835 = vld [vmem:[%s3 + $0x128] sm:$0xff]
        %v836 = vld [vmem:[%s3 + $0x130] sm:$0xff]
        %v837 = vld [vmem:[%s3 + $0x138] sm:$0xff]
        %v838 = vld [vmem:[%s3 + $0x140] sm:$0xff]
        %v839 = vld [vmem:[%s3 + $0x148] sm:$0xff]
        %v840 = vld [vmem:[%s3 + $0x150] sm:$0xff]
        %v841 = vld [vmem:[%s3 + $0x158] sm:$0xff]
        %v842 = vld [vmem:[%s3 + $0x160] sm:$0xff]
        %v843 = vld [vmem:[%s3 + $0x168] sm:$0xff]
        %v844 = vld [vmem:[%s3 + $0x170] sm:$0xff]
        %v845 = vld [vmem:[%s3 + $0x178] sm:$0xff]
        %v846 = vld [vmem:[%s3 + $0x180] sm:$0xff]
        %v847 = vld [vmem:[%s3 + $0x188] sm:$0xff]
        %v848 = vld [vmem:[%s3 + $0x190] sm:$0xff]
        %v849 = vld [vmem:[%s3 + $0x198] sm:$0xff]
        %v850 = vld [vmem:[%s3 + $0x1a0] sm:$0xff]
        %v851 = vld [vmem:[%s3 + $0x1a8] sm:$0xff]
        %v852 = vld [vmem:[%s3 + $0x1b0] sm:$0xff]
        %v853 = vld [vmem:[%s3 + $0x1b8] sm:$0xff]
        %v854 = vld [vmem:[%s3 + $0x1c0] sm:$0xff]
        %v855 = vld [vmem:[%s3 + $0x1c8] sm:$0xff]
        %v856 = vld [vmem:[%s3 + $0x1d0] sm:$0xff]
        %v857 = vld [vmem:[%s3 + $0x1d8] sm:$0xff]
        %v858 = vld [vmem:[%s3 + $0x1e0] sm:$0xff]
        %v859 = vld [vmem:[%s3 + $0x1e8] sm:$0xff]
        %v860 = vld [vmem:[%s3 + $0x1f0] sm:$0xff]
        %v861 = vld [vmem:[%s3 + $0x1f8] sm:$0xff]
        %v862 = vld [vmem:[%s3 + $0x200] sm:$0xff]
        %v863 = vld [vmem:[%s3 + $0x208] sm:$0xff]
        %v864 = vld [vmem:[%s3 + $0x210] sm:$0xff]
        %v865 = vld [vmem:[%s3 + $0x218] sm:$0xff]
        %v866 = vld [vmem:[%s3 + $0x220] sm:$0xff]
        %v867 = vld [vmem:[%s3 + $0x228] sm:$0xff]
        %v868 = vld [vmem:[%s3 + $0x230] sm:$0xff]
        %v869 = vld [vmem:[%s3 + $0x238] sm:$0xff]
        %v870 = vld [vmem:[%s3 + $0x240] sm:$0xff]
        %v871 = vld [vmem:[%s3 + $0x248] sm:$0xff]
        %v872 = vld [vmem:[%s3 + $0x250] sm:$0xff]
        %v873 = vld [vmem:[%s3 + $0x258] sm:$0xff]
        %v874 = vld [vmem:[%s3 + $0x260] sm:$0xff]
        %v875 = vld [vmem:[%s3 + $0x268] sm:$0xff]
        %v876 = vld [vmem:[%s3 + $0x270] sm:$0xff]
        %v877 = vld [vmem:[%s3 + $0x278] sm:$0xff]
        %v878 = vld [vmem:[%s3 + $0x280] sm:$0xff]
        %v879 = vld [vmem:[%s3 + $0x288] sm:$0xff]
        %v880 = vld [vmem:[%s3 + $0x290] sm:$0xff]
        %v881 = vld [vmem:[%s3 + $0x298] sm:$0xff]
        %v882 = vld [vmem:[%s3 + $0x2a0] sm:$0xff]
        %v883 = vld [vmem:[%s3 + $0x2a8] sm:$0xff]
        %v884 = vld [vmem:[%s3 + $0x2b0] sm:$0xff]
        %v885 = vld [vmem:[%s3 + $0x2b8] sm:$0xff]
        %v886 = vld [vmem:[%s3 + $0x2c0] sm:$0xff]
        %v887 = vld [vmem:[%s3 + $0x2c8] sm:$0xff]
        %v888 = vld [vmem:[%s3 + $0x2d0] sm:$0xff]
        %v889 = vld [vmem:[%s3 + $0x2d8] sm:$0xff]
        %v890 = vld [vmem:[%s3 + $0x2e0] sm:$0xff]
        %v891 = vld [vmem:[%s3 + $0x2e8] sm:$0xff]
        %v892 = vld [vmem:[%s3 + $0x2f0] sm:$0xff]
        %v893 = vld [vmem:[%s3 + $0x2f8] sm:$0xff]
        %v894 = vld [vmem:[%s3 + $0x300] sm:$0xff]
        %v895 = vld [vmem:[%s3 + $0x308] sm:$0xff]
        %v896 = vld [vmem:[%s3 + $0x310] sm:$0xff]
        %v897 = vld [vmem:[%s3 + $0x318] sm:$0xff]
        %v898 = vld [vmem:[%s3 + $0x320] sm:$0xff]
        %v899 = vld [vmem:[%s3 + $0x328] sm:$0xff]
        %v900 = vld [vmem:[%s3 + $0x330] sm:$0xff]
        %v901 = vld [vmem:[%s3 + $0x338] sm:$0xff]
        %v902 = vld [vmem:[%s3 + $0x340] sm:$0xff]
        %v903 = vld [vmem:[%s3 + $0x348] sm:$0xff]
        %v904 = vld [vmem:[%s3 + $0x350] sm:$0xff]
        %v905 = vld [vmem:[%s3 + $0x358] sm:$0xff]
        %v906 = vld [vmem:[%s3 + $0x360] sm:$0xff]
        %v907 = vld [vmem:[%s3 + $0x368] sm:$0xff]
        %v908 = vld [vmem:[%s3 + $0x370] sm:$0xff]
        %v909 = vld [vmem:[%s3 + $0x378] sm:$0xff]
        %v910 = vld [vmem:[%s3 + $0x380] sm:$0xff]
        %v911 = vld [vmem:[%s3 + $0x388] sm:$0xff]
        %v912 = vld [vmem:[%s3 + $0x390] sm:$0xff]
        %v913 = vld [vmem:[%s3 + $0x398] sm:$0xff]
        %v914 = vld [vmem:[%s3 + $0x3a0] sm:$0xff]
        %v915 = vld [vmem:[%s3 + $0x3a8] sm:$0xff]
        %v916 = vld [vmem:[%s3 + $0x3b0] sm:$0xff]
        %v917 = vld [vmem:[%s3 + $0x3b8] sm:$0xff]
        %v918 = vld [vmem:[%s3 + $0x3c0] sm:$0xff]
        %v919 = vld [vmem:[%s3 + $0x3c8] sm:$0xff]
        %v920 = vld [vmem:[%s3 + $0x3d0] sm:$0xff]
        %v921 = vld [vmem:[%s3 + $0x3d8] sm:$0xff]
        %v922 = vld [vmem:[%s3 + $0x3e0] sm:$0xff]
        %v923 = vld [vmem:[%s3 + $0x3e8] sm:$0xff]
        %v924 = vld [vmem:[%s3 + $0x3f0] sm:$0xff]
        %v925 = vld [vmem:[%s3 + $0x3f8] sm:$0xff]
        %v926 = vld [vmem:[#allocation7] sm:$0xf]
        %v928 = vperm.slane %v926, 0
        %v929 = vperm.slane %v926, 1
        %v930 = vperm.slane %v926, 2
        %v931 = vperm.slane %v926, 3
        %v1064 = vunpack.c.l.b16 %v798
        %v1065 = vunpack.c.h.b16 %v798
        %v1066 = vunpack.c.l.b16 %v799
        %v1067 = vunpack.c.h.b16 %v799
        %v1068 = vunpack.c.l.b16 %v800
        %v1069 = vunpack.c.h.b16 %v800
        %v1070 = vunpack.c.l.b16 %v801
        %v1071 = vunpack.c.h.b16 %v801
        %v1072 = vunpack.c.l.b16 %v802
        %v1073 = vunpack.c.h.b16 %v802
        %v1074 = vunpack.c.l.b16 %v803
        %v1075 = vunpack.c.h.b16 %v803
        %v1076 = vunpack.c.l.b16 %v804
        %v1077 = vunpack.c.h.b16 %v804
        %v1078 = vunpack.c.l.b16 %v805
        %v1079 = vunpack.c.h.b16 %v805
        %v1080 = vunpack.c.l.b16 %v806
        %v1081 = vunpack.c.h.b16 %v806
        %v1082 = vunpack.c.l.b16 %v807
        %v1083 = vunpack.c.h.b16 %v807
        %v1084 = vunpack.c.l.b16 %v808
        %v1085 = vunpack.c.h.b16 %v808
        %v1086 = vunpack.c.l.b16 %v809
        %v1087 = vunpack.c.h.b16 %v809
        %v1088 = vunpack.c.l.b16 %v810
        %v1089 = vunpack.c.h.b16 %v810
        %v1090 = vunpack.c.l.b16 %v811
        %v1091 = vunpack.c.h.b16 %v811
        %v1092 = vunpack.c.l.b16 %v812
        %v1093 = vunpack.c.h.b16 %v812
        %v1094 = vunpack.c.l.b16 %v813
        %v1095 = vunpack.c.h.b16 %v813
        %v1096 = vunpack.c.l.b16 %v814
        %v1097 = vunpack.c.h.b16 %v814
        %v1098 = vunpack.c.l.b16 %v815
        %v1099 = vunpack.c.h.b16 %v815
        %v1100 = vunpack.c.l.b16 %v816
        %v1101 = vunpack.c.h.b16 %v816
        %v1102 = vunpack.c.l.b16 %v817
        %v1103 = vunpack.c.h.b16 %v817
        %v1104 = vunpack.c.l.b16 %v818
        %v1105 = vunpack.c.h.b16 %v818
        %v1106 = vunpack.c.l.b16 %v819
        %v1107 = vunpack.c.h.b16 %v819
        %v1108 = vunpack.c.l.b16 %v820
        %v1109 = vunpack.c.h.b16 %v820
        %v1110 = vunpack.c.l.b16 %v821
        %v1111 = vunpack.c.h.b16 %v821
        %v1112 = vunpack.c.l.b16 %v822
        %v1113 = vunpack.c.h.b16 %v822
        %v1114 = vunpack.c.l.b16 %v823
        %v1115 = vunpack.c.h.b16 %v823
        %v1116 = vunpack.c.l.b16 %v824
        %v1117 = vunpack.c.h.b16 %v824
        %v1118 = vunpack.c.l.b16 %v825
        %v1119 = vunpack.c.h.b16 %v825
        %v1120 = vunpack.c.l.b16 %v826
        %v1121 = vunpack.c.h.b16 %v826
        %v1122 = vunpack.c.l.b16 %v827
        %v1123 = vunpack.c.h.b16 %v827
        %v1124 = vunpack.c.l.b16 %v828
        %v1125 = vunpack.c.h.b16 %v828
        %v1126 = vunpack.c.l.b16 %v829
        %v1127 = vunpack.c.h.b16 %v829
        %v1128 = vunpack.c.l.b16 %v830
        %v1129 = vunpack.c.h.b16 %v830
        %v1130 = vunpack.c.l.b16 %v831
        %v1131 = vunpack.c.h.b16 %v831
        %v1132 = vunpack.c.l.b16 %v832
        %v1133 = vunpack.c.h.b16 %v832
        %v1134 = vunpack.c.l.b16 %v833
        %v1135 = vunpack.c.h.b16 %v833
        %v1136 = vunpack.c.l.b16 %v834
        %v1137 = vunpack.c.h.b16 %v834
        %v1138 = vunpack.c.l.b16 %v835
        %v1139 = vunpack.c.h.b16 %v835
        %v1140 = vunpack.c.l.b16 %v836
        %v1141 = vunpack.c.h.b16 %v836
        %v1142 = vunpack.c.l.b16 %v837
        %v1143 = vunpack.c.h.b16 %v837
        %v1144 = vunpack.c.l.b16 %v838
        %v1145 = vunpack.c.h.b16 %v838
        %v1146 = vunpack.c.l.b16 %v839
        %v1147 = vunpack.c.h.b16 %v839
        %v1148 = vunpack.c.l.b16 %v840
        %v1149 = vunpack.c.h.b16 %v840
        %v1150 = vunpack.c.l.b16 %v841
        %v1151 = vunpack.c.h.b16 %v841
        %v1152 = vunpack.c.l.b16 %v842
        %v1153 = vunpack.c.h.b16 %v842
        %v1154 = vunpack.c.l.b16 %v843
        %v1155 = vunpack.c.h.b16 %v843
        %v1156 = vunpack.c.l.b16 %v844
        %v1157 = vunpack.c.h.b16 %v844
        %v1158 = vunpack.c.l.b16 %v845
        %v1159 = vunpack.c.h.b16 %v845
        %v1160 = vunpack.c.l.b16 %v846
        %v1161 = vunpack.c.h.b16 %v846
        %v1162 = vunpack.c.l.b16 %v847
        %v1163 = vunpack.c.h.b16 %v847
        %v1164 = vunpack.c.l.b16 %v848
        %v1165 = vunpack.c.h.b16 %v848
        %v1166 = vunpack.c.l.b16 %v849
        %v1167 = vunpack.c.h.b16 %v849
        %v1168 = vunpack.c.l.b16 %v850
        %v1169 = vunpack.c.h.b16 %v850
        %v1170 = vunpack.c.l.b16 %v851
        %v1171 = vunpack.c.h.b16 %v851
        %v1172 = vunpack.c.l.b16 %v852
        %v1173 = vunpack.c.h.b16 %v852
        %v1174 = vunpack.c.l.b16 %v853
        %v1175 = vunpack.c.h.b16 %v853
        %v1176 = vunpack.c.l.b16 %v854
        %v1177 = vunpack.c.h.b16 %v854
        %v1178 = vunpack.c.l.b16 %v855
        %v1179 = vunpack.c.h.b16 %v855
        %v1180 = vunpack.c.l.b16 %v856
        %v1181 = vunpack.c.h.b16 %v856
        %v1182 = vunpack.c.l.b16 %v857
        %v1183 = vunpack.c.h.b16 %v857
        %v1184 = vunpack.c.l.b16 %v858
        %v1185 = vunpack.c.h.b16 %v858
        %v1186 = vunpack.c.l.b16 %v859
        %v1187 = vunpack.c.h.b16 %v859
        %v1188 = vunpack.c.l.b16 %v860
        %v1189 = vunpack.c.h.b16 %v860
        %v1190 = vunpack.c.l.b16 %v861
        %v1191 = vunpack.c.h.b16 %v861
        %v1192 = vunpack.c.l.b16 %v862
        %v1193 = vunpack.c.h.b16 %v862
        %v1194 = vunpack.c.l.b16 %v863
        %v1195 = vunpack.c.h.b16 %v863
        %v1196 = vunpack.c.l.b16 %v864
        %v1197 = vunpack.c.h.b16 %v864
        %v1198 = vunpack.c.l.b16 %v865
        %v1199 = vunpack.c.h.b16 %v865
        %v1200 = vunpack.c.l.b16 %v866
        %v1201 = vunpack.c.h.b16 %v866
        %v1202 = vunpack.c.l.b16 %v867
        %v1203 = vunpack.c.h.b16 %v867
        %v1204 = vunpack.c.l.b16 %v868
        %v1205 = vunpack.c.h.b16 %v868
        %v1206 = vunpack.c.l.b16 %v869
        %v1207 = vunpack.c.h.b16 %v869
        %v1208 = vunpack.c.l.b16 %v870
        %v1209 = vunpack.c.h.b16 %v870
        %v1210 = vunpack.c.l.b16 %v871
        %v1211 = vunpack.c.h.b16 %v871
        %v1212 = vunpack.c.l.b16 %v872
        %v1213 = vunpack.c.h.b16 %v872
        %v1214 = vunpack.c.l.b16 %v873
        %v1215 = vunpack.c.h.b16 %v873
        %v1216 = vunpack.c.l.b16 %v874
        %v1217 = vunpack.c.h.b16 %v874
        %v1218 = vunpack.c.l.b16 %v875
        %v1219 = vunpack.c.h.b16 %v875
        %v1220 = vunpack.c.l.b16 %v876
        %v1221 = vunpack.c.h.b16 %v876
        %v1222 = vunpack.c.l.b16 %v877
        %v1223 = vunpack.c.h.b16 %v877
        %v1224 = vunpack.c.l.b16 %v878
        %v1225 = vunpack.c.h.b16 %v878
        %v1226 = vunpack.c.l.b16 %v879
        %v1227 = vunpack.c.h.b16 %v879
        %v1228 = vunpack.c.l.b16 %v880
        %v1229 = vunpack.c.h.b16 %v880
        %v1230 = vunpack.c.l.b16 %v881
        %v1231 = vunpack.c.h.b16 %v881
        %v1232 = vunpack.c.l.b16 %v882
        %v1233 = vunpack.c.h.b16 %v882
        %v1234 = vunpack.c.l.b16 %v883
        %v1235 = vunpack.c.h.b16 %v883
        %v1236 = vunpack.c.l.b16 %v884
        %v1237 = vunpack.c.h.b16 %v884
        %v1238 = vunpack.c.l.b16 %v885
        %v1239 = vunpack.c.h.b16 %v885
        %v1240 = vunpack.c.l.b16 %v886
        %v1241 = vunpack.c.h.b16 %v886
        %v1242 = vunpack.c.l.b16 %v887
        %v1243 = vunpack.c.h.b16 %v887
        %v1244 = vunpack.c.l.b16 %v888
        %v1245 = vunpack.c.h.b16 %v888
        %v1246 = vunpack.c.l.b16 %v889
        %v1247 = vunpack.c.h.b16 %v889
        %v1248 = vunpack.c.l.b16 %v890
        %v1249 = vunpack.c.h.b16 %v890
        %v1250 = vunpack.c.l.b16 %v891
        %v1251 = vunpack.c.h.b16 %v891
        %v1252 = vunpack.c.l.b16 %v892
        %v1253 = vunpack.c.h.b16 %v892
        %v1254 = vunpack.c.l.b16 %v893
        %v1255 = vunpack.c.h.b16 %v893
        %v1256 = vunpack.c.l.b16 %v894
        %v1257 = vunpack.c.h.b16 %v894
        %v1258 = vunpack.c.l.b16 %v895
        %v1259 = vunpack.c.h.b16 %v895
        %v1260 = vunpack.c.l.b16 %v896
        %v1261 = vunpack.c.h.b16 %v896
        %v1262 = vunpack.c.l.b16 %v897
        %v1263 = vunpack.c.h.b16 %v897
        %v1264 = vunpack.c.l.b16 %v898
        %v1265 = vunpack.c.h.b16 %v898
        %v1266 = vunpack.c.l.b16 %v899
        %v1267 = vunpack.c.h.b16 %v899
        %v1268 = vunpack.c.l.b16 %v900
        %v1269 = vunpack.c.h.b16 %v900
        %v1270 = vunpack.c.l.b16 %v901
        %v1271 = vunpack.c.h.b16 %v901
        %v1272 = vunpack.c.l.b16 %v902
        %v1273 = vunpack.c.h.b16 %v902
        %v1274 = vunpack.c.l.b16 %v903
        %v1275 = vunpack.c.h.b16 %v903
        %v1276 = vunpack.c.l.b16 %v904
        %v1277 = vunpack.c.h.b16 %v904
        %v1278 = vunpack.c.l.b16 %v905
        %v1279 = vunpack.c.h.b16 %v905
        %v1280 = vunpack.c.l.b16 %v906
        %v1281 = vunpack.c.h.b16 %v906
        %v1282 = vunpack.c.l.b16 %v907
        %v1283 = vunpack.c.h.b16 %v907
        %v1284 = vunpack.c.l.b16 %v908
        %v1285 = vunpack.c.h.b16 %v908
        %v1286 = vunpack.c.l.b16 %v909
        %v1287 = vunpack.c.h.b16 %v909
        %v1288 = vunpack.c.l.b16 %v910
        %v1289 = vunpack.c.h.b16 %v910
        %v1290 = vunpack.c.l.b16 %v911
        %v1291 = vunpack.c.h.b16 %v911
        %v1292 = vunpack.c.l.b16 %v912
        %v1293 = vunpack.c.h.b16 %v912
        %v1294 = vunpack.c.l.b16 %v913
        %v1295 = vunpack.c.h.b16 %v913
        %v1296 = vunpack.c.l.b16 %v914
        %v1297 = vunpack.c.h.b16 %v914
        %v1298 = vunpack.c.l.b16 %v915
        %v1299 = vunpack.c.h.b16 %v915
        %v1300 = vunpack.c.l.b16 %v916
        %v1301 = vunpack.c.h.b16 %v916
        %v1302 = vunpack.c.l.b16 %v917
        %v1303 = vunpack.c.h.b16 %v917
        %v1304 = vunpack.c.l.b16 %v918
        %v1305 = vunpack.c.h.b16 %v918
        %v1306 = vunpack.c.l.b16 %v919
        %v1307 = vunpack.c.h.b16 %v919
        %v1308 = vunpack.c.l.b16 %v920
        %v1309 = vunpack.c.h.b16 %v920
        %v1310 = vunpack.c.l.b16 %v921
        %v1311 = vunpack.c.h.b16 %v921
        %v1312 = vunpack.c.l.b16 %v922
        %v1313 = vunpack.c.h.b16 %v922
        %v1314 = vunpack.c.l.b16 %v923
        %v1315 = vunpack.c.h.b16 %v923
        %v1316 = vunpack.c.l.b16 %v924
        %v1317 = vunpack.c.h.b16 %v924
        %v1318 = vunpack.c.l.b16 %v925
        %v1319 = vunpack.c.h.b16 %v925
        %v1320 = vpack.c.b16 %v1068, %v1064
        %v1321 = vpack.c.b16 %v1069, %v1065
        %v1322 = vpack.c.b16 %v1070, %v1066
        %v1323 = vpack.c.b16 %v1071, %v1067
        %v1324 = vpack.c.b16 %v1076, %v1072
        %v1325 = vpack.c.b16 %v1077, %v1073
        %v1326 = vpack.c.b16 %v1078, %v1074
        %v1327 = vpack.c.b16 %v1079, %v1075
        %v1328 = vpack.c.b16 %v1084, %v1080
        %v1329 = vpack.c.b16 %v1085, %v1081
        %v1330 = vpack.c.b16 %v1086, %v1082
        %v1331 = vpack.c.b16 %v1087, %v1083
        %v1332 = vpack.c.b16 %v1092, %v1088
        %v1333 = vpack.c.b16 %v1093, %v1089
        %v1334 = vpack.c.b16 %v1094, %v1090
        %v1335 = vpack.c.b16 %v1095, %v1091
        %v1336 = vpack.c.b16 %v1100, %v1096
        %v1337 = vpack.c.b16 %v1101, %v1097
        %v1338 = vpack.c.b16 %v1102, %v1098
        %v1339 = vpack.c.b16 %v1103, %v1099
        %v1340 = vpack.c.b16 %v1108, %v1104
        %v1341 = vpack.c.b16 %v1109, %v1105
        %v1342 = vpack.c.b16 %v1110, %v1106
        %v1343 = vpack.c.b16 %v1111, %v1107
        %v1344 = vpack.c.b16 %v1116, %v1112
        %v1345 = vpack.c.b16 %v1117, %v1113
        %v1346 = vpack.c.b16 %v1118, %v1114
        %v1347 = vpack.c.b16 %v1119, %v1115
        %v1348 = vpack.c.b16 %v1124, %v1120
        %v1349 = vpack.c.b16 %v1125, %v1121
        %v1350 = vpack.c.b16 %v1126, %v1122
        %v1351 = vpack.c.b16 %v1127, %v1123
        %v1352 = vpack.c.b16 %v1132, %v1128
        %v1353 = vpack.c.b16 %v1133, %v1129
        %v1354 = vpack.c.b16 %v1134, %v1130
        %v1355 = vpack.c.b16 %v1135, %v1131
        %v1356 = vpack.c.b16 %v1140, %v1136
        %v1357 = vpack.c.b16 %v1141, %v1137
        %v1358 = vpack.c.b16 %v1142, %v1138
        %v1359 = vpack.c.b16 %v1143, %v1139
        %v1360 = vpack.c.b16 %v1148, %v1144
        %v1361 = vpack.c.b16 %v1149, %v1145
        %v1362 = vpack.c.b16 %v1150, %v1146
        %v1363 = vpack.c.b16 %v1151, %v1147
        %v1364 = vpack.c.b16 %v1156, %v1152
        %v1365 = vpack.c.b16 %v1157, %v1153
        %v1366 = vpack.c.b16 %v1158, %v1154
        %v1367 = vpack.c.b16 %v1159, %v1155
        %v1368 = vpack.c.b16 %v1164, %v1160
        %v1369 = vpack.c.b16 %v1165, %v1161
        %v1370 = vpack.c.b16 %v1166, %v1162
        %v1371 = vpack.c.b16 %v1167, %v1163
        %v1372 = vpack.c.b16 %v1172, %v1168
        %v1373 = vpack.c.b16 %v1173, %v1169
        %v1374 = vpack.c.b16 %v1174, %v1170
        %v1375 = vpack.c.b16 %v1175, %v1171
        %v1376 = vpack.c.b16 %v1180, %v1176
        %v1377 = vpack.c.b16 %v1181, %v1177
        %v1378 = vpack.c.b16 %v1182, %v1178
        %v1379 = vpack.c.b16 %v1183, %v1179
        %v1380 = vpack.c.b16 %v1188, %v1184
        %v1381 = vpack.c.b16 %v1189, %v1185
        %v1382 = vpack.c.b16 %v1190, %v1186
        %v1383 = vpack.c.b16 %v1191, %v1187
        %v1384 = vpack.c.b16 %v1196, %v1192
        %v1385 = vpack.c.b16 %v1197, %v1193
        %v1386 = vpack.c.b16 %v1198, %v1194
        %v1387 = vpack.c.b16 %v1199, %v1195
        %v1388 = vpack.c.b16 %v1204, %v1200
        %v1389 = vpack.c.b16 %v1205, %v1201
        %v1390 = vpack.c.b16 %v1206, %v1202
        %v1391 = vpack.c.b16 %v1207, %v1203
        %v1392 = vpack.c.b16 %v1212, %v1208
        %v1393 = vpack.c.b16 %v1213, %v1209
        %v1394 = vpack.c.b16 %v1214, %v1210
        %v1395 = vpack.c.b16 %v1215, %v1211
        %v1396 = vpack.c.b16 %v1220, %v1216
        %v1397 = vpack.c.b16 %v1221, %v1217
        %v1398 = vpack.c.b16 %v1222, %v1218
        %v1399 = vpack.c.b16 %v1223, %v1219
        %v1400 = vpack.c.b16 %v1228, %v1224
        %v1401 = vpack.c.b16 %v1229, %v1225
        %v1402 = vpack.c.b16 %v1230, %v1226
        %v1403 = vpack.c.b16 %v1231, %v1227
        %v1404 = vpack.c.b16 %v1236, %v1232
        %v1405 = vpack.c.b16 %v1237, %v1233
        %v1406 = vpack.c.b16 %v1238, %v1234
        %v1407 = vpack.c.b16 %v1239, %v1235
        %v1408 = vpack.c.b16 %v1244, %v1240
        %v1409 = vpack.c.b16 %v1245, %v1241
        %v1410 = vpack.c.b16 %v1246, %v1242
        %v1411 = vpack.c.b16 %v1247, %v1243
        %v1412 = vpack.c.b16 %v1252, %v1248
        %v1413 = vpack.c.b16 %v1253, %v1249
        %v1414 = vpack.c.b16 %v1254, %v1250
        %v1415 = vpack.c.b16 %v1255, %v1251
        %v1416 = vpack.c.b16 %v1260, %v1256
        %v1417 = vpack.c.b16 %v1261, %v1257
        %v1418 = vpack.c.b16 %v1262, %v1258
        %v1419 = vpack.c.b16 %v1263, %v1259
        %v1420 = vpack.c.b16 %v1268, %v1264
        %v1421 = vpack.c.b16 %v1269, %v1265
        %v1422 = vpack.c.b16 %v1270, %v1266
        %v1423 = vpack.c.b16 %v1271, %v1267
        %v1424 = vpack.c.b16 %v1276, %v1272
        %v1425 = vpack.c.b16 %v1277, %v1273
        %v1426 = vpack.c.b16 %v1278, %v1274
        %v1427 = vpack.c.b16 %v1279, %v1275
        %v1428 = vpack.c.b16 %v1284, %v1280
        %v1429 = vpack.c.b16 %v1285, %v1281
        %v1430 = vpack.c.b16 %v1286, %v1282
        %v1431 = vpack.c.b16 %v1287, %v1283
        %v1432 = vpack.c.b16 %v1292, %v1288
        %v1433 = vpack.c.b16 %v1293, %v1289
        %v1434 = vpack.c.b16 %v1294, %v1290
        %v1435 = vpack.c.b16 %v1295, %v1291
        %v1436 = vpack.c.b16 %v1300, %v1296
        %v1437 = vpack.c.b16 %v1301, %v1297
        %v1438 = vpack.c.b16 %v1302, %v1298
        %v1439 = vpack.c.b16 %v1303, %v1299
        %v1440 = vpack.c.b16 %v1308, %v1304
        %v1441 = vpack.c.b16 %v1309, %v1305
        %v1442 = vpack.c.b16 %v1310, %v1306
        %v1443 = vpack.c.b16 %v1311, %v1307
        %v1444 = vpack.c.b16 %v1316, %v1312
        %v1445 = vpack.c.b16 %v1317, %v1313
        %v1446 = vpack.c.b16 %v1318, %v1314
        %v1447 = vpack.c.b16 %v1319, %v1315
        %1576 = vmatpush.bf16.msra.mxu0 %v1348
        %1577 = vmatpush.bf16.msra.mxu0 %v1344
        %1578 = vmatpush.bf16.msra.mxu0 %v1340
        %1579 = vmatpush.bf16.msra.mxu0 %v1336
        %1580 = vmatpush.bf16.msra.mxu0 %v1332
        %1581 = vmatpush.bf16.msra.mxu0 %v1328
        %1582 = vmatpush.bf16.msra.mxu0 %v1324
        %1583 = vmatpush.bf16.msra.mxu0 %v1320
        %1584 = vmatmul.bf16.gmra.mxu0 %v782
        %v1585 = vpop.f32.mrf.mxu0
        %v1586 = vadd.f32 %v928, %v1585
        %v1587 = vpop.f32.mrf.mxu0
        %v1588 = vadd.f32 %v928, %v1587
        %1589 = vmatmul.bf16.gmra.mxu0 %v786
        %v1590 = vpop.f32.mrf.mxu0
        %v1591 = vadd.f32 %v928, %v1590
        %v1592 = vpop.f32.mrf.mxu0
        %v1593 = vadd.f32 %v928, %v1592
        %1594 = vmatmul.bf16.gmra.mxu0 %v790
        %v1595 = vpop.f32.mrf.mxu0
        %v1596 = vadd.f32 %v928, %v1595
        %v1597 = vpop.f32.mrf.mxu0
        %v1598 = vadd.f32 %v928, %v1597
        %1599 = vmatmul.bf16.gmra.mxu0 %v794
        %v1600 = vpop.f32.mrf.mxu0
        %v1601 = vadd.f32 %v928, %v1600
        %v1602 = vpop.f32.mrf.mxu0
        %v1603 = vadd.f32 %v928, %v1602
        %1604 = vdwg.mxu0
        %1605 = vmatpush.bf16.msra.mxu0 %v1380
        %1606 = vmatpush.bf16.msra.mxu0 %v1376
        %1607 = vmatpush.bf16.msra.mxu0 %v1372
        %1608 = vmatpush.bf16.msra.mxu0 %v1368
        %1609 = vmatpush.bf16.msra.mxu0 %v1364
        %1610 = vmatpush.bf16.msra.mxu0 %v1360
        %1611 = vmatpush.bf16.msra.mxu0 %v1356
        %1612 = vmatpush.bf16.msra.mxu0 %v1352
        %1613 = vmatmul.bf16.gmra.mxu0 %v783
        %v1614 = vpop.f32.mrf.mxu0
        %v1615 = vadd.f32 %v1586, %v1614
        %v1616 = vpop.f32.mrf.mxu0
        %v1617 = vadd.f32 %v1588, %v1616
        %1618 = vmatmul.bf16.gmra.mxu0 %v787
        %v1619 = vpop.f32.mrf.mxu0
        %v1620 = vadd.f32 %v1591, %v1619
        %v1621 = vpop.f32.mrf.mxu0
        %v1622 = vadd.f32 %v1593, %v1621
        %1623 = vmatmul.bf16.gmra.mxu0 %v791
        %v1624 = vpop.f32.mrf.mxu0
        %v1625 = vadd.f32 %v1596, %v1624
        %v1626 = vpop.f32.mrf.mxu0
        %v1627 = vadd.f32 %v1598, %v1626
        %1628 = vmatmul.bf16.gmra.mxu0 %v795
        %v1629 = vpop.f32.mrf.mxu0
        %v1630 = vadd.f32 %v1601, %v1629
        %v1631 = vpop.f32.mrf.mxu0
        %v1632 = vadd.f32 %v1603, %v1631
        %1633 = vdwg.mxu0
        %1634 = vmatpush.bf16.msra.mxu0 %v1412
        %1635 = vmatpush.bf16.msra.mxu0 %v1408
        %1636 = vmatpush.bf16.msra.mxu0 %v1404
        %1637 = vmatpush.bf16.msra.mxu0 %v1400
        %1638 = vmatpush.bf16.msra.mxu0 %v1396
        %1639 = vmatpush.bf16.msra.mxu0 %v1392
        %1640 = vmatpush.bf16.msra.mxu0 %v1388
        %1641 = vmatpush.bf16.msra.mxu0 %v1384
        %1642 = vmatmul.bf16.gmra.mxu0 %v784
        %v1643 = vpop.f32.mrf.mxu0
        %v1644 = vadd.f32 %v1615, %v1643
        %v1645 = vpop.f32.mrf.mxu0
        %v1646 = vadd.f32 %v1617, %v1645
        %1647 = vmatmul.bf16.gmra.mxu0 %v788
        %v1648 = vpop.f32.mrf.mxu0
        %v1649 = vadd.f32 %v1620, %v1648
        %v1650 = vpop.f32.mrf.mxu0
        %v1651 = vadd.f32 %v1622, %v1650
        %1652 = vmatmul.bf16.gmra.mxu0 %v792
        %v1653 = vpop.f32.mrf.mxu0
        %v1654 = vadd.f32 %v1625, %v1653
        %v1655 = vpop.f32.mrf.mxu0
        %v1656 = vadd.f32 %v1627, %v1655
        %1657 = vmatmul.bf16.gmra.mxu0 %v796
        %v1658 = vpop.f32.mrf.mxu0
        %v1659 = vadd.f32 %v1630, %v1658
        %v1660 = vpop.f32.mrf.mxu0
        %v1661 = vadd.f32 %v1632, %v1660
        %1662 = vdwg.mxu0
        %1663 = vmatpush.bf16.msra.mxu0 %v1444
        %1664 = vmatpush.bf16.msra.mxu0 %v1440
        %1665 = vmatpush.bf16.msra.mxu0 %v1436
        %1666 = vmatpush.bf16.msra.mxu0 %v1432
        %1667 = vmatpush.bf16.msra.mxu0 %v1428
        %1668 = vmatpush.bf16.msra.mxu0 %v1424
        %1669 = vmatpush.bf16.msra.mxu0 %v1420
        %1670 = vmatpush.bf16.msra.mxu0 %v1416
        %1671 = vmatmul.bf16.gmra.mxu0 %v785
        %v1672 = vpop.f32.mrf.mxu0
        %v1673 = vadd.f32 %v1644, %v1672
        %v1674 = vpop.f32.mrf.mxu0
        %v1675 = vadd.f32 %v1646, %v1674
        %1676 = vmatmul.bf16.gmra.mxu0 %v789
        %v1677 = vpop.f32.mrf.mxu0
        %v1678 = vadd.f32 %v1649, %v1677
        %v1679 = vpop.f32.mrf.mxu0
        %v1680 = vadd.f32 %v1651, %v1679
        %1681 = vmatmul.bf16.gmra.mxu0 %v793
        %v1682 = vpop.f32.mrf.mxu0
        %v1683 = vadd.f32 %v1654, %v1682
        %v1684 = vpop.f32.mrf.mxu0
        %v1685 = vadd.f32 %v1656, %v1684
        %1686 = vmatmul.bf16.gmra.mxu0 %v797
        %v1687 = vpop.f32.mrf.mxu0
        %v1688 = vadd.f32 %v1659, %v1687
        %v1689 = vpop.f32.mrf.mxu0
        %v1690 = vadd.f32 %v1661, %v1689
        %1691 = vdwg.mxu0
        %1692 = vmatpush.bf16.msra.mxu0 %v1349
        %1693 = vmatpush.bf16.msra.mxu0 %v1345
        %1694 = vmatpush.bf16.msra.mxu0 %v1341
        %1695 = vmatpush.bf16.msra.mxu0 %v1337
        %1696 = vmatpush.bf16.msra.mxu0 %v1333
        %1697 = vmatpush.bf16.msra.mxu0 %v1329
        %1698 = vmatpush.bf16.msra.mxu0 %v1325
        %1699 = vmatpush.bf16.msra.mxu0 %v1321
        %1700 = vmatmul.bf16.gmra.mxu0 %v782
        %v1701 = vpop.f32.mrf.mxu0
        %v1702 = vadd.f32 %v929, %v1701
        %v1703 = vpop.f32.mrf.mxu0
        %v1704 = vadd.f32 %v929, %v1703
        %1705 = vmatmul.bf16.gmra.mxu0 %v786
        %v1706 = vpop.f32.mrf.mxu0
        %v1707 = vadd.f32 %v929, %v1706
        %v1708 = vpop.f32.mrf.mxu0
        %v1709 = vadd.f32 %v929, %v1708
        %1710 = vmatmul.bf16.gmra.mxu0 %v790
        %v1711 = vpop.f32.mrf.mxu0
        %v1712 = vadd.f32 %v929, %v1711
        %v1713 = vpop.f32.mrf.mxu0
        %v1714 = vadd.f32 %v929, %v1713
        %1715 = vmatmul.bf16.gmra.mxu0 %v794
        %v1716 = vpop.f32.mrf.mxu0
        %v1717 = vadd.f32 %v929, %v1716
        %v1718 = vpop.f32.mrf.mxu0
        %v1719 = vadd.f32 %v929, %v1718
        %1720 = vdwg.mxu0
        %1721 = vmatpush.bf16.msra.mxu0 %v1381
        %1722 = vmatpush.bf16.msra.mxu0 %v1377
        %1723 = vmatpush.bf16.msra.mxu0 %v1373
        %1724 = vmatpush.bf16.msra.mxu0 %v1369
        %1725 = vmatpush.bf16.msra.mxu0 %v1365
        %1726 = vmatpush.bf16.msra.mxu0 %v1361
        %1727 = vmatpush.bf16.msra.mxu0 %v1357
        %1728 = vmatpush.bf16.msra.mxu0 %v1353
        %1729 = vmatmul.bf16.gmra.mxu0 %v783
        %v1730 = vpop.f32.mrf.mxu0
        %v1731 = vadd.f32 %v1702, %v1730
        %v1732 = vpop.f32.mrf.mxu0
        %v1733 = vadd.f32 %v1704, %v1732
        %1734 = vmatmul.bf16.gmra.mxu0 %v787
        %v1735 = vpop.f32.mrf.mxu0
        %v1736 = vadd.f32 %v1707, %v1735
        %v1737 = vpop.f32.mrf.mxu0
        %v1738 = vadd.f32 %v1709, %v1737
        %1739 = vmatmul.bf16.gmra.mxu0 %v791
        %v1740 = vpop.f32.mrf.mxu0
        %v1741 = vadd.f32 %v1712, %v1740
        %v1742 = vpop.f32.mrf.mxu0
        %v1743 = vadd.f32 %v1714, %v1742
        %1744 = vmatmul.bf16.gmra.mxu0 %v795
        %v1745 = vpop.f32.mrf.mxu0
        %v1746 = vadd.f32 %v1717, %v1745
        %v1747 = vpop.f32.mrf.mxu0
        %v1748 = vadd.f32 %v1719, %v1747
        %1749 = vdwg.mxu0
        %1750 = vmatpush.bf16.msra.mxu0 %v1413
        %1751 = vmatpush.bf16.msra.mxu0 %v1409
        %1752 = vmatpush.bf16.msra.mxu0 %v1405
        %1753 = vmatpush.bf16.msra.mxu0 %v1401
        %1754 = vmatpush.bf16.msra.mxu0 %v1397
        %1755 = vmatpush.bf16.msra.mxu0 %v1393
        %1756 = vmatpush.bf16.msra.mxu0 %v1389
        %1757 = vmatpush.bf16.msra.mxu0 %v1385
        %1758 = vmatmul.bf16.gmra.mxu0 %v784
        %v1759 = vpop.f32.mrf.mxu0
        %v1760 = vadd.f32 %v1731, %v1759
        %v1761 = vpop.f32.mrf.mxu0
        %v1762 = vadd.f32 %v1733, %v1761
        %1763 = vmatmul.bf16.gmra.mxu0 %v788
        %v1764 = vpop.f32.mrf.mxu0
        %v1765 = vadd.f32 %v1736, %v1764
        %v1766 = vpop.f32.mrf.mxu0
        %v1767 = vadd.f32 %v1738, %v1766
        %1768 = vmatmul.bf16.gmra.mxu0 %v792
        %v1769 = vpop.f32.mrf.mxu0
        %v1770 = vadd.f32 %v1741, %v1769
        %v1771 = vpop.f32.mrf.mxu0
        %v1772 = vadd.f32 %v1743, %v1771
        %1773 = vmatmul.bf16.gmra.mxu0 %v796
        %v1774 = vpop.f32.mrf.mxu0
        %v1775 = vadd.f32 %v1746, %v1774
        %v1776 = vpop.f32.mrf.mxu0
        %v1777 = vadd.f32 %v1748, %v1776
        %1778 = vdwg.mxu0
        %1779 = vmatpush.bf16.msra.mxu0 %v1445
        %1780 = vmatpush.bf16.msra.mxu0 %v1441
        %1781 = vmatpush.bf16.msra.mxu0 %v1437
        %1782 = vmatpush.bf16.msra.mxu0 %v1433
        %1783 = vmatpush.bf16.msra.mxu0 %v1429
        %1784 = vmatpush.bf16.msra.mxu0 %v1425
        %1785 = vmatpush.bf16.msra.mxu0 %v1421
        %1786 = vmatpush.bf16.msra.mxu0 %v1417
        %1787 = vmatmul.bf16.gmra.mxu0 %v785
        %v1788 = vpop.f32.mrf.mxu0
        %v1789 = vadd.f32 %v1760, %v1788
        %v1790 = vpop.f32.mrf.mxu0
        %v1791 = vadd.f32 %v1762, %v1790
        %1792 = vmatmul.bf16.gmra.mxu0 %v789
        %v1793 = vpop.f32.mrf.mxu0
        %v1794 = vadd.f32 %v1765, %v1793
        %v1795 = vpop.f32.mrf.mxu0
        %v1796 = vadd.f32 %v1767, %v1795
        %1797 = vmatmul.bf16.gmra.mxu0 %v793
        %v1798 = vpop.f32.mrf.mxu0
        %v1799 = vadd.f32 %v1770, %v1798
        %v1800 = vpop.f32.mrf.mxu0
        %v1801 = vadd.f32 %v1772, %v1800
        %1802 = vmatmul.bf16.gmra.mxu0 %v797
        %v1803 = vpop.f32.mrf.mxu0
        %v1804 = vadd.f32 %v1775, %v1803
        %v1805 = vpop.f32.mrf.mxu0
        %v1806 = vadd.f32 %v1777, %v1805
        %1807 = vdwg.mxu0
        %1808 = vmatpush.bf16.msra.mxu0 %v1350
        %1809 = vmatpush.bf16.msra.mxu0 %v1346
        %1810 = vmatpush.bf16.msra.mxu0 %v1342
        %1811 = vmatpush.bf16.msra.mxu0 %v1338
        %1812 = vmatpush.bf16.msra.mxu0 %v1334
        %1813 = vmatpush.bf16.msra.mxu0 %v1330
        %1814 = vmatpush.bf16.msra.mxu0 %v1326
        %1815 = vmatpush.bf16.msra.mxu0 %v1322
        %1816 = vmatmul.bf16.gmra.mxu0 %v782
        %v1817 = vpop.f32.mrf.mxu0
        %v1818 = vadd.f32 %v930, %v1817
        %v1819 = vpop.f32.mrf.mxu0
        %v1820 = vadd.f32 %v930, %v1819
        %1821 = vmatmul.bf16.gmra.mxu0 %v786
        %v1822 = vpop.f32.mrf.mxu0
        %v1823 = vadd.f32 %v930, %v1822
        %v1824 = vpop.f32.mrf.mxu0
        %v1825 = vadd.f32 %v930, %v1824
        %1826 = vmatmul.bf16.gmra.mxu0 %v790
        %v1827 = vpop.f32.mrf.mxu0
        %v1828 = vadd.f32 %v930, %v1827
        %v1829 = vpop.f32.mrf.mxu0
        %v1830 = vadd.f32 %v930, %v1829
        %1831 = vmatmul.bf16.gmra.mxu0 %v794
        %v1832 = vpop.f32.mrf.mxu0
        %v1833 = vadd.f32 %v930, %v1832
        %v1834 = vpop.f32.mrf.mxu0
        %v1835 = vadd.f32 %v930, %v1834
        %1836 = vdwg.mxu0
        %1837 = vmatpush.bf16.msra.mxu0 %v1382
        %1838 = vmatpush.bf16.msra.mxu0 %v1378
        %1839 = vmatpush.bf16.msra.mxu0 %v1374
        %1840 = vmatpush.bf16.msra.mxu0 %v1370
        %1841 = vmatpush.bf16.msra.mxu0 %v1366
        %1842 = vmatpush.bf16.msra.mxu0 %v1362
        %1843 = vmatpush.bf16.msra.mxu0 %v1358
        %1844 = vmatpush.bf16.msra.mxu0 %v1354
        %1845 = vmatmul.bf16.gmra.mxu0 %v783
        %v1846 = vpop.f32.mrf.mxu0
        %v1847 = vadd.f32 %v1818, %v1846
        %v1848 = vpop.f32.mrf.mxu0
        %v1849 = vadd.f32 %v1820, %v1848
        %1850 = vmatmul.bf16.gmra.mxu0 %v787
        %v1851 = vpop.f32.mrf.mxu0
        %v1852 = vadd.f32 %v1823, %v1851
        %v1853 = vpop.f32.mrf.mxu0
        %v1854 = vadd.f32 %v1825, %v1853
        %1855 = vmatmul.bf16.gmra.mxu0 %v791
        %v1856 = vpop.f32.mrf.mxu0
        %v1857 = vadd.f32 %v1828, %v1856
        %v1858 = vpop.f32.mrf.mxu0
        %v1859 = vadd.f32 %v1830, %v1858
        %1860 = vmatmul.bf16.gmra.mxu0 %v795
        %v1861 = vpop.f32.mrf.mxu0
        %v1862 = vadd.f32 %v1833, %v1861
        %v1863 = vpop.f32.mrf.mxu0
        %v1864 = vadd.f32 %v1835, %v1863
        %1865 = vdwg.mxu0
        %1866 = vmatpush.bf16.msra.mxu0 %v1414
        %1867 = vmatpush.bf16.msra.mxu0 %v1410
        %1868 = vmatpush.bf16.msra.mxu0 %v1406
        %1869 = vmatpush.bf16.msra.mxu0 %v1402
        %1870 = vmatpush.bf16.msra.mxu0 %v1398
        %1871 = vmatpush.bf16.msra.mxu0 %v1394
        %1872 = vmatpush.bf16.msra.mxu0 %v1390
        %1873 = vmatpush.bf16.msra.mxu0 %v1386
        %1874 = vmatmul.bf16.gmra.mxu0 %v784
        %v1875 = vpop.f32.mrf.mxu0
        %v1876 = vadd.f32 %v1847, %v1875
        %v1877 = vpop.f32.mrf.mxu0
        %v1878 = vadd.f32 %v1849, %v1877
        %1879 = vmatmul.bf16.gmra.mxu0 %v788
        %v1880 = vpop.f32.mrf.mxu0
        %v1881 = vadd.f32 %v1852, %v1880
        %v1882 = vpop.f32.mrf.mxu0
        %v1883 = vadd.f32 %v1854, %v1882
        %1884 = vmatmul.bf16.gmra.mxu0 %v792
        %v1885 = vpop.f32.mrf.mxu0
        %v1886 = vadd.f32 %v1857, %v1885
        %v1887 = vpop.f32.mrf.mxu0
        %v1888 = vadd.f32 %v1859, %v1887
        %1889 = vmatmul.bf16.gmra.mxu0 %v796
        %v1890 = vpop.f32.mrf.mxu0
        %v1891 = vadd.f32 %v1862, %v1890
        %v1892 = vpop.f32.mrf.mxu0
        %v1893 = vadd.f32 %v1864, %v1892
        %1894 = vdwg.mxu0
        %1895 = vmatpush.bf16.msra.mxu0 %v1446
        %1896 = vmatpush.bf16.msra.mxu0 %v1442
        %1897 = vmatpush.bf16.msra.mxu0 %v1438
        %1898 = vmatpush.bf16.msra.mxu0 %v1434
        %1899 = vmatpush.bf16.msra.mxu0 %v1430
        %1900 = vmatpush.bf16.msra.mxu0 %v1426
        %1901 = vmatpush.bf16.msra.mxu0 %v1422
        %1902 = vmatpush.bf16.msra.mxu0 %v1418
        %1903 = vmatmul.bf16.gmra.mxu0 %v785
        %v1904 = vpop.f32.mrf.mxu0
        %v1905 = vadd.f32 %v1876, %v1904
        %v1906 = vpop.f32.mrf.mxu0
        %v1907 = vadd.f32 %v1878, %v1906
        %1908 = vmatmul.bf16.gmra.mxu0 %v789
        %v1909 = vpop.f32.mrf.mxu0
        %v1910 = vadd.f32 %v1881, %v1909
        %v1911 = vpop.f32.mrf.mxu0
        %v1912 = vadd.f32 %v1883, %v1911
        %1913 = vmatmul.bf16.gmra.mxu0 %v793
        %v1914 = vpop.f32.mrf.mxu0
        %v1915 = vadd.f32 %v1886, %v1914
        %v1916 = vpop.f32.mrf.mxu0
        %v1917 = vadd.f32 %v1888, %v1916
        %1918 = vmatmul.bf16.gmra.mxu0 %v797
        %v1919 = vpop.f32.mrf.mxu0
        %v1920 = vadd.f32 %v1891, %v1919
        %v1921 = vpop.f32.mrf.mxu0
        %v1922 = vadd.f32 %v1893, %v1921
        %1923 = vdwg.mxu0
        %1924 = vmatpush.bf16.msra.mxu0 %v1351
        %1925 = vmatpush.bf16.msra.mxu0 %v1347
        %1926 = vmatpush.bf16.msra.mxu0 %v1343
        %1927 = vmatpush.bf16.msra.mxu0 %v1339
        %1928 = vmatpush.bf16.msra.mxu0 %v1335
        %1929 = vmatpush.bf16.msra.mxu0 %v1331
        %1930 = vmatpush.bf16.msra.mxu0 %v1327
        %1931 = vmatpush.bf16.msra.mxu0 %v1323
        %1932 = vmatmul.bf16.gmra.mxu0 %v782
        %v1933 = vpop.f32.mrf.mxu0
        %v1934 = vadd.f32 %v931, %v1933
        %v1935 = vpop.f32.mrf.mxu0
        %v1936 = vadd.f32 %v931, %v1935
        %1937 = vmatmul.bf16.gmra.mxu0 %v786
        %v1938 = vpop.f32.mrf.mxu0
        %v1939 = vadd.f32 %v931, %v1938
        %v1940 = vpop.f32.mrf.mxu0
        %v1941 = vadd.f32 %v931, %v1940
        %1942 = vmatmul.bf16.gmra.mxu0 %v790
        %v1943 = vpop.f32.mrf.mxu0
        %v1944 = vadd.f32 %v931, %v1943
        %v1945 = vpop.f32.mrf.mxu0
        %v1946 = vadd.f32 %v931, %v1945
        %1947 = vmatmul.bf16.gmra.mxu0 %v794
        %v1948 = vpop.f32.mrf.mxu0
        %v1949 = vadd.f32 %v931, %v1948
        %v1950 = vpop.f32.mrf.mxu0
        %v1951 = vadd.f32 %v931, %v1950
        %1952 = vdwg.mxu0
        %1953 = vmatpush.bf16.msra.mxu0 %v1383
        %1954 = vmatpush.bf16.msra.mxu0 %v1379
        %1955 = vmatpush.bf16.msra.mxu0 %v1375
        %1956 = vmatpush.bf16.msra.mxu0 %v1371
        %1957 = vmatpush.bf16.msra.mxu0 %v1367
        %1958 = vmatpush.bf16.msra.mxu0 %v1363
        %1959 = vmatpush.bf16.msra.mxu0 %v1359
        %1960 = vmatpush.bf16.msra.mxu0 %v1355
        %1961 = vmatmul.bf16.gmra.mxu0 %v783
        %v1962 = vpop.f32.mrf.mxu0
        %v1963 = vadd.f32 %v1934, %v1962
        %v1964 = vpop.f32.mrf.mxu0
        %v1965 = vadd.f32 %v1936, %v1964
        %1966 = vmatmul.bf16.gmra.mxu0 %v787
        %v1967 = vpop.f32.mrf.mxu0
        %v1968 = vadd.f32 %v1939, %v1967
        %v1969 = vpop.f32.mrf.mxu0
        %v1970 = vadd.f32 %v1941, %v1969
        %1971 = vmatmul.bf16.gmra.mxu0 %v791
        %v1972 = vpop.f32.mrf.mxu0
        %v1973 = vadd.f32 %v1944, %v1972
        %v1974 = vpop.f32.mrf.mxu0
        %v1975 = vadd.f32 %v1946, %v1974
        %1976 = vmatmul.bf16.gmra.mxu0 %v795
        %v1977 = vpop.f32.mrf.mxu0
        %v1978 = vadd.f32 %v1949, %v1977
        %v1979 = vpop.f32.mrf.mxu0
        %v1980 = vadd.f32 %v1951, %v1979
        %1981 = vdwg.mxu0
        %1982 = vmatpush.bf16.msra.mxu0 %v1415
        %1983 = vmatpush.bf16.msra.mxu0 %v1411
        %1984 = vmatpush.bf16.msra.mxu0 %v1407
        %1985 = vmatpush.bf16.msra.mxu0 %v1403
        %1986 = vmatpush.bf16.msra.mxu0 %v1399
        %1987 = vmatpush.bf16.msra.mxu0 %v1395
        %1988 = vmatpush.bf16.msra.mxu0 %v1391
        %1989 = vmatpush.bf16.msra.mxu0 %v1387
        %1990 = vmatmul.bf16.gmra.mxu0 %v784
        %v1991 = vpop.f32.mrf.mxu0
        %v1992 = vadd.f32 %v1963, %v1991
        %v1993 = vpop.f32.mrf.mxu0
        %v1994 = vadd.f32 %v1965, %v1993
        %1995 = vmatmul.bf16.gmra.mxu0 %v788
        %v1996 = vpop.f32.mrf.mxu0
        %v1997 = vadd.f32 %v1968, %v1996
        %v1998 = vpop.f32.mrf.mxu0
        %v1999 = vadd.f32 %v1970, %v1998
        %2000 = vmatmul.bf16.gmra.mxu0 %v792
        %v2001 = vpop.f32.mrf.mxu0
        %v2002 = vadd.f32 %v1973, %v2001
        %v2003 = vpop.f32.mrf.mxu0
        %v2004 = vadd.f32 %v1975, %v2003
        %2005 = vmatmul.bf16.gmra.mxu0 %v796
        %v2006 = vpop.f32.mrf.mxu0
        %v2007 = vadd.f32 %v1978, %v2006
        %v2008 = vpop.f32.mrf.mxu0
        %v2009 = vadd.f32 %v1980, %v2008
        %2010 = vdwg.mxu0
        %2011 = vmatpush.bf16.msra.mxu0 %v1447
        %2012 = vmatpush.bf16.msra.mxu0 %v1443
        %2013 = vmatpush.bf16.msra.mxu0 %v1439
        %2014 = vmatpush.bf16.msra.mxu0 %v1435
        %2015 = vmatpush.bf16.msra.mxu0 %v1431
        %2016 = vmatpush.bf16.msra.mxu0 %v1427
        %2017 = vmatpush.bf16.msra.mxu0 %v1423
        %2018 = vmatpush.bf16.msra.mxu0 %v1419
        %2019 = vmatmul.bf16.gmra.mxu0 %v785
        %v2020 = vpop.f32.mrf.mxu0
        %v2021 = vadd.f32 %v1992, %v2020
        %v2022 = vpop.f32.mrf.mxu0
        %v2023 = vadd.f32 %v1994, %v2022
        %2024 = vmatmul.bf16.gmra.mxu0 %v789
        %v2025 = vpop.f32.mrf.mxu0
        %v2026 = vadd.f32 %v1997, %v2025
        %v2027 = vpop.f32.mrf.mxu0
        %v2028 = vadd.f32 %v1999, %v2027
        %2029 = vmatmul.bf16.gmra.mxu0 %v793
        %v2030 = vpop.f32.mrf.mxu0
        %v2031 = vadd.f32 %v2002, %v2030
        %v2032 = vpop.f32.mrf.mxu0
        %v2033 = vadd.f32 %v2004, %v2032
        %2034 = vmatmul.bf16.gmra.mxu0 %v797
        %v2035 = vpop.f32.mrf.mxu0
        %v2036 = vadd.f32 %v2007, %v2035
        %v2037 = vpop.f32.mrf.mxu0
        %v2038 = vadd.f32 %v2009, %v2037
        %2039 = vdwg.mxu0
        %vm2040 = vcmp.gt.f32.partialorder %v1673, 0.0
        %vm2041 = vcmp.gt.f32.partialorder %v1789, 0.0
        %vm2042 = vcmp.gt.f32.partialorder %v1905, 0.0
        %vm2043 = vcmp.gt.f32.partialorder %v2021, 0.0
        %vm2044 = vcmp.gt.f32.partialorder %v1675, 0.0
        %vm2045 = vcmp.gt.f32.partialorder %v1791, 0.0
        %vm2046 = vcmp.gt.f32.partialorder %v1907, 0.0
        %vm2047 = vcmp.gt.f32.partialorder %v2023, 0.0
        %vm2048 = vcmp.gt.f32.partialorder %v1678, 0.0
        %vm2049 = vcmp.gt.f32.partialorder %v1794, 0.0
        %vm2050 = vcmp.gt.f32.partialorder %v1910, 0.0
        %vm2051 = vcmp.gt.f32.partialorder %v2026, 0.0
        %vm2052 = vcmp.gt.f32.partialorder %v1680, 0.0
        %vm2053 = vcmp.gt.f32.partialorder %v1796, 0.0
        %vm2054 = vcmp.gt.f32.partialorder %v1912, 0.0
        %vm2055 = vcmp.gt.f32.partialorder %v2028, 0.0
        %vm2056 = vcmp.gt.f32.partialorder %v1683, 0.0
        %vm2057 = vcmp.gt.f32.partialorder %v1799, 0.0
        %vm2058 = vcmp.gt.f32.partialorder %v1915, 0.0
        %vm2059 = vcmp.gt.f32.partialorder %v2031, 0.0
        %vm2060 = vcmp.gt.f32.partialorder %v1685, 0.0
        %vm2061 = vcmp.gt.f32.partialorder %v1801, 0.0
        %vm2062 = vcmp.gt.f32.partialorder %v1917, 0.0
        %vm2063 = vcmp.gt.f32.partialorder %v2033, 0.0
        %vm2064 = vcmp.gt.f32.partialorder %v1688, 0.0
        %vm2065 = vcmp.gt.f32.partialorder %v1804, 0.0
        %vm2066 = vcmp.gt.f32.partialorder %v1920, 0.0
        %vm2067 = vcmp.gt.f32.partialorder %v2036, 0.0
        %vm2068 = vcmp.gt.f32.partialorder %v1690, 0.0
        %vm2069 = vcmp.gt.f32.partialorder %v1806, 0.0
        %vm2070 = vcmp.gt.f32.partialorder %v1922, 0.0
        %vm2071 = vcmp.gt.f32.partialorder %v2038, 0.0
        %v2072 = vmul.f32 %v1673, 0.01
        %v2073 = vmul.f32 %v1789, 0.01
        %v2074 = vmul.f32 %v1905, 0.01
        %v2075 = vmul.f32 %v2021, 0.01
        %v2076 = vmul.f32 %v1675, 0.01
        %v2077 = vmul.f32 %v1791, 0.01
        %v2078 = vmul.f32 %v1907, 0.01
        %v2079 = vmul.f32 %v2023, 0.01
        %v2080 = vmul.f32 %v1678, 0.01
        %v2081 = vmul.f32 %v1794, 0.01
        %v2082 = vmul.f32 %v1910, 0.01
        %v2083 = vmul.f32 %v2026, 0.01
        %v2084 = vmul.f32 %v1680, 0.01
        %v2085 = vmul.f32 %v1796, 0.01
        %v2086 = vmul.f32 %v1912, 0.01
        %v2087 = vmul.f32 %v2028, 0.01
        %v2088 = vmul.f32 %v1683, 0.01
        %v2089 = vmul.f32 %v1799, 0.01
        %v2090 = vmul.f32 %v1915, 0.01
        %v2091 = vmul.f32 %v2031, 0.01
        %v2092 = vmul.f32 %v1685, 0.01
        %v2093 = vmul.f32 %v1801, 0.01
        %v2094 = vmul.f32 %v1917, 0.01
        %v2095 = vmul.f32 %v2033, 0.01
        %v2096 = vmul.f32 %v1688, 0.01
        %v2097 = vmul.f32 %v1804, 0.01
        %v2098 = vmul.f32 %v1920, 0.01
        %v2099 = vmul.f32 %v2036, 0.01
        %v2100 = vmul.f32 %v1690, 0.01
        %v2101 = vmul.f32 %v1806, 0.01
        %v2102 = vmul.f32 %v1922, 0.01
        %v2103 = vmul.f32 %v2038, 0.01
        %v2104 = vsel %vm2040, %v1673, %v2072
        %v2105 = vsel %vm2041, %v1789, %v2073
        %v2106 = vsel %vm2042, %v1905, %v2074
        %v2107 = vsel %vm2043, %v2021, %v2075
        %v2108 = vsel %vm2044, %v1675, %v2076
        %v2109 = vsel %vm2045, %v1791, %v2077
        %v2110 = vsel %vm2046, %v1907, %v2078
        %v2111 = vsel %vm2047, %v2023, %v2079
        %v2112 = vsel %vm2048, %v1678, %v2080
        %v2113 = vsel %vm2049, %v1794, %v2081
        %v2114 = vsel %vm2050, %v1910, %v2082
        %v2115 = vsel %vm2051, %v2026, %v2083
        %v2116 = vsel %vm2052, %v1680, %v2084
        %v2117 = vsel %vm2053, %v1796, %v2085
        %v2118 = vsel %vm2054, %v1912, %v2086
        %v2119 = vsel %vm2055, %v2028, %v2087
        %v2120 = vsel %vm2056, %v1683, %v2088
        %v2121 = vsel %vm2057, %v1799, %v2089
        %v2122 = vsel %vm2058, %v1915, %v2090
        %v2123 = vsel %vm2059, %v2031, %v2091
        %v2124 = vsel %vm2060, %v1685, %v2092
        %v2125 = vsel %vm2061, %v1801, %v2093
        %v2126 = vsel %vm2062, %v1917, %v2094
        %v2127 = vsel %vm2063, %v2033, %v2095
        %v2128 = vsel %vm2064, %v1688, %v2096
        %v2129 = vsel %vm2065, %v1804, %v2097
        %v2130 = vsel %vm2066, %v1920, %v2098
        %v2131 = vsel %vm2067, %v2036, %v2099
        %v2132 = vsel %vm2068, %v1690, %v2100
        %v2133 = vsel %vm2069, %v1806, %v2101
        %v2134 = vsel %vm2070, %v1922, %v2102
        %v2135 = vsel %vm2071, %v2038, %v2103
        %v2136 = vld [vmem:[%s5] sm:$0xff]
        %v2137 = vld [vmem:[%s5 + $0x8] sm:$0xff]
        %v2138 = vld [vmem:[%s5 + $0x10] sm:$0xff]
        %v2139 = vld [vmem:[%s5 + $0x18] sm:$0xff]
        %v2140 = vld [vmem:[%s5 + $0x20] sm:$0xff]
        %v2141 = vld [vmem:[%s5 + $0x28] sm:$0xff]
        %v2142 = vld [vmem:[%s5 + $0x30] sm:$0xff]
        %v2143 = vld [vmem:[%s5 + $0x38] sm:$0xff]
        %v2144 = vld [vmem:[%s5 + $0x40] sm:$0xff]
        %v2145 = vld [vmem:[%s5 + $0x48] sm:$0xff]
        %v2146 = vld [vmem:[%s5 + $0x50] sm:$0xff]
        %v2147 = vld [vmem:[%s5 + $0x58] sm:$0xff]
        %v2148 = vld [vmem:[%s5 + $0x60] sm:$0xff]
        %v2149 = vld [vmem:[%s5 + $0x68] sm:$0xff]
        %v2150 = vld [vmem:[%s5 + $0x70] sm:$0xff]
        %v2151 = vld [vmem:[%s5 + $0x78] sm:$0xff]
        %v2152 = vld [vmem:[%s5 + $0x80] sm:$0xff]
        %v2153 = vld [vmem:[%s5 + $0x88] sm:$0xff]
        %v2154 = vld [vmem:[%s5 + $0x90] sm:$0xff]
        %v2155 = vld [vmem:[%s5 + $0x98] sm:$0xff]
        %v2156 = vld [vmem:[%s5 + $0xa0] sm:$0xff]
        %v2157 = vld [vmem:[%s5 + $0xa8] sm:$0xff]
        %v2158 = vld [vmem:[%s5 + $0xb0] sm:$0xff]
        %v2159 = vld [vmem:[%s5 + $0xb8] sm:$0xff]
        %v2160 = vld [vmem:[%s5 + $0xc0] sm:$0xff]
        %v2161 = vld [vmem:[%s5 + $0xc8] sm:$0xff]
        %v2162 = vld [vmem:[%s5 + $0xd0] sm:$0xff]
        %v2163 = vld [vmem:[%s5 + $0xd8] sm:$0xff]
        %v2164 = vld [vmem:[%s5 + $0xe0] sm:$0xff]
        %v2165 = vld [vmem:[%s5 + $0xe8] sm:$0xff]
        %v2166 = vld [vmem:[%s5 + $0xf0] sm:$0xff]
        %v2167 = vld [vmem:[%s5 + $0xf8] sm:$0xff]
        %v2168 = vld [vmem:[%s5 + $0x100] sm:$0xff]
        %v2169 = vld [vmem:[%s5 + $0x108] sm:$0xff]
        %v2170 = vld [vmem:[%s5 + $0x110] sm:$0xff]
        %v2171 = vld [vmem:[%s5 + $0x118] sm:$0xff]
        %v2172 = vld [vmem:[%s5 + $0x120] sm:$0xff]
        %v2173 = vld [vmem:[%s5 + $0x128] sm:$0xff]
        %v2174 = vld [vmem:[%s5 + $0x130] sm:$0xff]
        %v2175 = vld [vmem:[%s5 + $0x138] sm:$0xff]
        %v2176 = vld [vmem:[%s5 + $0x140] sm:$0xff]
        %v2177 = vld [vmem:[%s5 + $0x148] sm:$0xff]
        %v2178 = vld [vmem:[%s5 + $0x150] sm:$0xff]
        %v2179 = vld [vmem:[%s5 + $0x158] sm:$0xff]
        %v2180 = vld [vmem:[%s5 + $0x160] sm:$0xff]
        %v2181 = vld [vmem:[%s5 + $0x168] sm:$0xff]
        %v2182 = vld [vmem:[%s5 + $0x170] sm:$0xff]
        %v2183 = vld [vmem:[%s5 + $0x178] sm:$0xff]
        %v2184 = vld [vmem:[%s5 + $0x180] sm:$0xff]
        %v2185 = vld [vmem:[%s5 + $0x188] sm:$0xff]
        %v2186 = vld [vmem:[%s5 + $0x190] sm:$0xff]
        %v2187 = vld [vmem:[%s5 + $0x198] sm:$0xff]
        %v2188 = vld [vmem:[%s5 + $0x1a0] sm:$0xff]
        %v2189 = vld [vmem:[%s5 + $0x1a8] sm:$0xff]
        %v2190 = vld [vmem:[%s5 + $0x1b0] sm:$0xff]
        %v2191 = vld [vmem:[%s5 + $0x1b8] sm:$0xff]
        %v2192 = vld [vmem:[%s5 + $0x1c0] sm:$0xff]
        %v2193 = vld [vmem:[%s5 + $0x1c8] sm:$0xff]
        %v2194 = vld [vmem:[%s5 + $0x1d0] sm:$0xff]
        %v2195 = vld [vmem:[%s5 + $0x1d8] sm:$0xff]
        %v2196 = vld [vmem:[%s5 + $0x1e0] sm:$0xff]
        %v2197 = vld [vmem:[%s5 + $0x1e8] sm:$0xff]
        %v2198 = vld [vmem:[%s5 + $0x1f0] sm:$0xff]
        %v2199 = vld [vmem:[%s5 + $0x1f8] sm:$0xff]
        %v2200 = vld [vmem:[#allocation9] sm:$0x1]
        %v2202 = vperm.slane %v2200, 0
        %2204 = vmatpush.msra.mxu0 %v2151
        %2205 = vmatpush.msra.mxu0 %v2150
        %2206 = vmatpush.msra.mxu0 %v2149
        %2207 = vmatpush.msra.mxu0 %v2148
        %2208 = vmatpush.msra.mxu0 %v2147
        %2209 = vmatpush.msra.mxu0 %v2146
        %2210 = vmatpush.msra.mxu0 %v2145
        %2211 = vmatpush.msra.mxu0 %v2144
        %2212 = vmatpush.msra.mxu0 %v2143
        %2213 = vmatpush.msra.mxu0 %v2142
        %2214 = vmatpush.msra.mxu0 %v2141
        %2215 = vmatpush.msra.mxu0 %v2140
        %2216 = vmatpush.msra.mxu0 %v2139
        %2217 = vmatpush.msra.mxu0 %v2138
        %2218 = vmatpush.msra.mxu0 %v2137
        %2219 = vmatpush.msra.mxu0 %v2136
        %2220 = vmatmul.f32.gmra.mxu0 %v2104
        %v2221 = vpop.f32.mrf.mxu0
        %v2222 = vadd.f32 %v2202, %v2221
        %2223 = vmatmul.f32.gmra.mxu0 %v2108
        %v2224 = vpop.f32.mrf.mxu0
        %v2225 = vadd.f32 %v2202, %v2224
        %2226 = vmatmul.f32.gmra.mxu0 %v2112
        %v2227 = vpop.f32.mrf.mxu0
        %v2228 = vadd.f32 %v2202, %v2227
        %2229 = vmatmul.f32.gmra.mxu0 %v2116
        %v2230 = vpop.f32.mrf.mxu0
        %v2231 = vadd.f32 %v2202, %v2230
        %2232 = vmatmul.f32.gmra.mxu0 %v2120
        %v2233 = vpop.f32.mrf.mxu0
        %v2234 = vadd.f32 %v2202, %v2233
        %2235 = vmatmul.f32.gmra.mxu0 %v2124
        %v2236 = vpop.f32.mrf.mxu0
        %v2237 = vadd.f32 %v2202, %v2236
        %2238 = vmatmul.f32.gmra.mxu0 %v2128
        %v2239 = vpop.f32.mrf.mxu0
        %v2240 = vadd.f32 %v2202, %v2239
        %2241 = vmatmul.f32.gmra.mxu0 %v2132
        %v2242 = vpop.f32.mrf.mxu0
        %v2243 = vadd.f32 %v2202, %v2242
        %2244 = vdwg.mxu0
        %2245 = vmatpush.msra.mxu0 %v2167
        %2246 = vmatpush.msra.mxu0 %v2166
        %2247 = vmatpush.msra.mxu0 %v2165
        %2248 = vmatpush.msra.mxu0 %v2164
        %2249 = vmatpush.msra.mxu0 %v2163
        %2250 = vmatpush.msra.mxu0 %v2162
        %2251 = vmatpush.msra.mxu0 %v2161
        %2252 = vmatpush.msra.mxu0 %v2160
        %2253 = vmatpush.msra.mxu0 %v2159
        %2254 = vmatpush.msra.mxu0 %v2158
        %2255 = vmatpush.msra.mxu0 %v2157
        %2256 = vmatpush.msra.mxu0 %v2156
        %2257 = vmatpush.msra.mxu0 %v2155
        %2258 = vmatpush.msra.mxu0 %v2154
        %2259 = vmatpush.msra.mxu0 %v2153
        %2260 = vmatpush.msra.mxu0 %v2152
        %2261 = vmatmul.f32.gmra.mxu0 %v2105
        %v2262 = vpop.f32.mrf.mxu0
        %v2263 = vadd.f32 %v2222, %v2262
        %2264 = vmatmul.f32.gmra.mxu0 %v2109
        %v2265 = vpop.f32.mrf.mxu0
        %v2266 = vadd.f32 %v2225, %v2265
        %2267 = vmatmul.f32.gmra.mxu0 %v2113
        %v2268 = vpop.f32.mrf.mxu0
        %v2269 = vadd.f32 %v2228, %v2268
        %2270 = vmatmul.f32.gmra.mxu0 %v2117
        %v2271 = vpop.f32.mrf.mxu0
        %v2272 = vadd.f32 %v2231, %v2271
        %2273 = vmatmul.f32.gmra.mxu0 %v2121
        %v2274 = vpop.f32.mrf.mxu0
        %v2275 = vadd.f32 %v2234, %v2274
        %2276 = vmatmul.f32.gmra.mxu0 %v2125
        %v2277 = vpop.f32.mrf.mxu0
        %v2278 = vadd.f32 %v2237, %v2277
        %2279 = vmatmul.f32.gmra.mxu0 %v2129
        %v2280 = vpop.f32.mrf.mxu0
        %v2281 = vadd.f32 %v2240, %v2280
        %2282 = vmatmul.f32.gmra.mxu0 %v2133
        %v2283 = vpop.f32.mrf.mxu0
        %v2284 = vadd.f32 %v2243, %v2283
        %2285 = vdwg.mxu0
        %2286 = vmatpush.msra.mxu0 %v2183
        %2287 = vmatpush.msra.mxu0 %v2182
        %2288 = vmatpush.msra.mxu0 %v2181
        %2289 = vmatpush.msra.mxu0 %v2180
        %2290 = vmatpush.msra.mxu0 %v2179
        %2291 = vmatpush.msra.mxu0 %v2178
        %2292 = vmatpush.msra.mxu0 %v2177
        %2293 = vmatpush.msra.mxu0 %v2176
        %2294 = vmatpush.msra.mxu0 %v2175
        %2295 = vmatpush.msra.mxu0 %v2174
        %2296 = vmatpush.msra.mxu0 %v2173
        %2297 = vmatpush.msra.mxu0 %v2172
        %2298 = vmatpush.msra.mxu0 %v2171
        %2299 = vmatpush.msra.mxu0 %v2170
        %2300 = vmatpush.msra.mxu0 %v2169
        %2301 = vmatpush.msra.mxu0 %v2168
        %2302 = vmatmul.f32.gmra.mxu0 %v2106
        %v2303 = vpop.f32.mrf.mxu0
        %v2304 = vadd.f32 %v2263, %v2303
        %2305 = vmatmul.f32.gmra.mxu0 %v2110
        %v2306 = vpop.f32.mrf.mxu0
        %v2307 = vadd.f32 %v2266, %v2306
        %2308 = vmatmul.f32.gmra.mxu0 %v2114
        %v2309 = vpop.f32.mrf.mxu0
        %v2310 = vadd.f32 %v2269, %v2309
        %2311 = vmatmul.f32.gmra.mxu0 %v2118
        %v2312 = vpop.f32.mrf.mxu0
        %v2313 = vadd.f32 %v2272, %v2312
        %2314 = vmatmul.f32.gmra.mxu0 %v2122
        %v2315 = vpop.f32.mrf.mxu0
        %v2316 = vadd.f32 %v2275, %v2315
        %2317 = vmatmul.f32.gmra.mxu0 %v2126
        %v2318 = vpop.f32.mrf.mxu0
        %v2319 = vadd.f32 %v2278, %v2318
        %2320 = vmatmul.f32.gmra.mxu0 %v2130
        %v2321 = vpop.f32.mrf.mxu0
        %v2322 = vadd.f32 %v2281, %v2321
        %2323 = vmatmul.f32.gmra.mxu0 %v2134
        %v2324 = vpop.f32.mrf.mxu0
        %v2325 = vadd.f32 %v2284, %v2324
        %2326 = vdwg.mxu0
        %2327 = vmatpush.msra.mxu0 %v2199
        %2328 = vmatpush.msra.mxu0 %v2198
        %2329 = vmatpush.msra.mxu0 %v2197
        %2330 = vmatpush.msra.mxu0 %v2196
        %2331 = vmatpush.msra.mxu0 %v2195
        %2332 = vmatpush.msra.mxu0 %v2194
        %2333 = vmatpush.msra.mxu0 %v2193
        %2334 = vmatpush.msra.mxu0 %v2192
        %2335 = vmatpush.msra.mxu0 %v2191
        %2336 = vmatpush.msra.mxu0 %v2190
        %2337 = vmatpush.msra.mxu0 %v2189
        %2338 = vmatpush.msra.mxu0 %v2188
        %2339 = vmatpush.msra.mxu0 %v2187
        %2340 = vmatpush.msra.mxu0 %v2186
        %2341 = vmatpush.msra.mxu0 %v2185
        %2342 = vmatpush.msra.mxu0 %v2184
        %2343 = vmatmul.f32.gmra.mxu0 %v2107
        %v2344 = vpop.f32.mrf.mxu0
        %v2345 = vadd.f32 %v2304, %v2344
        %2346 = vmatmul.f32.gmra.mxu0 %v2111
        %v2347 = vpop.f32.mrf.mxu0
        %v2348 = vadd.f32 %v2307, %v2347
        %2349 = vmatmul.f32.gmra.mxu0 %v2115
        %v2350 = vpop.f32.mrf.mxu0
        %v2351 = vadd.f32 %v2310, %v2350
        %2352 = vmatmul.f32.gmra.mxu0 %v2119
        %v2353 = vpop.f32.mrf.mxu0
        %v2354 = vadd.f32 %v2313, %v2353
        %2355 = vmatmul.f32.gmra.mxu0 %v2123
        %v2356 = vpop.f32.mrf.mxu0
        %v2357 = vadd.f32 %v2316, %v2356
        %2358 = vmatmul.f32.gmra.mxu0 %v2127
        %v2359 = vpop.f32.mrf.mxu0
        %v2360 = vadd.f32 %v2319, %v2359
        %2361 = vmatmul.f32.gmra.mxu0 %v2131
        %v2362 = vpop.f32.mrf.mxu0
        %v2363 = vadd.f32 %v2322, %v2362
        %2364 = vmatmul.f32.gmra.mxu0 %v2135
        %v2365 = vpop.f32.mrf.mxu0
        %v2366 = vadd.f32 %v2325, %v2365
        %2367 = vdwg.mxu0
        %vm2368 = vcmp.gt.f32.partialorder %v2345, 0.0
        %vm2369 = vcmp.gt.f32.partialorder %v2348, 0.0
        %vm2370 = vcmp.gt.f32.partialorder %v2351, 0.0
        %vm2371 = vcmp.gt.f32.partialorder %v2354, 0.0
        %vm2372 = vcmp.gt.f32.partialorder %v2357, 0.0
        %vm2373 = vcmp.gt.f32.partialorder %v2360, 0.0
        %vm2374 = vcmp.gt.f32.partialorder %v2363, 0.0
        %vm2375 = vcmp.gt.f32.partialorder %v2366, 0.0
        %v2376 = vmul.f32 %v2345, 0.01
        %v2377 = vmul.f32 %v2348, 0.01
        %v2378 = vmul.f32 %v2351, 0.01
        %v2379 = vmul.f32 %v2354, 0.01
        %v2380 = vmul.f32 %v2357, 0.01
        %v2381 = vmul.f32 %v2360, 0.01
        %v2382 = vmul.f32 %v2363, 0.01
        %v2383 = vmul.f32 %v2366, 0.01
        %v2384 = vsel %vm2368, %v2345, %v2376
        %v2385 = vsel %vm2369, %v2348, %v2377
        %v2386 = vsel %vm2370, %v2351, %v2378
        %v2387 = vsel %vm2371, %v2354, %v2379
        %v2388 = vsel %vm2372, %v2357, %v2380
        %v2389 = vsel %vm2373, %v2360, %v2381
        %v2390 = vsel %vm2374, %v2363, %v2382
        %v2391 = vsel %vm2375, %v2366, %v2383
        %v2392 = vld [vmem:[%s7] sm:$0x77]
        %v2393 = vld [vmem:[%s7 + $0x8] sm:$0x77]
        %2395 = vset.pattern.permute.xlu0 0
        %2396 = vperm.xlu0 %2395, %v2384
        %v2397 = vpop.permute.xlu0 %2396
        %2400 = vset.pattern.permute.xlu0 0
        %2401 = vperm.xlu0 %2400, %v2385
        %v2402 = vpop.permute.xlu0 %2401
        %2405 = vset.pattern.permute.xlu0 0
        %2406 = vperm.xlu0 %2405, %v2386
        %v2407 = vpop.permute.xlu0 %2406
        %2410 = vset.pattern.permute.xlu0 0
        %2411 = vperm.xlu0 %2410, %v2387
        %v2412 = vpop.permute.xlu0 %2411
        %2415 = vset.pattern.permute.xlu0 0
        %2416 = vperm.xlu0 %2415, %v2388
        %v2417 = vpop.permute.xlu0 %2416
        %2420 = vset.pattern.permute.xlu0 0
        %2421 = vperm.xlu0 %2420, %v2389
        %v2422 = vpop.permute.xlu0 %2421
        %2425 = vset.pattern.permute.xlu0 0
        %2426 = vperm.xlu0 %2425, %v2390
        %v2427 = vpop.permute.xlu0 %2426
        %2430 = vset.pattern.permute.xlu0 0
        %2431 = vperm.xlu0 %2430, %v2391
        %v2432 = vpop.permute.xlu0 %2431
        %v2436 = vperm.slane %v2392, 0
        %v2437 = vperm.slane %v2392, 4
        %v2438 = vperm.slane %v2393, 0
        %v2439 = vperm.slane %v2393, 4
        %v2444 = vperm.slane %v2436, 0
        %v2445 = vperm.slane %v2437, 0
        %v2446 = vperm.slane %v2438, 0
        %v2447 = vperm.slane %v2439, 0
        %v2448 = vmul.f32 %v2397, %v2444
        %v2449 = vmul.f32 %v2397, %v2445
        %v2450 = vmul.f32 %v2397, %v2446
        %v2451 = vmul.f32 %v2397, %v2447
        %v2452 = vmul.f32 %v2402, %v2444
        %v2453 = vmul.f32 %v2402, %v2445
        %v2454 = vmul.f32 %v2402, %v2446
        %v2455 = vmul.f32 %v2402, %v2447
        %v2456 = vmul.f32 %v2407, %v2444
        %v2457 = vmul.f32 %v2407, %v2445
        %v2458 = vmul.f32 %v2407, %v2446
        %v2459 = vmul.f32 %v2407, %v2447
        %v2460 = vmul.f32 %v2412, %v2444
        %v2461 = vmul.f32 %v2412, %v2445
        %v2462 = vmul.f32 %v2412, %v2446
        %v2463 = vmul.f32 %v2412, %v2447
        %v2464 = vmul.f32 %v2417, %v2444
        %v2465 = vmul.f32 %v2417, %v2445
        %v2466 = vmul.f32 %v2417, %v2446
        %v2467 = vmul.f32 %v2417, %v2447
        %v2468 = vmul.f32 %v2422, %v2444
        %v2469 = vmul.f32 %v2422, %v2445
        %v2470 = vmul.f32 %v2422, %v2446
        %v2471 = vmul.f32 %v2422, %v2447
        %v2472 = vmul.f32 %v2427, %v2444
        %v2473 = vmul.f32 %v2427, %v2445
        %v2474 = vmul.f32 %v2427, %v2446
        %v2475 = vmul.f32 %v2427, %v2447
        %v2476 = vmul.f32 %v2432, %v2444
        %v2477 = vmul.f32 %v2432, %v2445
        %v2478 = vmul.f32 %v2432, %v2446
        %v2479 = vmul.f32 %v2432, %v2447
        %2480 = vset.pattern.permute.xlu0 1
        %2481 = vperm.xlu0 %2480, %v2384
        %v2482 = vpop.permute.xlu0 %2481
        %2484 = vset.pattern.permute.xlu0 1
        %2485 = vperm.xlu0 %2484, %v2385
        %v2486 = vpop.permute.xlu0 %2485
        %2488 = vset.pattern.permute.xlu0 1
        %2489 = vperm.xlu0 %2488, %v2386
        %v2490 = vpop.permute.xlu0 %2489
        %2492 = vset.pattern.permute.xlu0 1
        %2493 = vperm.xlu0 %2492, %v2387
        %v2494 = vpop.permute.xlu0 %2493
        %2496 = vset.pattern.permute.xlu0 1
        %2497 = vperm.xlu0 %2496, %v2388
        %v2498 = vpop.permute.xlu0 %2497
        %2500 = vset.pattern.permute.xlu0 1
        %2501 = vperm.xlu0 %2500, %v2389
        %v2502 = vpop.permute.xlu0 %2501
        %2504 = vset.pattern.permute.xlu0 1
        %2505 = vperm.xlu0 %2504, %v2390
        %v2506 = vpop.permute.xlu0 %2505
        %2508 = vset.pattern.permute.xlu0 1
        %2509 = vperm.xlu0 %2508, %v2391
        %v2510 = vpop.permute.xlu0 %2509
        %v2512 = vperm.slane %v2392, 1
        %v2513 = vperm.slane %v2392, 5
        %v2514 = vperm.slane %v2393, 1
        %v2515 = vperm.slane %v2393, 5
        %v2520 = vperm.slane %v2512, 1
        %v2521 = vperm.slane %v2513, 1
        %v2522 = vperm.slane %v2514, 1
        %v2523 = vperm.slane %v2515, 1
        %v2524 = vmul.f32 %v2482, %v2520
        %v2525 = vmul.f32 %v2482, %v2521
        %v2526 = vmul.f32 %v2482, %v2522
        %v2527 = vmul.f32 %v2482, %v2523
        %v2528 = vmul.f32 %v2486, %v2520
        %v2529 = vmul.f32 %v2486, %v2521
        %v2530 = vmul.f32 %v2486, %v2522
        %v2531 = vmul.f32 %v2486, %v2523
        %v2532 = vmul.f32 %v2490, %v2520
        %v2533 = vmul.f32 %v2490, %v2521
        %v2534 = vmul.f32 %v2490, %v2522
        %v2535 = vmul.f32 %v2490, %v2523
        %v2536 = vmul.f32 %v2494, %v2520
        %v2537 = vmul.f32 %v2494, %v2521
        %v2538 = vmul.f32 %v2494, %v2522
        %v2539 = vmul.f32 %v2494, %v2523
        %v2540 = vmul.f32 %v2498, %v2520
        %v2541 = vmul.f32 %v2498, %v2521
        %v2542 = vmul.f32 %v2498, %v2522
        %v2543 = vmul.f32 %v2498, %v2523
        %v2544 = vmul.f32 %v2502, %v2520
        %v2545 = vmul.f32 %v2502, %v2521
        %v2546 = vmul.f32 %v2502, %v2522
        %v2547 = vmul.f32 %v2502, %v2523
        %v2548 = vmul.f32 %v2506, %v2520
        %v2549 = vmul.f32 %v2506, %v2521
        %v2550 = vmul.f32 %v2506, %v2522
        %v2551 = vmul.f32 %v2506, %v2523
        %v2552 = vmul.f32 %v2510, %v2520
        %v2553 = vmul.f32 %v2510, %v2521
        %v2554 = vmul.f32 %v2510, %v2522
        %v2555 = vmul.f32 %v2510, %v2523
        %v2556 = vadd.f32 %v2448, %v2524
        %v2557 = vadd.f32 %v2449, %v2525
        %v2558 = vadd.f32 %v2450, %v2526
        %v2559 = vadd.f32 %v2451, %v2527
        %v2560 = vadd.f32 %v2452, %v2528
        %v2561 = vadd.f32 %v2453, %v2529
        %v2562 = vadd.f32 %v2454, %v2530
        %v2563 = vadd.f32 %v2455, %v2531
        %v2564 = vadd.f32 %v2456, %v2532
        %v2565 = vadd.f32 %v2457, %v2533
        %v2566 = vadd.f32 %v2458, %v2534
        %v2567 = vadd.f32 %v2459, %v2535
        %v2568 = vadd.f32 %v2460, %v2536
        %v2569 = vadd.f32 %v2461, %v2537
        %v2570 = vadd.f32 %v2462, %v2538
        %v2571 = vadd.f32 %v2463, %v2539
        %v2572 = vadd.f32 %v2464, %v2540
        %v2573 = vadd.f32 %v2465, %v2541
        %v2574 = vadd.f32 %v2466, %v2542
        %v2575 = vadd.f32 %v2467, %v2543
        %v2576 = vadd.f32 %v2468, %v2544
        %v2577 = vadd.f32 %v2469, %v2545
        %v2578 = vadd.f32 %v2470, %v2546
        %v2579 = vadd.f32 %v2471, %v2547
        %v2580 = vadd.f32 %v2472, %v2548
        %v2581 = vadd.f32 %v2473, %v2549
        %v2582 = vadd.f32 %v2474, %v2550
        %v2583 = vadd.f32 %v2475, %v2551
        %v2584 = vadd.f32 %v2476, %v2552
        %v2585 = vadd.f32 %v2477, %v2553
        %v2586 = vadd.f32 %v2478, %v2554
        %v2587 = vadd.f32 %v2479, %v2555
        %2588 = vset.pattern.permute.xlu0 2
        %2589 = vperm.xlu0 %2588, %v2384
        %v2590 = vpop.permute.xlu0 %2589
        %2592 = vset.pattern.permute.xlu0 2
        %2593 = vperm.xlu0 %2592, %v2385
        %v2594 = vpop.permute.xlu0 %2593
        %2596 = vset.pattern.permute.xlu0 2
        %2597 = vperm.xlu0 %2596, %v2386
        %v2598 = vpop.permute.xlu0 %2597
        %2600 = vset.pattern.permute.xlu0 2
        %2601 = vperm.xlu0 %2600, %v2387
        %v2602 = vpop.permute.xlu0 %2601
        %2604 = vset.pattern.permute.xlu0 2
        %2605 = vperm.xlu0 %2604, %v2388
        %v2606 = vpop.permute.xlu0 %2605
        %2608 = vset.pattern.permute.xlu0 2
        %2609 = vperm.xlu0 %2608, %v2389
        %v2610 = vpop.permute.xlu0 %2609
        %2612 = vset.pattern.permute.xlu0 2
        %2613 = vperm.xlu0 %2612, %v2390
        %v2614 = vpop.permute.xlu0 %2613
        %2616 = vset.pattern.permute.xlu0 2
        %2617 = vperm.xlu0 %2616, %v2391
        %v2618 = vpop.permute.xlu0 %2617
        %v2620 = vperm.slane %v2392, 2
        %v2621 = vperm.slane %v2392, 6
        %v2622 = vperm.slane %v2393, 2
        %v2623 = vperm.slane %v2393, 6
        %v2628 = vperm.slane %v2620, 2
        %v2629 = vperm.slane %v2621, 2
        %v2630 = vperm.slane %v2622, 2
        %v2631 = vperm.slane %v2623, 2
        %v2632 = vmul.f32 %v2590, %v2628
        %v2633 = vmul.f32 %v2590, %v2629
        %v2634 = vmul.f32 %v2590, %v2630
        %v2635 = vmul.f32 %v2590, %v2631
        %v2636 = vmul.f32 %v2594, %v2628
        %v2637 = vmul.f32 %v2594, %v2629
        %v2638 = vmul.f32 %v2594, %v2630
        %v2639 = vmul.f32 %v2594, %v2631
        %v2640 = vmul.f32 %v2598, %v2628
        %v2641 = vmul.f32 %v2598, %v2629
        %v2642 = vmul.f32 %v2598, %v2630
        %v2643 = vmul.f32 %v2598, %v2631
        %v2644 = vmul.f32 %v2602, %v2628
        %v2645 = vmul.f32 %v2602, %v2629
        %v2646 = vmul.f32 %v2602, %v2630
        %v2647 = vmul.f32 %v2602, %v2631
        %v2648 = vmul.f32 %v2606, %v2628
        %v2649 = vmul.f32 %v2606, %v2629
        %v2650 = vmul.f32 %v2606, %v2630
        %v2651 = vmul.f32 %v2606, %v2631
        %v2652 = vmul.f32 %v2610, %v2628
        %v2653 = vmul.f32 %v2610, %v2629
        %v2654 = vmul.f32 %v2610, %v2630
        %v2655 = vmul.f32 %v2610, %v2631
        %v2656 = vmul.f32 %v2614, %v2628
        %v2657 = vmul.f32 %v2614, %v2629
        %v2658 = vmul.f32 %v2614, %v2630
        %v2659 = vmul.f32 %v2614, %v2631
        %v2660 = vmul.f32 %v2618, %v2628
        %v2661 = vmul.f32 %v2618, %v2629
        %v2662 = vmul.f32 %v2618, %v2630
        %v2663 = vmul.f32 %v2618, %v2631
        %v2664 = vadd.f32 %v2556, %v2632
        %v2665 = vadd.f32 %v2557, %v2633
        %v2666 = vadd.f32 %v2558, %v2634
        %v2667 = vadd.f32 %v2559, %v2635
        %v2668 = vadd.f32 %v2560, %v2636
        %v2669 = vadd.f32 %v2561, %v2637
        %v2670 = vadd.f32 %v2562, %v2638
        %v2671 = vadd.f32 %v2563, %v2639
        %v2672 = vadd.f32 %v2564, %v2640
        %v2673 = vadd.f32 %v2565, %v2641
        %v2674 = vadd.f32 %v2566, %v2642
        %v2675 = vadd.f32 %v2567, %v2643
        %v2676 = vadd.f32 %v2568, %v2644
        %v2677 = vadd.f32 %v2569, %v2645
        %v2678 = vadd.f32 %v2570, %v2646
        %v2679 = vadd.f32 %v2571, %v2647
        %v2680 = vadd.f32 %v2572, %v2648
        %v2681 = vadd.f32 %v2573, %v2649
        %v2682 = vadd.f32 %v2574, %v2650
        %v2683 = vadd.f32 %v2575, %v2651
        %v2684 = vadd.f32 %v2576, %v2652
        %v2685 = vadd.f32 %v2577, %v2653
        %v2686 = vadd.f32 %v2578, %v2654
        %v2687 = vadd.f32 %v2579, %v2655
        %v2688 = vadd.f32 %v2580, %v2656
        %v2689 = vadd.f32 %v2581, %v2657
        %v2690 = vadd.f32 %v2582, %v2658
        %v2691 = vadd.f32 %v2583, %v2659
        %v2692 = vadd.f32 %v2584, %v2660
        %v2693 = vadd.f32 %v2585, %v2661
        %v2694 = vadd.f32 %v2586, %v2662
        %v2695 = vadd.f32 %v2587, %v2663
        %v2696 = vld [vmem:[%s504] sm:$0xf]
        %v2698 = vperm.slane %v2696, 0
        %v2699 = vperm.slane %v2696, 1
        %v2700 = vperm.slane %v2696, 2
        %v2701 = vperm.slane %v2696, 3
        %v2706 = vadd.f32 %v2664, %v2698
        %v2707 = vadd.f32 %v2665, %v2699
        %v2708 = vadd.f32 %v2666, %v2700
        %v2709 = vadd.f32 %v2667, %v2701
        %v2710 = vadd.f32 %v2668, %v2698
        %v2711 = vadd.f32 %v2669, %v2699
        %v2712 = vadd.f32 %v2670, %v2700
        %v2713 = vadd.f32 %v2671, %v2701
        %v2714 = vadd.f32 %v2672, %v2698
        %v2715 = vadd.f32 %v2673, %v2699
        %v2716 = vadd.f32 %v2674, %v2700
        %v2717 = vadd.f32 %v2675, %v2701
        %v2718 = vadd.f32 %v2676, %v2698
        %v2719 = vadd.f32 %v2677, %v2699
        %v2720 = vadd.f32 %v2678, %v2700
        %v2721 = vadd.f32 %v2679, %v2701
        %v2722 = vadd.f32 %v2680, %v2698
        %v2723 = vadd.f32 %v2681, %v2699
        %v2724 = vadd.f32 %v2682, %v2700
        %v2725 = vadd.f32 %v2683, %v2701
        %v2726 = vadd.f32 %v2684, %v2698
        %v2727 = vadd.f32 %v2685, %v2699
        %v2728 = vadd.f32 %v2686, %v2700
        %v2729 = vadd.f32 %v2687, %v2701
        %v2730 = vadd.f32 %v2688, %v2698
        %v2731 = vadd.f32 %v2689, %v2699
        %v2732 = vadd.f32 %v2690, %v2700
        %v2733 = vadd.f32 %v2691, %v2701
        %v2734 = vadd.f32 %v2692, %v2698
        %v2735 = vadd.f32 %v2693, %v2699
        %v2736 = vadd.f32 %v2694, %v2700
        %v2737 = vadd.f32 %v2695, %v2701
        %vm2738 = vcmp.gt.f32.partialorder %v2706, 0.0
        %vm2739 = vcmp.gt.f32.partialorder %v2707, 0.0
        %vm2740 = vcmp.gt.f32.partialorder %v2708, 0.0
        %vm2741 = vcmp.gt.f32.partialorder %v2709, 0.0
        %vm2742 = vcmp.gt.f32.partialorder %v2710, 0.0
        %vm2743 = vcmp.gt.f32.partialorder %v2711, 0.0
        %vm2744 = vcmp.gt.f32.partialorder %v2712, 0.0
        %vm2745 = vcmp.gt.f32.partialorder %v2713, 0.0
        %vm2746 = vcmp.gt.f32.partialorder %v2714, 0.0
        %vm2747 = vcmp.gt.f32.partialorder %v2715, 0.0
        %vm2748 = vcmp.gt.f32.partialorder %v2716, 0.0
        %vm2749 = vcmp.gt.f32.partialorder %v2717, 0.0
        %vm2750 = vcmp.gt.f32.partialorder %v2718, 0.0
        %vm2751 = vcmp.gt.f32.partialorder %v2719, 0.0
        %vm2752 = vcmp.gt.f32.partialorder %v2720, 0.0
        %vm2753 = vcmp.gt.f32.partialorder %v2721, 0.0
        %vm2754 = vcmp.gt.f32.partialorder %v2722, 0.0
        %vm2755 = vcmp.gt.f32.partialorder %v2723, 0.0
        %vm2756 = vcmp.gt.f32.partialorder %v2724, 0.0
        %vm2757 = vcmp.gt.f32.partialorder %v2725, 0.0
        %vm2758 = vcmp.gt.f32.partialorder %v2726, 0.0
        %vm2759 = vcmp.gt.f32.partialorder %v2727, 0.0
        %vm2760 = vcmp.gt.f32.partialorder %v2728, 0.0
        %vm2761 = vcmp.gt.f32.partialorder %v2729, 0.0
        %vm2762 = vcmp.gt.f32.partialorder %v2730, 0.0
        %vm2763 = vcmp.gt.f32.partialorder %v2731, 0.0
        %vm2764 = vcmp.gt.f32.partialorder %v2732, 0.0
        %vm2765 = vcmp.gt.f32.partialorder %v2733, 0.0
        %vm2766 = vcmp.gt.f32.partialorder %v2734, 0.0
        %vm2767 = vcmp.gt.f32.partialorder %v2735, 0.0
        %vm2768 = vcmp.gt.f32.partialorder %v2736, 0.0
        %vm2769 = vcmp.gt.f32.partialorder %v2737, 0.0
        %v2770 = vmul.f32 %v2706, 0.01
        %v2771 = vmul.f32 %v2707, 0.01
        %v2772 = vmul.f32 %v2708, 0.01
        %v2773 = vmul.f32 %v2709, 0.01
        %v2774 = vmul.f32 %v2710, 0.01
        %v2775 = vmul.f32 %v2711, 0.01
        %v2776 = vmul.f32 %v2712, 0.01
        %v2777 = vmul.f32 %v2713, 0.01
        %v2778 = vmul.f32 %v2714, 0.01
        %v2779 = vmul.f32 %v2715, 0.01
        %v2780 = vmul.f32 %v2716, 0.01
        %v2781 = vmul.f32 %v2717, 0.01
        %v2782 = vmul.f32 %v2718, 0.01
        %v2783 = vmul.f32 %v2719, 0.01
        %v2784 = vmul.f32 %v2720, 0.01
        %v2785 = vmul.f32 %v2721, 0.01
        %v2786 = vmul.f32 %v2722, 0.01
        %v2787 = vmul.f32 %v2723, 0.01
        %v2788 = vmul.f32 %v2724, 0.01
        %v2789 = vmul.f32 %v2725, 0.01
        %v2790 = vmul.f32 %v2726, 0.01
        %v2791 = vmul.f32 %v2727, 0.01
        %v2792 = vmul.f32 %v2728, 0.01
        %v2793 = vmul.f32 %v2729, 0.01
        %v2794 = vmul.f32 %v2730, 0.01
        %v2795 = vmul.f32 %v2731, 0.01
        %v2796 = vmul.f32 %v2732, 0.01
        %v2797 = vmul.f32 %v2733, 0.01
        %v2798 = vmul.f32 %v2734, 0.01
        %v2799 = vmul.f32 %v2735, 0.01
        %v2800 = vmul.f32 %v2736, 0.01
        %v2801 = vmul.f32 %v2737, 0.01
        %v2802 = vsel %vm2738, %v2706, %v2770
        %v2803 = vsel %vm2739, %v2707, %v2771
        %v2804 = vsel %vm2740, %v2708, %v2772
        %v2805 = vsel %vm2741, %v2709, %v2773
        %v2806 = vsel %vm2742, %v2710, %v2774
        %v2807 = vsel %vm2743, %v2711, %v2775
        %v2808 = vsel %vm2744, %v2712, %v2776
        %v2809 = vsel %vm2745, %v2713, %v2777
        %v2810 = vsel %vm2746, %v2714, %v2778
        %v2811 = vsel %vm2747, %v2715, %v2779
        %v2812 = vsel %vm2748, %v2716, %v2780
        %v2813 = vsel %vm2749, %v2717, %v2781
        %v2814 = vsel %vm2750, %v2718, %v2782
        %v2815 = vsel %vm2751, %v2719, %v2783
        %v2816 = vsel %vm2752, %v2720, %v2784
        %v2817 = vsel %vm2753, %v2721, %v2785
        %v2818 = vsel %vm2754, %v2722, %v2786
        %v2819 = vsel %vm2755, %v2723, %v2787
        %v2820 = vsel %vm2756, %v2724, %v2788
        %v2821 = vsel %vm2757, %v2725, %v2789
        %v2822 = vsel %vm2758, %v2726, %v2790
        %v2823 = vsel %vm2759, %v2727, %v2791
        %v2824 = vsel %vm2760, %v2728, %v2792
        %v2825 = vsel %vm2761, %v2729, %v2793
        %v2826 = vsel %vm2762, %v2730, %v2794
        %v2827 = vsel %vm2763, %v2731, %v2795
        %v2828 = vsel %vm2764, %v2732, %v2796
        %v2829 = vsel %vm2765, %v2733, %v2797
        %v2830 = vsel %vm2766, %v2734, %v2798
        %v2831 = vsel %vm2767, %v2735, %v2799
        %v2832 = vsel %vm2768, %v2736, %v2800
        %v2833 = vsel %vm2769, %v2737, %v2801
        %v2834 = vpack.c.bf16 %v2806, %v2802
        %v2835 = vpack.c.bf16 %v2807, %v2803
        %v2836 = vpack.c.bf16 %v2808, %v2804
        %v2837 = vpack.c.bf16 %v2809, %v2805
        %v2838 = vpack.c.bf16 %v2814, %v2810
        %v2839 = vpack.c.bf16 %v2815, %v2811
        %v2840 = vpack.c.bf16 %v2816, %v2812
        %v2841 = vpack.c.bf16 %v2817, %v2813
        %v2842 = vpack.c.bf16 %v2822, %v2818
        %v2843 = vpack.c.bf16 %v2823, %v2819
        %v2844 = vpack.c.bf16 %v2824, %v2820
        %v2845 = vpack.c.bf16 %v2825, %v2821
        %v2846 = vpack.c.bf16 %v2830, %v2826
        %v2847 = vpack.c.bf16 %v2831, %v2827
        %v2848 = vpack.c.bf16 %v2832, %v2828
        %v2849 = vpack.c.bf16 %v2833, %v2829
        %v2850 = vld [vmem:[#allocation10] sm:$0xff]
        %v2851 = vld [vmem:[#allocation10 + $0x8] sm:$0xff]
        %v2852 = vld [vmem:[#allocation10 + $0x10] sm:$0xff]
        %v2853 = vld [vmem:[#allocation10 + $0x18] sm:$0xff]
        %v2854 = vld [vmem:[#allocation10 + $0x20] sm:$0xff]
        %v2855 = vld [vmem:[#allocation10 + $0x28] sm:$0xff]
        %v2856 = vld [vmem:[#allocation10 + $0x30] sm:$0xff]
        %v2857 = vld [vmem:[#allocation10 + $0x38] sm:$0xff]
        %v2858 = vld [vmem:[#allocation10 + $0x40] sm:$0xff]
        %v2859 = vld [vmem:[#allocation10 + $0x48] sm:$0xff]
        %v2860 = vld [vmem:[#allocation10 + $0x50] sm:$0xff]
        %v2861 = vld [vmem:[#allocation10 + $0x58] sm:$0xff]
        %v2862 = vld [vmem:[#allocation10 + $0x60] sm:$0xff]
        %v2863 = vld [vmem:[#allocation10 + $0x68] sm:$0xff]
        %v2864 = vld [vmem:[#allocation10 + $0x70] sm:$0xff]
        %v2865 = vld [vmem:[#allocation10 + $0x78] sm:$0xff]
        %v2866 = vld [vmem:[#allocation10 + $0x80] sm:$0xff]
        %v2867 = vld [vmem:[#allocation10 + $0x88] sm:$0xff]
        %v2868 = vld [vmem:[#allocation10 + $0x90] sm:$0xff]
        %v2869 = vld [vmem:[#allocation10 + $0x98] sm:$0xff]
        %v2870 = vld [vmem:[#allocation10 + $0xa0] sm:$0xff]
        %v2871 = vld [vmem:[#allocation10 + $0xa8] sm:$0xff]
        %v2872 = vld [vmem:[#allocation10 + $0xb0] sm:$0xff]
        %v2873 = vld [vmem:[#allocation10 + $0xb8] sm:$0xff]
        %v2874 = vld [vmem:[#allocation10 + $0xc0] sm:$0xff]
        %v2875 = vld [vmem:[#allocation10 + $0xc8] sm:$0xff]
        %v2876 = vld [vmem:[#allocation10 + $0xd0] sm:$0xff]
        %v2877 = vld [vmem:[#allocation10 + $0xd8] sm:$0xff]
        %v2878 = vld [vmem:[#allocation10 + $0xe0] sm:$0xff]
        %v2879 = vld [vmem:[#allocation10 + $0xe8] sm:$0xff]
        %v2880 = vld [vmem:[#allocation10 + $0xf0] sm:$0xff]
        %v2881 = vld [vmem:[#allocation10 + $0xf8] sm:$0xff]
        %v2882 = vld [vmem:[#allocation10 + $0x100] sm:$0xff]
        %v2883 = vld [vmem:[#allocation10 + $0x108] sm:$0xff]
        %v2884 = vld [vmem:[#allocation10 + $0x110] sm:$0xff]
        %v2885 = vld [vmem:[#allocation10 + $0x118] sm:$0xff]
        %v2886 = vld [vmem:[#allocation10 + $0x120] sm:$0xff]
        %v2887 = vld [vmem:[#allocation10 + $0x128] sm:$0xff]
        %v2888 = vld [vmem:[#allocation10 + $0x130] sm:$0xff]
        %v2889 = vld [vmem:[#allocation10 + $0x138] sm:$0xff]
        %v2890 = vld [vmem:[#allocation10 + $0x140] sm:$0xff]
        %v2891 = vld [vmem:[#allocation10 + $0x148] sm:$0xff]
        %v2892 = vld [vmem:[#allocation10 + $0x150] sm:$0xff]
        %v2893 = vld [vmem:[#allocation10 + $0x158] sm:$0xff]
        %v2894 = vld [vmem:[#allocation10 + $0x160] sm:$0xff]
        %v2895 = vld [vmem:[#allocation10 + $0x168] sm:$0xff]
        %v2896 = vld [vmem:[#allocation10 + $0x170] sm:$0xff]
        %v2897 = vld [vmem:[#allocation10 + $0x178] sm:$0xff]
        %v2898 = vld [vmem:[#allocation10 + $0x180] sm:$0xff]
        %v2899 = vld [vmem:[#allocation10 + $0x188] sm:$0xff]
        %v2900 = vld [vmem:[#allocation10 + $0x190] sm:$0xff]
        %v2901 = vld [vmem:[#allocation10 + $0x198] sm:$0xff]
        %v2902 = vld [vmem:[#allocation10 + $0x1a0] sm:$0xff]
        %v2903 = vld [vmem:[#allocation10 + $0x1a8] sm:$0xff]
        %v2904 = vld [vmem:[#allocation10 + $0x1b0] sm:$0xff]
        %v2905 = vld [vmem:[#allocation10 + $0x1b8] sm:$0xff]
        %v2906 = vld [vmem:[#allocation10 + $0x1c0] sm:$0xff]
        %v2907 = vld [vmem:[#allocation10 + $0x1c8] sm:$0xff]
        %v2908 = vld [vmem:[#allocation10 + $0x1d0] sm:$0xff]
        %v2909 = vld [vmem:[#allocation10 + $0x1d8] sm:$0xff]
        %v2910 = vld [vmem:[#allocation10 + $0x1e0] sm:$0xff]
        %v2911 = vld [vmem:[#allocation10 + $0x1e8] sm:$0xff]
        %v2912 = vld [vmem:[#allocation10 + $0x1f0] sm:$0xff]
        %v2913 = vld [vmem:[#allocation10 + $0x1f8] sm:$0xff]
        %v2914 = vld [vmem:[#allocation10 + $0x200] sm:$0xff]
        %v2915 = vld [vmem:[#allocation10 + $0x208] sm:$0xff]
        %v2916 = vld [vmem:[#allocation10 + $0x210] sm:$0xff]
        %v2917 = vld [vmem:[#allocation10 + $0x218] sm:$0xff]
        %v2918 = vld [vmem:[#allocation10 + $0x220] sm:$0xff]
        %v2919 = vld [vmem:[#allocation10 + $0x228] sm:$0xff]
        %v2920 = vld [vmem:[#allocation10 + $0x230] sm:$0xff]
        %v2921 = vld [vmem:[#allocation10 + $0x238] sm:$0xff]
        %v2922 = vld [vmem:[#allocation10 + $0x240] sm:$0xff]
        %v2923 = vld [vmem:[#allocation10 + $0x248] sm:$0xff]
        %v2924 = vld [vmem:[#allocation10 + $0x250] sm:$0xff]
        %v2925 = vld [vmem:[#allocation10 + $0x258] sm:$0xff]
        %v2926 = vld [vmem:[#allocation10 + $0x260] sm:$0xff]
        %v2927 = vld [vmem:[#allocation10 + $0x268] sm:$0xff]
        %v2928 = vld [vmem:[#allocation10 + $0x270] sm:$0xff]
        %v2929 = vld [vmem:[#allocation10 + $0x278] sm:$0xff]
        %v2930 = vld [vmem:[#allocation10 + $0x280] sm:$0xff]
        %v2931 = vld [vmem:[#allocation10 + $0x288] sm:$0xff]
        %v2932 = vld [vmem:[#allocation10 + $0x290] sm:$0xff]
        %v2933 = vld [vmem:[#allocation10 + $0x298] sm:$0xff]
        %v2934 = vld [vmem:[#allocation10 + $0x2a0] sm:$0xff]
        %v2935 = vld [vmem:[#allocation10 + $0x2a8] sm:$0xff]
        %v2936 = vld [vmem:[#allocation10 + $0x2b0] sm:$0xff]
        %v2937 = vld [vmem:[#allocation10 + $0x2b8] sm:$0xff]
        %v2938 = vld [vmem:[#allocation10 + $0x2c0] sm:$0xff]
        %v2939 = vld [vmem:[#allocation10 + $0x2c8] sm:$0xff]
        %v2940 = vld [vmem:[#allocation10 + $0x2d0] sm:$0xff]
        %v2941 = vld [vmem:[#allocation10 + $0x2d8] sm:$0xff]
        %v2942 = vld [vmem:[#allocation10 + $0x2e0] sm:$0xff]
        %v2943 = vld [vmem:[#allocation10 + $0x2e8] sm:$0xff]
        %v2944 = vld [vmem:[#allocation10 + $0x2f0] sm:$0xff]
        %v2945 = vld [vmem:[#allocation10 + $0x2f8] sm:$0xff]
        %v2946 = vld [vmem:[#allocation10 + $0x300] sm:$0xff]
        %v2947 = vld [vmem:[#allocation10 + $0x308] sm:$0xff]
        %v2948 = vld [vmem:[#allocation10 + $0x310] sm:$0xff]
        %v2949 = vld [vmem:[#allocation10 + $0x318] sm:$0xff]
        %v2950 = vld [vmem:[#allocation10 + $0x320] sm:$0xff]
        %v2951 = vld [vmem:[#allocation10 + $0x328] sm:$0xff]
        %v2952 = vld [vmem:[#allocation10 + $0x330] sm:$0xff]
        %v2953 = vld [vmem:[#allocation10 + $0x338] sm:$0xff]
        %v2954 = vld [vmem:[#allocation10 + $0x340] sm:$0xff]
        %v2955 = vld [vmem:[#allocation10 + $0x348] sm:$0xff]
        %v2956 = vld [vmem:[#allocation10 + $0x350] sm:$0xff]
        %v2957 = vld [vmem:[#allocation10 + $0x358] sm:$0xff]
        %v2958 = vld [vmem:[#allocation10 + $0x360] sm:$0xff]
        %v2959 = vld [vmem:[#allocation10 + $0x368] sm:$0xff]
        %v2960 = vld [vmem:[#allocation10 + $0x370] sm:$0xff]
        %v2961 = vld [vmem:[#allocation10 + $0x378] sm:$0xff]
        %v2962 = vld [vmem:[#allocation10 + $0x380] sm:$0xff]
        %v2963 = vld [vmem:[#allocation10 + $0x388] sm:$0xff]
        %v2964 = vld [vmem:[#allocation10 + $0x390] sm:$0xff]
        %v2965 = vld [vmem:[#allocation10 + $0x398] sm:$0xff]
        %v2966 = vld [vmem:[#allocation10 + $0x3a0] sm:$0xff]
        %v2967 = vld [vmem:[#allocation10 + $0x3a8] sm:$0xff]
        %v2968 = vld [vmem:[#allocation10 + $0x3b0] sm:$0xff]
        %v2969 = vld [vmem:[#allocation10 + $0x3b8] sm:$0xff]
        %v2970 = vld [vmem:[#allocation10 + $0x3c0] sm:$0xff]
        %v2971 = vld [vmem:[#allocation10 + $0x3c8] sm:$0xff]
        %v2972 = vld [vmem:[#allocation10 + $0x3d0] sm:$0xff]
        %v2973 = vld [vmem:[#allocation10 + $0x3d8] sm:$0xff]
        %v2974 = vld [vmem:[#allocation10 + $0x3e0] sm:$0xff]
        %v2975 = vld [vmem:[#allocation10 + $0x3e8] sm:$0xff]
        %v2976 = vld [vmem:[#allocation10 + $0x3f0] sm:$0xff]
        %v2977 = vld [vmem:[#allocation10 + $0x3f8] sm:$0xff]
        %v2978 = vld [vmem:[#allocation12] sm:$0xf]
        %v2980 = vperm.slane %v2978, 0
        %v2981 = vperm.slane %v2978, 1
        %v2982 = vperm.slane %v2978, 2
        %v2983 = vperm.slane %v2978, 3
        %v3116 = vunpack.c.l.b16 %v2850
        %v3117 = vunpack.c.h.b16 %v2850
        %v3118 = vunpack.c.l.b16 %v2851
        %v3119 = vunpack.c.h.b16 %v2851
        %v3120 = vunpack.c.l.b16 %v2852
        %v3121 = vunpack.c.h.b16 %v2852
        %v3122 = vunpack.c.l.b16 %v2853
        %v3123 = vunpack.c.h.b16 %v2853
        %v3124 = vunpack.c.l.b16 %v2854
        %v3125 = vunpack.c.h.b16 %v2854
        %v3126 = vunpack.c.l.b16 %v2855
        %v3127 = vunpack.c.h.b16 %v2855
        %v3128 = vunpack.c.l.b16 %v2856
        %v3129 = vunpack.c.h.b16 %v2856
        %v3130 = vunpack.c.l.b16 %v2857
        %v3131 = vunpack.c.h.b16 %v2857
        %v3132 = vunpack.c.l.b16 %v2858
        %v3133 = vunpack.c.h.b16 %v2858
        %v3134 = vunpack.c.l.b16 %v2859
        %v3135 = vunpack.c.h.b16 %v2859
        %v3136 = vunpack.c.l.b16 %v2860
        %v3137 = vunpack.c.h.b16 %v2860
        %v3138 = vunpack.c.l.b16 %v2861
        %v3139 = vunpack.c.h.b16 %v2861
        %v3140 = vunpack.c.l.b16 %v2862
        %v3141 = vunpack.c.h.b16 %v2862
        %v3142 = vunpack.c.l.b16 %v2863
        %v3143 = vunpack.c.h.b16 %v2863
        %v3144 = vunpack.c.l.b16 %v2864
        %v3145 = vunpack.c.h.b16 %v2864
        %v3146 = vunpack.c.l.b16 %v2865
        %v3147 = vunpack.c.h.b16 %v2865
        %v3148 = vunpack.c.l.b16 %v2866
        %v3149 = vunpack.c.h.b16 %v2866
        %v3150 = vunpack.c.l.b16 %v2867
        %v3151 = vunpack.c.h.b16 %v2867
        %v3152 = vunpack.c.l.b16 %v2868
        %v3153 = vunpack.c.h.b16 %v2868
        %v3154 = vunpack.c.l.b16 %v2869
        %v3155 = vunpack.c.h.b16 %v2869
        %v3156 = vunpack.c.l.b16 %v2870
        %v3157 = vunpack.c.h.b16 %v2870
        %v3158 = vunpack.c.l.b16 %v2871
        %v3159 = vunpack.c.h.b16 %v2871
        %v3160 = vunpack.c.l.b16 %v2872
        %v3161 = vunpack.c.h.b16 %v2872
        %v3162 = vunpack.c.l.b16 %v2873
        %v3163 = vunpack.c.h.b16 %v2873
        %v3164 = vunpack.c.l.b16 %v2874
        %v3165 = vunpack.c.h.b16 %v2874
        %v3166 = vunpack.c.l.b16 %v2875
        %v3167 = vunpack.c.h.b16 %v2875
        %v3168 = vunpack.c.l.b16 %v2876
        %v3169 = vunpack.c.h.b16 %v2876
        %v3170 = vunpack.c.l.b16 %v2877
        %v3171 = vunpack.c.h.b16 %v2877
        %v3172 = vunpack.c.l.b16 %v2878
        %v3173 = vunpack.c.h.b16 %v2878
        %v3174 = vunpack.c.l.b16 %v2879
        %v3175 = vunpack.c.h.b16 %v2879
        %v3176 = vunpack.c.l.b16 %v2880
        %v3177 = vunpack.c.h.b16 %v2880
        %v3178 = vunpack.c.l.b16 %v2881
        %v3179 = vunpack.c.h.b16 %v2881
        %v3180 = vunpack.c.l.b16 %v2882
        %v3181 = vunpack.c.h.b16 %v2882
        %v3182 = vunpack.c.l.b16 %v2883
        %v3183 = vunpack.c.h.b16 %v2883
        %v3184 = vunpack.c.l.b16 %v2884
        %v3185 = vunpack.c.h.b16 %v2884
        %v3186 = vunpack.c.l.b16 %v2885
        %v3187 = vunpack.c.h.b16 %v2885
        %v3188 = vunpack.c.l.b16 %v2886
        %v3189 = vunpack.c.h.b16 %v2886
        %v3190 = vunpack.c.l.b16 %v2887
        %v3191 = vunpack.c.h.b16 %v2887
        %v3192 = vunpack.c.l.b16 %v2888
        %v3193 = vunpack.c.h.b16 %v2888
        %v3194 = vunpack.c.l.b16 %v2889
        %v3195 = vunpack.c.h.b16 %v2889
        %v3196 = vunpack.c.l.b16 %v2890
        %v3197 = vunpack.c.h.b16 %v2890
        %v3198 = vunpack.c.l.b16 %v2891
        %v3199 = vunpack.c.h.b16 %v2891
        %v3200 = vunpack.c.l.b16 %v2892
        %v3201 = vunpack.c.h.b16 %v2892
        %v3202 = vunpack.c.l.b16 %v2893
        %v3203 = vunpack.c.h.b16 %v2893
        %v3204 = vunpack.c.l.b16 %v2894
        %v3205 = vunpack.c.h.b16 %v2894
        %v3206 = vunpack.c.l.b16 %v2895
        %v3207 = vunpack.c.h.b16 %v2895
        %v3208 = vunpack.c.l.b16 %v2896
        %v3209 = vunpack.c.h.b16 %v2896
        %v3210 = vunpack.c.l.b16 %v2897
        %v3211 = vunpack.c.h.b16 %v2897
        %v3212 = vunpack.c.l.b16 %v2898
        %v3213 = vunpack.c.h.b16 %v2898
        %v3214 = vunpack.c.l.b16 %v2899
        %v3215 = vunpack.c.h.b16 %v2899
        %v3216 = vunpack.c.l.b16 %v2900
        %v3217 = vunpack.c.h.b16 %v2900
        %v3218 = vunpack.c.l.b16 %v2901
        %v3219 = vunpack.c.h.b16 %v2901
        %v3220 = vunpack.c.l.b16 %v2902
        %v3221 = vunpack.c.h.b16 %v2902
        %v3222 = vunpack.c.l.b16 %v2903
        %v3223 = vunpack.c.h.b16 %v2903
        %v3224 = vunpack.c.l.b16 %v2904
        %v3225 = vunpack.c.h.b16 %v2904
        %v3226 = vunpack.c.l.b16 %v2905
        %v3227 = vunpack.c.h.b16 %v2905
        %v3228 = vunpack.c.l.b16 %v2906
        %v3229 = vunpack.c.h.b16 %v2906
        %v3230 = vunpack.c.l.b16 %v2907
        %v3231 = vunpack.c.h.b16 %v2907
        %v3232 = vunpack.c.l.b16 %v2908
        %v3233 = vunpack.c.h.b16 %v2908
        %v3234 = vunpack.c.l.b16 %v2909
        %v3235 = vunpack.c.h.b16 %v2909
        %v3236 = vunpack.c.l.b16 %v2910
        %v3237 = vunpack.c.h.b16 %v2910
        %v3238 = vunpack.c.l.b16 %v2911
        %v3239 = vunpack.c.h.b16 %v2911
        %v3240 = vunpack.c.l.b16 %v2912
        %v3241 = vunpack.c.h.b16 %v2912
        %v3242 = vunpack.c.l.b16 %v2913
        %v3243 = vunpack.c.h.b16 %v2913
        %v3244 = vunpack.c.l.b16 %v2914
        %v3245 = vunpack.c.h.b16 %v2914
        %v3246 = vunpack.c.l.b16 %v2915
        %v3247 = vunpack.c.h.b16 %v2915
        %v3248 = vunpack.c.l.b16 %v2916
        %v3249 = vunpack.c.h.b16 %v2916
        %v3250 = vunpack.c.l.b16 %v2917
        %v3251 = vunpack.c.h.b16 %v2917
        %v3252 = vunpack.c.l.b16 %v2918
        %v3253 = vunpack.c.h.b16 %v2918
        %v3254 = vunpack.c.l.b16 %v2919
        %v3255 = vunpack.c.h.b16 %v2919
        %v3256 = vunpack.c.l.b16 %v2920
        %v3257 = vunpack.c.h.b16 %v2920
        %v3258 = vunpack.c.l.b16 %v2921
        %v3259 = vunpack.c.h.b16 %v2921
        %v3260 = vunpack.c.l.b16 %v2922
        %v3261 = vunpack.c.h.b16 %v2922
        %v3262 = vunpack.c.l.b16 %v2923
        %v3263 = vunpack.c.h.b16 %v2923
        %v3264 = vunpack.c.l.b16 %v2924
        %v3265 = vunpack.c.h.b16 %v2924
        %v3266 = vunpack.c.l.b16 %v2925
        %v3267 = vunpack.c.h.b16 %v2925
        %v3268 = vunpack.c.l.b16 %v2926
        %v3269 = vunpack.c.h.b16 %v2926
        %v3270 = vunpack.c.l.b16 %v2927
        %v3271 = vunpack.c.h.b16 %v2927
        %v3272 = vunpack.c.l.b16 %v2928
        %v3273 = vunpack.c.h.b16 %v2928
        %v3274 = vunpack.c.l.b16 %v2929
        %v3275 = vunpack.c.h.b16 %v2929
        %v3276 = vunpack.c.l.b16 %v2930
        %v3277 = vunpack.c.h.b16 %v2930
        %v3278 = vunpack.c.l.b16 %v2931
        %v3279 = vunpack.c.h.b16 %v2931
        %v3280 = vunpack.c.l.b16 %v2932
        %v3281 = vunpack.c.h.b16 %v2932
        %v3282 = vunpack.c.l.b16 %v2933
        %v3283 = vunpack.c.h.b16 %v2933
        %v3284 = vunpack.c.l.b16 %v2934
        %v3285 = vunpack.c.h.b16 %v2934
        %v3286 = vunpack.c.l.b16 %v2935
        %v3287 = vunpack.c.h.b16 %v2935
        %v3288 = vunpack.c.l.b16 %v2936
        %v3289 = vunpack.c.h.b16 %v2936
        %v3290 = vunpack.c.l.b16 %v2937
        %v3291 = vunpack.c.h.b16 %v2937
        %v3292 = vunpack.c.l.b16 %v2938
        %v3293 = vunpack.c.h.b16 %v2938
        %v3294 = vunpack.c.l.b16 %v2939
        %v3295 = vunpack.c.h.b16 %v2939
        %v3296 = vunpack.c.l.b16 %v2940
        %v3297 = vunpack.c.h.b16 %v2940
        %v3298 = vunpack.c.l.b16 %v2941
        %v3299 = vunpack.c.h.b16 %v2941
        %v3300 = vunpack.c.l.b16 %v2942
        %v3301 = vunpack.c.h.b16 %v2942
        %v3302 = vunpack.c.l.b16 %v2943
        %v3303 = vunpack.c.h.b16 %v2943
        %v3304 = vunpack.c.l.b16 %v2944
        %v3305 = vunpack.c.h.b16 %v2944
        %v3306 = vunpack.c.l.b16 %v2945
        %v3307 = vunpack.c.h.b16 %v2945
        %v3308 = vunpack.c.l.b16 %v2946
        %v3309 = vunpack.c.h.b16 %v2946
        %v3310 = vunpack.c.l.b16 %v2947
        %v3311 = vunpack.c.h.b16 %v2947
        %v3312 = vunpack.c.l.b16 %v2948
        %v3313 = vunpack.c.h.b16 %v2948
        %v3314 = vunpack.c.l.b16 %v2949
        %v3315 = vunpack.c.h.b16 %v2949
        %v3316 = vunpack.c.l.b16 %v2950
        %v3317 = vunpack.c.h.b16 %v2950
        %v3318 = vunpack.c.l.b16 %v2951
        %v3319 = vunpack.c.h.b16 %v2951
        %v3320 = vunpack.c.l.b16 %v2952
        %v3321 = vunpack.c.h.b16 %v2952
        %v3322 = vunpack.c.l.b16 %v2953
        %v3323 = vunpack.c.h.b16 %v2953
        %v3324 = vunpack.c.l.b16 %v2954
        %v3325 = vunpack.c.h.b16 %v2954
        %v3326 = vunpack.c.l.b16 %v2955
        %v3327 = vunpack.c.h.b16 %v2955
        %v3328 = vunpack.c.l.b16 %v2956
        %v3329 = vunpack.c.h.b16 %v2956
        %v3330 = vunpack.c.l.b16 %v2957
        %v3331 = vunpack.c.h.b16 %v2957
        %v3332 = vunpack.c.l.b16 %v2958
        %v3333 = vunpack.c.h.b16 %v2958
        %v3334 = vunpack.c.l.b16 %v2959
        %v3335 = vunpack.c.h.b16 %v2959
        %v3336 = vunpack.c.l.b16 %v2960
        %v3337 = vunpack.c.h.b16 %v2960
        %v3338 = vunpack.c.l.b16 %v2961
        %v3339 = vunpack.c.h.b16 %v2961
        %v3340 = vunpack.c.l.b16 %v2962
        %v3341 = vunpack.c.h.b16 %v2962
        %v3342 = vunpack.c.l.b16 %v2963
        %v3343 = vunpack.c.h.b16 %v2963
        %v3344 = vunpack.c.l.b16 %v2964
        %v3345 = vunpack.c.h.b16 %v2964
        %v3346 = vunpack.c.l.b16 %v2965
        %v3347 = vunpack.c.h.b16 %v2965
        %v3348 = vunpack.c.l.b16 %v2966
        %v3349 = vunpack.c.h.b16 %v2966
        %v3350 = vunpack.c.l.b16 %v2967
        %v3351 = vunpack.c.h.b16 %v2967
        %v3352 = vunpack.c.l.b16 %v2968
        %v3353 = vunpack.c.h.b16 %v2968
        %v3354 = vunpack.c.l.b16 %v2969
        %v3355 = vunpack.c.h.b16 %v2969
        %v3356 = vunpack.c.l.b16 %v2970
        %v3357 = vunpack.c.h.b16 %v2970
        %v3358 = vunpack.c.l.b16 %v2971
        %v3359 = vunpack.c.h.b16 %v2971
        %v3360 = vunpack.c.l.b16 %v2972
        %v3361 = vunpack.c.h.b16 %v2972
        %v3362 = vunpack.c.l.b16 %v2973
        %v3363 = vunpack.c.h.b16 %v2973
        %v3364 = vunpack.c.l.b16 %v2974
        %v3365 = vunpack.c.h.b16 %v2974
        %v3366 = vunpack.c.l.b16 %v2975
        %v3367 = vunpack.c.h.b16 %v2975
        %v3368 = vunpack.c.l.b16 %v2976
        %v3369 = vunpack.c.h.b16 %v2976
        %v3370 = vunpack.c.l.b16 %v2977
        %v3371 = vunpack.c.h.b16 %v2977
        %v3372 = vpack.c.b16 %v3120, %v3116
        %v3373 = vpack.c.b16 %v3121, %v3117
        %v3374 = vpack.c.b16 %v3122, %v3118
        %v3375 = vpack.c.b16 %v3123, %v3119
        %v3376 = vpack.c.b16 %v3128, %v3124
        %v3377 = vpack.c.b16 %v3129, %v3125
        %v3378 = vpack.c.b16 %v3130, %v3126
        %v3379 = vpack.c.b16 %v3131, %v3127
        %v3380 = vpack.c.b16 %v3136, %v3132
        %v3381 = vpack.c.b16 %v3137, %v3133
        %v3382 = vpack.c.b16 %v3138, %v3134
        %v3383 = vpack.c.b16 %v3139, %v3135
        %v3384 = vpack.c.b16 %v3144, %v3140
        %v3385 = vpack.c.b16 %v3145, %v3141
        %v3386 = vpack.c.b16 %v3146, %v3142
        %v3387 = vpack.c.b16 %v3147, %v3143
        %v3388 = vpack.c.b16 %v3152, %v3148
        %v3389 = vpack.c.b16 %v3153, %v3149
        %v3390 = vpack.c.b16 %v3154, %v3150
        %v3391 = vpack.c.b16 %v3155, %v3151
        %v3392 = vpack.c.b16 %v3160, %v3156
        %v3393 = vpack.c.b16 %v3161, %v3157
        %v3394 = vpack.c.b16 %v3162, %v3158
        %v3395 = vpack.c.b16 %v3163, %v3159
        %v3396 = vpack.c.b16 %v3168, %v3164
        %v3397 = vpack.c.b16 %v3169, %v3165
        %v3398 = vpack.c.b16 %v3170, %v3166
        %v3399 = vpack.c.b16 %v3171, %v3167
        %v3400 = vpack.c.b16 %v3176, %v3172
        %v3401 = vpack.c.b16 %v3177, %v3173
        %v3402 = vpack.c.b16 %v3178, %v3174
        %v3403 = vpack.c.b16 %v3179, %v3175
        %v3404 = vpack.c.b16 %v3184, %v3180
        %v3405 = vpack.c.b16 %v3185, %v3181
        %v3406 = vpack.c.b16 %v3186, %v3182
        %v3407 = vpack.c.b16 %v3187, %v3183
        %v3408 = vpack.c.b16 %v3192, %v3188
        %v3409 = vpack.c.b16 %v3193, %v3189
        %v3410 = vpack.c.b16 %v3194, %v3190
        %v3411 = vpack.c.b16 %v3195, %v3191
        %v3412 = vpack.c.b16 %v3200, %v3196
        %v3413 = vpack.c.b16 %v3201, %v3197
        %v3414 = vpack.c.b16 %v3202, %v3198
        %v3415 = vpack.c.b16 %v3203, %v3199
        %v3416 = vpack.c.b16 %v3208, %v3204
        %v3417 = vpack.c.b16 %v3209, %v3205
        %v3418 = vpack.c.b16 %v3210, %v3206
        %v3419 = vpack.c.b16 %v3211, %v3207
        %v3420 = vpack.c.b16 %v3216, %v3212
        %v3421 = vpack.c.b16 %v3217, %v3213
        %v3422 = vpack.c.b16 %v3218, %v3214
        %v3423 = vpack.c.b16 %v3219, %v3215
        %v3424 = vpack.c.b16 %v3224, %v3220
        %v3425 = vpack.c.b16 %v3225, %v3221
        %v3426 = vpack.c.b16 %v3226, %v3222
        %v3427 = vpack.c.b16 %v3227, %v3223
        %v3428 = vpack.c.b16 %v3232, %v3228
        %v3429 = vpack.c.b16 %v3233, %v3229
        %v3430 = vpack.c.b16 %v3234, %v3230
        %v3431 = vpack.c.b16 %v3235, %v3231
        %v3432 = vpack.c.b16 %v3240, %v3236
        %v3433 = vpack.c.b16 %v3241, %v3237
        %v3434 = vpack.c.b16 %v3242, %v3238
        %v3435 = vpack.c.b16 %v3243, %v3239
        %v3436 = vpack.c.b16 %v3248, %v3244
        %v3437 = vpack.c.b16 %v3249, %v3245
        %v3438 = vpack.c.b16 %v3250, %v3246
        %v3439 = vpack.c.b16 %v3251, %v3247
        %v3440 = vpack.c.b16 %v3256, %v3252
        %v3441 = vpack.c.b16 %v3257, %v3253
        %v3442 = vpack.c.b16 %v3258, %v3254
        %v3443 = vpack.c.b16 %v3259, %v3255
        %v3444 = vpack.c.b16 %v3264, %v3260
        %v3445 = vpack.c.b16 %v3265, %v3261
        %v3446 = vpack.c.b16 %v3266, %v3262
        %v3447 = vpack.c.b16 %v3267, %v3263
        %v3448 = vpack.c.b16 %v3272, %v3268
        %v3449 = vpack.c.b16 %v3273, %v3269
        %v3450 = vpack.c.b16 %v3274, %v3270
        %v3451 = vpack.c.b16 %v3275, %v3271
        %v3452 = vpack.c.b16 %v3280, %v3276
        %v3453 = vpack.c.b16 %v3281, %v3277
        %v3454 = vpack.c.b16 %v3282, %v3278
        %v3455 = vpack.c.b16 %v3283, %v3279
        %v3456 = vpack.c.b16 %v3288, %v3284
        %v3457 = vpack.c.b16 %v3289, %v3285
        %v3458 = vpack.c.b16 %v3290, %v3286
        %v3459 = vpack.c.b16 %v3291, %v3287
        %v3460 = vpack.c.b16 %v3296, %v3292
        %v3461 = vpack.c.b16 %v3297, %v3293
        %v3462 = vpack.c.b16 %v3298, %v3294
        %v3463 = vpack.c.b16 %v3299, %v3295
        %v3464 = vpack.c.b16 %v3304, %v3300
        %v3465 = vpack.c.b16 %v3305, %v3301
        %v3466 = vpack.c.b16 %v3306, %v3302
        %v3467 = vpack.c.b16 %v3307, %v3303
        %v3468 = vpack.c.b16 %v3312, %v3308
        %v3469 = vpack.c.b16 %v3313, %v3309
        %v3470 = vpack.c.b16 %v3314, %v3310
        %v3471 = vpack.c.b16 %v3315, %v3311
        %v3472 = vpack.c.b16 %v3320, %v3316
        %v3473 = vpack.c.b16 %v3321, %v3317
        %v3474 = vpack.c.b16 %v3322, %v3318
        %v3475 = vpack.c.b16 %v3323, %v3319
        %v3476 = vpack.c.b16 %v3328, %v3324
        %v3477 = vpack.c.b16 %v3329, %v3325
        %v3478 = vpack.c.b16 %v3330, %v3326
        %v3479 = vpack.c.b16 %v3331, %v3327
        %v3480 = vpack.c.b16 %v3336, %v3332
        %v3481 = vpack.c.b16 %v3337, %v3333
        %v3482 = vpack.c.b16 %v3338, %v3334
        %v3483 = vpack.c.b16 %v3339, %v3335
        %v3484 = vpack.c.b16 %v3344, %v3340
        %v3485 = vpack.c.b16 %v3345, %v3341
        %v3486 = vpack.c.b16 %v3346, %v3342
        %v3487 = vpack.c.b16 %v3347, %v3343
        %v3488 = vpack.c.b16 %v3352, %v3348
        %v3489 = vpack.c.b16 %v3353, %v3349
        %v3490 = vpack.c.b16 %v3354, %v3350
        %v3491 = vpack.c.b16 %v3355, %v3351
        %v3492 = vpack.c.b16 %v3360, %v3356
        %v3493 = vpack.c.b16 %v3361, %v3357
        %v3494 = vpack.c.b16 %v3362, %v3358
        %v3495 = vpack.c.b16 %v3363, %v3359
        %v3496 = vpack.c.b16 %v3368, %v3364
        %v3497 = vpack.c.b16 %v3369, %v3365
        %v3498 = vpack.c.b16 %v3370, %v3366
        %v3499 = vpack.c.b16 %v3371, %v3367
        %3628 = vmatpush.bf16.msra.mxu0 %v3400
        %3629 = vmatpush.bf16.msra.mxu0 %v3396
        %3630 = vmatpush.bf16.msra.mxu0 %v3392
        %3631 = vmatpush.bf16.msra.mxu0 %v3388
        %3632 = vmatpush.bf16.msra.mxu0 %v3384
        %3633 = vmatpush.bf16.msra.mxu0 %v3380
        %3634 = vmatpush.bf16.msra.mxu0 %v3376
        %3635 = vmatpush.bf16.msra.mxu0 %v3372
        %3636 = vmatmul.bf16.gmra.mxu0 %v2834
        %v3637 = vpop.f32.mrf.mxu0
        %v3638 = vadd.f32 %v2980, %v3637
        %v3639 = vpop.f32.mrf.mxu0
        %v3640 = vadd.f32 %v2980, %v3639
        %3641 = vmatmul.bf16.gmra.mxu0 %v2838
        %v3642 = vpop.f32.mrf.mxu0
        %v3643 = vadd.f32 %v2980, %v3642
        %v3644 = vpop.f32.mrf.mxu0
        %v3645 = vadd.f32 %v2980, %v3644
        %3646 = vmatmul.bf16.gmra.mxu0 %v2842
        %v3647 = vpop.f32.mrf.mxu0
        %v3648 = vadd.f32 %v2980, %v3647
        %v3649 = vpop.f32.mrf.mxu0
        %v3650 = vadd.f32 %v2980, %v3649
        %3651 = vmatmul.bf16.gmra.mxu0 %v2846
        %v3652 = vpop.f32.mrf.mxu0
        %v3653 = vadd.f32 %v2980, %v3652
        %v3654 = vpop.f32.mrf.mxu0
        %v3655 = vadd.f32 %v2980, %v3654
        %3656 = vdwg.mxu0
        %3657 = vmatpush.bf16.msra.mxu0 %v3432
        %3658 = vmatpush.bf16.msra.mxu0 %v3428
        %3659 = vmatpush.bf16.msra.mxu0 %v3424
        %3660 = vmatpush.bf16.msra.mxu0 %v3420
        %3661 = vmatpush.bf16.msra.mxu0 %v3416
        %3662 = vmatpush.bf16.msra.mxu0 %v3412
        %3663 = vmatpush.bf16.msra.mxu0 %v3408
        %3664 = vmatpush.bf16.msra.mxu0 %v3404
        %3665 = vmatmul.bf16.gmra.mxu0 %v2835
        %v3666 = vpop.f32.mrf.mxu0
        %v3667 = vadd.f32 %v3638, %v3666
        %v3668 = vpop.f32.mrf.mxu0
        %v3669 = vadd.f32 %v3640, %v3668
        %3670 = vmatmul.bf16.gmra.mxu0 %v2839
        %v3671 = vpop.f32.mrf.mxu0
        %v3672 = vadd.f32 %v3643, %v3671
        %v3673 = vpop.f32.mrf.mxu0
        %v3674 = vadd.f32 %v3645, %v3673
        %3675 = vmatmul.bf16.gmra.mxu0 %v2843
        %v3676 = vpop.f32.mrf.mxu0
        %v3677 = vadd.f32 %v3648, %v3676
        %v3678 = vpop.f32.mrf.mxu0
        %v3679 = vadd.f32 %v3650, %v3678
        %3680 = vmatmul.bf16.gmra.mxu0 %v2847
        %v3681 = vpop.f32.mrf.mxu0
        %v3682 = vadd.f32 %v3653, %v3681
        %v3683 = vpop.f32.mrf.mxu0
        %v3684 = vadd.f32 %v3655, %v3683
        %3685 = vdwg.mxu0
        %3686 = vmatpush.bf16.msra.mxu0 %v3464
        %3687 = vmatpush.bf16.msra.mxu0 %v3460
        %3688 = vmatpush.bf16.msra.mxu0 %v3456
        %3689 = vmatpush.bf16.msra.mxu0 %v3452
        %3690 = vmatpush.bf16.msra.mxu0 %v3448
        %3691 = vmatpush.bf16.msra.mxu0 %v3444
        %3692 = vmatpush.bf16.msra.mxu0 %v3440
        %3693 = vmatpush.bf16.msra.mxu0 %v3436
        %3694 = vmatmul.bf16.gmra.mxu0 %v2836
        %v3695 = vpop.f32.mrf.mxu0
        %v3696 = vadd.f32 %v3667, %v3695
        %v3697 = vpop.f32.mrf.mxu0
        %v3698 = vadd.f32 %v3669, %v3697
        %3699 = vmatmul.bf16.gmra.mxu0 %v2840
        %v3700 = vpop.f32.mrf.mxu0
        %v3701 = vadd.f32 %v3672, %v3700
        %v3702 = vpop.f32.mrf.mxu0
        %v3703 = vadd.f32 %v3674, %v3702
        %3704 = vmatmul.bf16.gmra.mxu0 %v2844
        %v3705 = vpop.f32.mrf.mxu0
        %v3706 = vadd.f32 %v3677, %v3705
        %v3707 = vpop.f32.mrf.mxu0
        %v3708 = vadd.f32 %v3679, %v3707
        %3709 = vmatmul.bf16.gmra.mxu0 %v2848
        %v3710 = vpop.f32.mrf.mxu0
        %v3711 = vadd.f32 %v3682, %v3710
        %v3712 = vpop.f32.mrf.mxu0
        %v3713 = vadd.f32 %v3684, %v3712
        %3714 = vdwg.mxu0
        %3715 = vmatpush.bf16.msra.mxu0 %v3496
        %3716 = vmatpush.bf16.msra.mxu0 %v3492
        %3717 = vmatpush.bf16.msra.mxu0 %v3488
        %3718 = vmatpush.bf16.msra.mxu0 %v3484
        %3719 = vmatpush.bf16.msra.mxu0 %v3480
        %3720 = vmatpush.bf16.msra.mxu0 %v3476
        %3721 = vmatpush.bf16.msra.mxu0 %v3472
        %3722 = vmatpush.bf16.msra.mxu0 %v3468
        %3723 = vmatmul.bf16.gmra.mxu0 %v2837
        %v3724 = vpop.f32.mrf.mxu0
        %v3725 = vadd.f32 %v3696, %v3724
        %v3726 = vpop.f32.mrf.mxu0
        %v3727 = vadd.f32 %v3698, %v3726
        %3728 = vmatmul.bf16.gmra.mxu0 %v2841
        %v3729 = vpop.f32.mrf.mxu0
        %v3730 = vadd.f32 %v3701, %v3729
        %v3731 = vpop.f32.mrf.mxu0
        %v3732 = vadd.f32 %v3703, %v3731
        %3733 = vmatmul.bf16.gmra.mxu0 %v2845
        %v3734 = vpop.f32.mrf.mxu0
        %v3735 = vadd.f32 %v3706, %v3734
        %v3736 = vpop.f32.mrf.mxu0
        %v3737 = vadd.f32 %v3708, %v3736
        %3738 = vmatmul.bf16.gmra.mxu0 %v2849
        %v3739 = vpop.f32.mrf.mxu0
        %v3740 = vadd.f32 %v3711, %v3739
        %v3741 = vpop.f32.mrf.mxu0
        %v3742 = vadd.f32 %v3713, %v3741
        %3743 = vdwg.mxu0
        %3744 = vmatpush.bf16.msra.mxu0 %v3401
        %3745 = vmatpush.bf16.msra.mxu0 %v3397
        %3746 = vmatpush.bf16.msra.mxu0 %v3393
        %3747 = vmatpush.bf16.msra.mxu0 %v3389
        %3748 = vmatpush.bf16.msra.mxu0 %v3385
        %3749 = vmatpush.bf16.msra.mxu0 %v3381
        %3750 = vmatpush.bf16.msra.mxu0 %v3377
        %3751 = vmatpush.bf16.msra.mxu0 %v3373
        %3752 = vmatmul.bf16.gmra.mxu0 %v2834
        %v3753 = vpop.f32.mrf.mxu0
        %v3754 = vadd.f32 %v2981, %v3753
        %v3755 = vpop.f32.mrf.mxu0
        %v3756 = vadd.f32 %v2981, %v3755
        %3757 = vmatmul.bf16.gmra.mxu0 %v2838
        %v3758 = vpop.f32.mrf.mxu0
        %v3759 = vadd.f32 %v2981, %v3758
        %v3760 = vpop.f32.mrf.mxu0
        %v3761 = vadd.f32 %v2981, %v3760
        %3762 = vmatmul.bf16.gmra.mxu0 %v2842
        %v3763 = vpop.f32.mrf.mxu0
        %v3764 = vadd.f32 %v2981, %v3763
        %v3765 = vpop.f32.mrf.mxu0
        %v3766 = vadd.f32 %v2981, %v3765
        %3767 = vmatmul.bf16.gmra.mxu0 %v2846
        %v3768 = vpop.f32.mrf.mxu0
        %v3769 = vadd.f32 %v2981, %v3768
        %v3770 = vpop.f32.mrf.mxu0
        %v3771 = vadd.f32 %v2981, %v3770
        %3772 = vdwg.mxu0
        %3773 = vmatpush.bf16.msra.mxu0 %v3433
        %3774 = vmatpush.bf16.msra.mxu0 %v3429
        %3775 = vmatpush.bf16.msra.mxu0 %v3425
        %3776 = vmatpush.bf16.msra.mxu0 %v3421
        %3777 = vmatpush.bf16.msra.mxu0 %v3417
        %3778 = vmatpush.bf16.msra.mxu0 %v3413
        %3779 = vmatpush.bf16.msra.mxu0 %v3409
        %3780 = vmatpush.bf16.msra.mxu0 %v3405
        %3781 = vmatmul.bf16.gmra.mxu0 %v2835
        %v3782 = vpop.f32.mrf.mxu0
        %v3783 = vadd.f32 %v3754, %v3782
        %v3784 = vpop.f32.mrf.mxu0
        %v3785 = vadd.f32 %v3756, %v3784
        %3786 = vmatmul.bf16.gmra.mxu0 %v2839
        %v3787 = vpop.f32.mrf.mxu0
        %v3788 = vadd.f32 %v3759, %v3787
        %v3789 = vpop.f32.mrf.mxu0
        %v3790 = vadd.f32 %v3761, %v3789
        %3791 = vmatmul.bf16.gmra.mxu0 %v2843
        %v3792 = vpop.f32.mrf.mxu0
        %v3793 = vadd.f32 %v3764, %v3792
        %v3794 = vpop.f32.mrf.mxu0
        %v3795 = vadd.f32 %v3766, %v3794
        %3796 = vmatmul.bf16.gmra.mxu0 %v2847
        %v3797 = vpop.f32.mrf.mxu0
        %v3798 = vadd.f32 %v3769, %v3797
        %v3799 = vpop.f32.mrf.mxu0
        %v3800 = vadd.f32 %v3771, %v3799
        %3801 = vdwg.mxu0
        %3802 = vmatpush.bf16.msra.mxu0 %v3465
        %3803 = vmatpush.bf16.msra.mxu0 %v3461
        %3804 = vmatpush.bf16.msra.mxu0 %v3457
        %3805 = vmatpush.bf16.msra.mxu0 %v3453
        %3806 = vmatpush.bf16.msra.mxu0 %v3449
        %3807 = vmatpush.bf16.msra.mxu0 %v3445
        %3808 = vmatpush.bf16.msra.mxu0 %v3441
        %3809 = vmatpush.bf16.msra.mxu0 %v3437
        %3810 = vmatmul.bf16.gmra.mxu0 %v2836
        %v3811 = vpop.f32.mrf.mxu0
        %v3812 = vadd.f32 %v3783, %v3811
        %v3813 = vpop.f32.mrf.mxu0
        %v3814 = vadd.f32 %v3785, %v3813
        %3815 = vmatmul.bf16.gmra.mxu0 %v2840
        %v3816 = vpop.f32.mrf.mxu0
        %v3817 = vadd.f32 %v3788, %v3816
        %v3818 = vpop.f32.mrf.mxu0
        %v3819 = vadd.f32 %v3790, %v3818
        %3820 = vmatmul.bf16.gmra.mxu0 %v2844
        %v3821 = vpop.f32.mrf.mxu0
        %v3822 = vadd.f32 %v3793, %v3821
        %v3823 = vpop.f32.mrf.mxu0
        %v3824 = vadd.f32 %v3795, %v3823
        %3825 = vmatmul.bf16.gmra.mxu0 %v2848
        %v3826 = vpop.f32.mrf.mxu0
        %v3827 = vadd.f32 %v3798, %v3826
        %v3828 = vpop.f32.mrf.mxu0
        %v3829 = vadd.f32 %v3800, %v3828
        %3830 = vdwg.mxu0
        %3831 = vmatpush.bf16.msra.mxu0 %v3497
        %3832 = vmatpush.bf16.msra.mxu0 %v3493
        %3833 = vmatpush.bf16.msra.mxu0 %v3489
        %3834 = vmatpush.bf16.msra.mxu0 %v3485
        %3835 = vmatpush.bf16.msra.mxu0 %v3481
        %3836 = vmatpush.bf16.msra.mxu0 %v3477
        %3837 = vmatpush.bf16.msra.mxu0 %v3473
        %3838 = vmatpush.bf16.msra.mxu0 %v3469
        %3839 = vmatmul.bf16.gmra.mxu0 %v2837
        %v3840 = vpop.f32.mrf.mxu0
        %v3841 = vadd.f32 %v3812, %v3840
        %v3842 = vpop.f32.mrf.mxu0
        %v3843 = vadd.f32 %v3814, %v3842
        %3844 = vmatmul.bf16.gmra.mxu0 %v2841
        %v3845 = vpop.f32.mrf.mxu0
        %v3846 = vadd.f32 %v3817, %v3845
        %v3847 = vpop.f32.mrf.mxu0
        %v3848 = vadd.f32 %v3819, %v3847
        %3849 = vmatmul.bf16.gmra.mxu0 %v2845
        %v3850 = vpop.f32.mrf.mxu0
        %v3851 = vadd.f32 %v3822, %v3850
        %v3852 = vpop.f32.mrf.mxu0
        %v3853 = vadd.f32 %v3824, %v3852
        %3854 = vmatmul.bf16.gmra.mxu0 %v2849
        %v3855 = vpop.f32.mrf.mxu0
        %v3856 = vadd.f32 %v3827, %v3855
        %v3857 = vpop.f32.mrf.mxu0
        %v3858 = vadd.f32 %v3829, %v3857
        %3859 = vdwg.mxu0
        %3860 = vmatpush.bf16.msra.mxu0 %v3402
        %3861 = vmatpush.bf16.msra.mxu0 %v3398
        %3862 = vmatpush.bf16.msra.mxu0 %v3394
        %3863 = vmatpush.bf16.msra.mxu0 %v3390
        %3864 = vmatpush.bf16.msra.mxu0 %v3386
        %3865 = vmatpush.bf16.msra.mxu0 %v3382
        %3866 = vmatpush.bf16.msra.mxu0 %v3378
        %3867 = vmatpush.bf16.msra.mxu0 %v3374
        %3868 = vmatmul.bf16.gmra.mxu0 %v2834
        %v3869 = vpop.f32.mrf.mxu0
        %v3870 = vadd.f32 %v2982, %v3869
        %v3871 = vpop.f32.mrf.mxu0
        %v3872 = vadd.f32 %v2982, %v3871
        %3873 = vmatmul.bf16.gmra.mxu0 %v2838
        %v3874 = vpop.f32.mrf.mxu0
        %v3875 = vadd.f32 %v2982, %v3874
        %v3876 = vpop.f32.mrf.mxu0
        %v3877 = vadd.f32 %v2982, %v3876
        %3878 = vmatmul.bf16.gmra.mxu0 %v2842
        %v3879 = vpop.f32.mrf.mxu0
        %v3880 = vadd.f32 %v2982, %v3879
        %v3881 = vpop.f32.mrf.mxu0
        %v3882 = vadd.f32 %v2982, %v3881
        %3883 = vmatmul.bf16.gmra.mxu0 %v2846
        %v3884 = vpop.f32.mrf.mxu0
        %v3885 = vadd.f32 %v2982, %v3884
        %v3886 = vpop.f32.mrf.mxu0
        %v3887 = vadd.f32 %v2982, %v3886
        %3888 = vdwg.mxu0
        %3889 = vmatpush.bf16.msra.mxu0 %v3434
        %3890 = vmatpush.bf16.msra.mxu0 %v3430
        %3891 = vmatpush.bf16.msra.mxu0 %v3426
        %3892 = vmatpush.bf16.msra.mxu0 %v3422
        %3893 = vmatpush.bf16.msra.mxu0 %v3418
        %3894 = vmatpush.bf16.msra.mxu0 %v3414
        %3895 = vmatpush.bf16.msra.mxu0 %v3410
        %3896 = vmatpush.bf16.msra.mxu0 %v3406
        %3897 = vmatmul.bf16.gmra.mxu0 %v2835
        %v3898 = vpop.f32.mrf.mxu0
        %v3899 = vadd.f32 %v3870, %v3898
        %v3900 = vpop.f32.mrf.mxu0
        %v3901 = vadd.f32 %v3872, %v3900
        %3902 = vmatmul.bf16.gmra.mxu0 %v2839
        %v3903 = vpop.f32.mrf.mxu0
        %v3904 = vadd.f32 %v3875, %v3903
        %v3905 = vpop.f32.mrf.mxu0
        %v3906 = vadd.f32 %v3877, %v3905
        %3907 = vmatmul.bf16.gmra.mxu0 %v2843
        %v3908 = vpop.f32.mrf.mxu0
        %v3909 = vadd.f32 %v3880, %v3908
        %v3910 = vpop.f32.mrf.mxu0
        %v3911 = vadd.f32 %v3882, %v3910
        %3912 = vmatmul.bf16.gmra.mxu0 %v2847
        %v3913 = vpop.f32.mrf.mxu0
        %v3914 = vadd.f32 %v3885, %v3913
        %v3915 = vpop.f32.mrf.mxu0
        %v3916 = vadd.f32 %v3887, %v3915
        %3917 = vdwg.mxu0
        %3918 = vmatpush.bf16.msra.mxu0 %v3466
        %3919 = vmatpush.bf16.msra.mxu0 %v3462
        %3920 = vmatpush.bf16.msra.mxu0 %v3458
        %3921 = vmatpush.bf16.msra.mxu0 %v3454
        %3922 = vmatpush.bf16.msra.mxu0 %v3450
        %3923 = vmatpush.bf16.msra.mxu0 %v3446
        %3924 = vmatpush.bf16.msra.mxu0 %v3442
        %3925 = vmatpush.bf16.msra.mxu0 %v3438
        %3926 = vmatmul.bf16.gmra.mxu0 %v2836
        %v3927 = vpop.f32.mrf.mxu0
        %v3928 = vadd.f32 %v3899, %v3927
        %v3929 = vpop.f32.mrf.mxu0
        %v3930 = vadd.f32 %v3901, %v3929
        %3931 = vmatmul.bf16.gmra.mxu0 %v2840
        %v3932 = vpop.f32.mrf.mxu0
        %v3933 = vadd.f32 %v3904, %v3932
        %v3934 = vpop.f32.mrf.mxu0
        %v3935 = vadd.f32 %v3906, %v3934
        %3936 = vmatmul.bf16.gmra.mxu0 %v2844
        %v3937 = vpop.f32.mrf.mxu0
        %v3938 = vadd.f32 %v3909, %v3937
        %v3939 = vpop.f32.mrf.mxu0
        %v3940 = vadd.f32 %v3911, %v3939
        %3941 = vmatmul.bf16.gmra.mxu0 %v2848
        %v3942 = vpop.f32.mrf.mxu0
        %v3943 = vadd.f32 %v3914, %v3942
        %v3944 = vpop.f32.mrf.mxu0
        %v3945 = vadd.f32 %v3916, %v3944
        %3946 = vdwg.mxu0
        %3947 = vmatpush.bf16.msra.mxu0 %v3498
        %3948 = vmatpush.bf16.msra.mxu0 %v3494
        %3949 = vmatpush.bf16.msra.mxu0 %v3490
        %3950 = vmatpush.bf16.msra.mxu0 %v3486
        %3951 = vmatpush.bf16.msra.mxu0 %v3482
        %3952 = vmatpush.bf16.msra.mxu0 %v3478
        %3953 = vmatpush.bf16.msra.mxu0 %v3474
        %3954 = vmatpush.bf16.msra.mxu0 %v3470
        %3955 = vmatmul.bf16.gmra.mxu0 %v2837
        %v3956 = vpop.f32.mrf.mxu0
        %v3957 = vadd.f32 %v3928, %v3956
        %v3958 = vpop.f32.mrf.mxu0
        %v3959 = vadd.f32 %v3930, %v3958
        %3960 = vmatmul.bf16.gmra.mxu0 %v2841
        %v3961 = vpop.f32.mrf.mxu0
        %v3962 = vadd.f32 %v3933, %v3961
        %v3963 = vpop.f32.mrf.mxu0
        %v3964 = vadd.f32 %v3935, %v3963
        %3965 = vmatmul.bf16.gmra.mxu0 %v2845
        %v3966 = vpop.f32.mrf.mxu0
        %v3967 = vadd.f32 %v3938, %v3966
        %v3968 = vpop.f32.mrf.mxu0
        %v3969 = vadd.f32 %v3940, %v3968
        %3970 = vmatmul.bf16.gmra.mxu0 %v2849
        %v3971 = vpop.f32.mrf.mxu0
        %v3972 = vadd.f32 %v3943, %v3971
        %v3973 = vpop.f32.mrf.mxu0
        %v3974 = vadd.f32 %v3945, %v3973
        %3975 = vdwg.mxu0
        %3976 = vmatpush.bf16.msra.mxu0 %v3403
        %3977 = vmatpush.bf16.msra.mxu0 %v3399
        %3978 = vmatpush.bf16.msra.mxu0 %v3395
        %3979 = vmatpush.bf16.msra.mxu0 %v3391
        %3980 = vmatpush.bf16.msra.mxu0 %v3387
        %3981 = vmatpush.bf16.msra.mxu0 %v3383
        %3982 = vmatpush.bf16.msra.mxu0 %v3379
        %3983 = vmatpush.bf16.msra.mxu0 %v3375
        %3984 = vmatmul.bf16.gmra.mxu0 %v2834
        %v3985 = vpop.f32.mrf.mxu0
        %v3986 = vadd.f32 %v2983, %v3985
        %v3987 = vpop.f32.mrf.mxu0
        %v3988 = vadd.f32 %v2983, %v3987
        %3989 = vmatmul.bf16.gmra.mxu0 %v2838
        %v3990 = vpop.f32.mrf.mxu0
        %v3991 = vadd.f32 %v2983, %v3990
        %v3992 = vpop.f32.mrf.mxu0
        %v3993 = vadd.f32 %v2983, %v3992
        %3994 = vmatmul.bf16.gmra.mxu0 %v2842
        %v3995 = vpop.f32.mrf.mxu0
        %v3996 = vadd.f32 %v2983, %v3995
        %v3997 = vpop.f32.mrf.mxu0
        %v3998 = vadd.f32 %v2983, %v3997
        %3999 = vmatmul.bf16.gmra.mxu0 %v2846
        %v4000 = vpop.f32.mrf.mxu0
        %v4001 = vadd.f32 %v2983, %v4000
        %v4002 = vpop.f32.mrf.mxu0
        %v4003 = vadd.f32 %v2983, %v4002
        %4004 = vdwg.mxu0
        %4005 = vmatpush.bf16.msra.mxu0 %v3435
        %4006 = vmatpush.bf16.msra.mxu0 %v3431
        %4007 = vmatpush.bf16.msra.mxu0 %v3427
        %4008 = vmatpush.bf16.msra.mxu0 %v3423
        %4009 = vmatpush.bf16.msra.mxu0 %v3419
        %4010 = vmatpush.bf16.msra.mxu0 %v3415
        %4011 = vmatpush.bf16.msra.mxu0 %v3411
        %4012 = vmatpush.bf16.msra.mxu0 %v3407
        %4013 = vmatmul.bf16.gmra.mxu0 %v2835
        %v4014 = vpop.f32.mrf.mxu0
        %v4015 = vadd.f32 %v3986, %v4014
        %v4016 = vpop.f32.mrf.mxu0
        %v4017 = vadd.f32 %v3988, %v4016
        %4018 = vmatmul.bf16.gmra.mxu0 %v2839
        %v4019 = vpop.f32.mrf.mxu0
        %v4020 = vadd.f32 %v3991, %v4019
        %v4021 = vpop.f32.mrf.mxu0
        %v4022 = vadd.f32 %v3993, %v4021
        %4023 = vmatmul.bf16.gmra.mxu0 %v2843
        %v4024 = vpop.f32.mrf.mxu0
        %v4025 = vadd.f32 %v3996, %v4024
        %v4026 = vpop.f32.mrf.mxu0
        %v4027 = vadd.f32 %v3998, %v4026
        %4028 = vmatmul.bf16.gmra.mxu0 %v2847
        %v4029 = vpop.f32.mrf.mxu0
        %v4030 = vadd.f32 %v4001, %v4029
        %v4031 = vpop.f32.mrf.mxu0
        %v4032 = vadd.f32 %v4003, %v4031
        %4033 = vdwg.mxu0
        %4034 = vmatpush.bf16.msra.mxu0 %v3467
        %4035 = vmatpush.bf16.msra.mxu0 %v3463
        %4036 = vmatpush.bf16.msra.mxu0 %v3459
        %4037 = vmatpush.bf16.msra.mxu0 %v3455
        %4038 = vmatpush.bf16.msra.mxu0 %v3451
        %4039 = vmatpush.bf16.msra.mxu0 %v3447
        %4040 = vmatpush.bf16.msra.mxu0 %v3443
        %4041 = vmatpush.bf16.msra.mxu0 %v3439
        %4042 = vmatmul.bf16.gmra.mxu0 %v2836
        %v4043 = vpop.f32.mrf.mxu0
        %v4044 = vadd.f32 %v4015, %v4043
        %v4045 = vpop.f32.mrf.mxu0
        %v4046 = vadd.f32 %v4017, %v4045
        %4047 = vmatmul.bf16.gmra.mxu0 %v2840
        %v4048 = vpop.f32.mrf.mxu0
        %v4049 = vadd.f32 %v4020, %v4048
        %v4050 = vpop.f32.mrf.mxu0
        %v4051 = vadd.f32 %v4022, %v4050
        %4052 = vmatmul.bf16.gmra.mxu0 %v2844
        %v4053 = vpop.f32.mrf.mxu0
        %v4054 = vadd.f32 %v4025, %v4053
        %v4055 = vpop.f32.mrf.mxu0
        %v4056 = vadd.f32 %v4027, %v4055
        %4057 = vmatmul.bf16.gmra.mxu0 %v2848
        %v4058 = vpop.f32.mrf.mxu0
        %v4059 = vadd.f32 %v4030, %v4058
        %v4060 = vpop.f32.mrf.mxu0
        %v4061 = vadd.f32 %v4032, %v4060
        %4062 = vdwg.mxu0
        %4063 = vmatpush.bf16.msra.mxu0 %v3499
        %4064 = vmatpush.bf16.msra.mxu0 %v3495
        %4065 = vmatpush.bf16.msra.mxu0 %v3491
        %4066 = vmatpush.bf16.msra.mxu0 %v3487
        %4067 = vmatpush.bf16.msra.mxu0 %v3483
        %4068 = vmatpush.bf16.msra.mxu0 %v3479
        %4069 = vmatpush.bf16.msra.mxu0 %v3475
        %4070 = vmatpush.bf16.msra.mxu0 %v3471
        %4071 = vmatmul.bf16.gmra.mxu0 %v2837
        %v4072 = vpop.f32.mrf.mxu0
        %v4073 = vadd.f32 %v4044, %v4072
        %v4074 = vpop.f32.mrf.mxu0
        %v4075 = vadd.f32 %v4046, %v4074
        %4076 = vmatmul.bf16.gmra.mxu0 %v2841
        %v4077 = vpop.f32.mrf.mxu0
        %v4078 = vadd.f32 %v4049, %v4077
        %v4079 = vpop.f32.mrf.mxu0
        %v4080 = vadd.f32 %v4051, %v4079
        %4081 = vmatmul.bf16.gmra.mxu0 %v2845
        %v4082 = vpop.f32.mrf.mxu0
        %v4083 = vadd.f32 %v4054, %v4082
        %v4084 = vpop.f32.mrf.mxu0
        %v4085 = vadd.f32 %v4056, %v4084
        %4086 = vmatmul.bf16.gmra.mxu0 %v2849
        %v4087 = vpop.f32.mrf.mxu0
        %v4088 = vadd.f32 %v4059, %v4087
        %v4089 = vpop.f32.mrf.mxu0
        %v4090 = vadd.f32 %v4061, %v4089
        %4091 = vdwg.mxu0
        %vm4092 = vcmp.gt.f32.partialorder %v3725, 0.0
        %vm4093 = vcmp.gt.f32.partialorder %v3841, 0.0
        %vm4094 = vcmp.gt.f32.partialorder %v3957, 0.0
        %vm4095 = vcmp.gt.f32.partialorder %v4073, 0.0
        %vm4096 = vcmp.gt.f32.partialorder %v3727, 0.0
        %vm4097 = vcmp.gt.f32.partialorder %v3843, 0.0
        %vm4098 = vcmp.gt.f32.partialorder %v3959, 0.0
        %vm4099 = vcmp.gt.f32.partialorder %v4075, 0.0
        %vm4100 = vcmp.gt.f32.partialorder %v3730, 0.0
        %vm4101 = vcmp.gt.f32.partialorder %v3846, 0.0
        %vm4102 = vcmp.gt.f32.partialorder %v3962, 0.0
        %vm4103 = vcmp.gt.f32.partialorder %v4078, 0.0
        %vm4104 = vcmp.gt.f32.partialorder %v3732, 0.0
        %vm4105 = vcmp.gt.f32.partialorder %v3848, 0.0
        %vm4106 = vcmp.gt.f32.partialorder %v3964, 0.0
        %vm4107 = vcmp.gt.f32.partialorder %v4080, 0.0
        %vm4108 = vcmp.gt.f32.partialorder %v3735, 0.0
        %vm4109 = vcmp.gt.f32.partialorder %v3851, 0.0
        %vm4110 = vcmp.gt.f32.partialorder %v3967, 0.0
        %vm4111 = vcmp.gt.f32.partialorder %v4083, 0.0
        %vm4112 = vcmp.gt.f32.partialorder %v3737, 0.0
        %vm4113 = vcmp.gt.f32.partialorder %v3853, 0.0
        %vm4114 = vcmp.gt.f32.partialorder %v3969, 0.0
        %vm4115 = vcmp.gt.f32.partialorder %v4085, 0.0
        %vm4116 = vcmp.gt.f32.partialorder %v3740, 0.0
        %vm4117 = vcmp.gt.f32.partialorder %v3856, 0.0
        %vm4118 = vcmp.gt.f32.partialorder %v3972, 0.0
        %vm4119 = vcmp.gt.f32.partialorder %v4088, 0.0
        %vm4120 = vcmp.gt.f32.partialorder %v3742, 0.0
        %vm4121 = vcmp.gt.f32.partialorder %v3858, 0.0
        %vm4122 = vcmp.gt.f32.partialorder %v3974, 0.0
        %vm4123 = vcmp.gt.f32.partialorder %v4090, 0.0
        %v4124 = vmul.f32 %v3725, 0.01
        %v4125 = vmul.f32 %v3841, 0.01
        %v4126 = vmul.f32 %v3957, 0.01
        %v4127 = vmul.f32 %v4073, 0.01
        %v4128 = vmul.f32 %v3727, 0.01
        %v4129 = vmul.f32 %v3843, 0.01
        %v4130 = vmul.f32 %v3959, 0.01
        %v4131 = vmul.f32 %v4075, 0.01
        %v4132 = vmul.f32 %v3730, 0.01
        %v4133 = vmul.f32 %v3846, 0.01
        %v4134 = vmul.f32 %v3962, 0.01
        %v4135 = vmul.f32 %v4078, 0.01
        %v4136 = vmul.f32 %v3732, 0.01
        %v4137 = vmul.f32 %v3848, 0.01
        %v4138 = vmul.f32 %v3964, 0.01
        %v4139 = vmul.f32 %v4080, 0.01
        %v4140 = vmul.f32 %v3735, 0.01
        %v4141 = vmul.f32 %v3851, 0.01
        %v4142 = vmul.f32 %v3967, 0.01
        %v4143 = vmul.f32 %v4083, 0.01
        %v4144 = vmul.f32 %v3737, 0.01
        %v4145 = vmul.f32 %v3853, 0.01
        %v4146 = vmul.f32 %v3969, 0.01
        %v4147 = vmul.f32 %v4085, 0.01
        %v4148 = vmul.f32 %v3740, 0.01
        %v4149 = vmul.f32 %v3856, 0.01
        %v4150 = vmul.f32 %v3972, 0.01
        %v4151 = vmul.f32 %v4088, 0.01
        %v4152 = vmul.f32 %v3742, 0.01
        %v4153 = vmul.f32 %v3858, 0.01
        %v4154 = vmul.f32 %v3974, 0.01
        %v4155 = vmul.f32 %v4090, 0.01
        %v4156 = vsel %vm4092, %v3725, %v4124
        %v4157 = vsel %vm4093, %v3841, %v4125
        %v4158 = vsel %vm4094, %v3957, %v4126
        %v4159 = vsel %vm4095, %v4073, %v4127
        %v4160 = vsel %vm4096, %v3727, %v4128
        %v4161 = vsel %vm4097, %v3843, %v4129
        %v4162 = vsel %vm4098, %v3959, %v4130
        %v4163 = vsel %vm4099, %v4075, %v4131
        %v4164 = vsel %vm4100, %v3730, %v4132
        %v4165 = vsel %vm4101, %v3846, %v4133
        %v4166 = vsel %vm4102, %v3962, %v4134
        %v4167 = vsel %vm4103, %v4078, %v4135
        %v4168 = vsel %vm4104, %v3732, %v4136
        %v4169 = vsel %vm4105, %v3848, %v4137
        %v4170 = vsel %vm4106, %v3964, %v4138
        %v4171 = vsel %vm4107, %v4080, %v4139
        %v4172 = vsel %vm4108, %v3735, %v4140
        %v4173 = vsel %vm4109, %v3851, %v4141
        %v4174 = vsel %vm4110, %v3967, %v4142
        %v4175 = vsel %vm4111, %v4083, %v4143
        %v4176 = vsel %vm4112, %v3737, %v4144
        %v4177 = vsel %vm4113, %v3853, %v4145
        %v4178 = vsel %vm4114, %v3969, %v4146
        %v4179 = vsel %vm4115, %v4085, %v4147
        %v4180 = vsel %vm4116, %v3740, %v4148
        %v4181 = vsel %vm4117, %v3856, %v4149
        %v4182 = vsel %vm4118, %v3972, %v4150
        %v4183 = vsel %vm4119, %v4088, %v4151
        %v4184 = vsel %vm4120, %v3742, %v4152
        %v4185 = vsel %vm4121, %v3858, %v4153
        %v4186 = vsel %vm4122, %v3974, %v4154
        %v4187 = vsel %vm4123, %v4090, %v4155
        %v4188 = vld [vmem:[%s10] sm:$0xff]
        %v4189 = vld [vmem:[%s10 + $0x8] sm:$0xff]
        %v4190 = vld [vmem:[%s10 + $0x10] sm:$0xff]
        %v4191 = vld [vmem:[%s10 + $0x18] sm:$0xff]
        %v4192 = vld [vmem:[%s10 + $0x20] sm:$0xff]
        %v4193 = vld [vmem:[%s10 + $0x28] sm:$0xff]
        %v4194 = vld [vmem:[%s10 + $0x30] sm:$0xff]
        %v4195 = vld [vmem:[%s10 + $0x38] sm:$0xff]
        %v4196 = vld [vmem:[%s10 + $0x40] sm:$0xff]
        %v4197 = vld [vmem:[%s10 + $0x48] sm:$0xff]
        %v4198 = vld [vmem:[%s10 + $0x50] sm:$0xff]
        %v4199 = vld [vmem:[%s10 + $0x58] sm:$0xff]
        %v4200 = vld [vmem:[%s10 + $0x60] sm:$0xff]
        %v4201 = vld [vmem:[%s10 + $0x68] sm:$0xff]
        %v4202 = vld [vmem:[%s10 + $0x70] sm:$0xff]
        %v4203 = vld [vmem:[%s10 + $0x78] sm:$0xff]
        %v4204 = vld [vmem:[%s10 + $0x80] sm:$0xff]
        %v4205 = vld [vmem:[%s10 + $0x88] sm:$0xff]
        %v4206 = vld [vmem:[%s10 + $0x90] sm:$0xff]
        %v4207 = vld [vmem:[%s10 + $0x98] sm:$0xff]
        %v4208 = vld [vmem:[%s10 + $0xa0] sm:$0xff]
        %v4209 = vld [vmem:[%s10 + $0xa8] sm:$0xff]
        %v4210 = vld [vmem:[%s10 + $0xb0] sm:$0xff]
        %v4211 = vld [vmem:[%s10 + $0xb8] sm:$0xff]
        %v4212 = vld [vmem:[%s10 + $0xc0] sm:$0xff]
        %v4213 = vld [vmem:[%s10 + $0xc8] sm:$0xff]
        %v4214 = vld [vmem:[%s10 + $0xd0] sm:$0xff]
        %v4215 = vld [vmem:[%s10 + $0xd8] sm:$0xff]
        %v4216 = vld [vmem:[%s10 + $0xe0] sm:$0xff]
        %v4217 = vld [vmem:[%s10 + $0xe8] sm:$0xff]
        %v4218 = vld [vmem:[%s10 + $0xf0] sm:$0xff]
        %v4219 = vld [vmem:[%s10 + $0xf8] sm:$0xff]
        %v4220 = vld [vmem:[%s10 + $0x100] sm:$0xff]
        %v4221 = vld [vmem:[%s10 + $0x108] sm:$0xff]
        %v4222 = vld [vmem:[%s10 + $0x110] sm:$0xff]
        %v4223 = vld [vmem:[%s10 + $0x118] sm:$0xff]
        %v4224 = vld [vmem:[%s10 + $0x120] sm:$0xff]
        %v4225 = vld [vmem:[%s10 + $0x128] sm:$0xff]
        %v4226 = vld [vmem:[%s10 + $0x130] sm:$0xff]
        %v4227 = vld [vmem:[%s10 + $0x138] sm:$0xff]
        %v4228 = vld [vmem:[%s10 + $0x140] sm:$0xff]
        %v4229 = vld [vmem:[%s10 + $0x148] sm:$0xff]
        %v4230 = vld [vmem:[%s10 + $0x150] sm:$0xff]
        %v4231 = vld [vmem:[%s10 + $0x158] sm:$0xff]
        %v4232 = vld [vmem:[%s10 + $0x160] sm:$0xff]
        %v4233 = vld [vmem:[%s10 + $0x168] sm:$0xff]
        %v4234 = vld [vmem:[%s10 + $0x170] sm:$0xff]
        %v4235 = vld [vmem:[%s10 + $0x178] sm:$0xff]
        %v4236 = vld [vmem:[%s10 + $0x180] sm:$0xff]
        %v4237 = vld [vmem:[%s10 + $0x188] sm:$0xff]
        %v4238 = vld [vmem:[%s10 + $0x190] sm:$0xff]
        %v4239 = vld [vmem:[%s10 + $0x198] sm:$0xff]
        %v4240 = vld [vmem:[%s10 + $0x1a0] sm:$0xff]
        %v4241 = vld [vmem:[%s10 + $0x1a8] sm:$0xff]
        %v4242 = vld [vmem:[%s10 + $0x1b0] sm:$0xff]
        %v4243 = vld [vmem:[%s10 + $0x1b8] sm:$0xff]
        %v4244 = vld [vmem:[%s10 + $0x1c0] sm:$0xff]
        %v4245 = vld [vmem:[%s10 + $0x1c8] sm:$0xff]
        %v4246 = vld [vmem:[%s10 + $0x1d0] sm:$0xff]
        %v4247 = vld [vmem:[%s10 + $0x1d8] sm:$0xff]
        %v4248 = vld [vmem:[%s10 + $0x1e0] sm:$0xff]
        %v4249 = vld [vmem:[%s10 + $0x1e8] sm:$0xff]
        %v4250 = vld [vmem:[%s10 + $0x1f0] sm:$0xff]
        %v4251 = vld [vmem:[%s10 + $0x1f8] sm:$0xff]
        %v4252 = vld [vmem:[#allocation13] sm:$0x1]
        %v4254 = vperm.slane %v4252, 0
        %4256 = vmatpush.msra.mxu0 %v4203
        %4257 = vmatpush.msra.mxu0 %v4202
        %4258 = vmatpush.msra.mxu0 %v4201
        %4259 = vmatpush.msra.mxu0 %v4200
        %4260 = vmatpush.msra.mxu0 %v4199
        %4261 = vmatpush.msra.mxu0 %v4198
        %4262 = vmatpush.msra.mxu0 %v4197
        %4263 = vmatpush.msra.mxu0 %v4196
        %4264 = vmatpush.msra.mxu0 %v4195
        %4265 = vmatpush.msra.mxu0 %v4194
        %4266 = vmatpush.msra.mxu0 %v4193
        %4267 = vmatpush.msra.mxu0 %v4192
        %4268 = vmatpush.msra.mxu0 %v4191
        %4269 = vmatpush.msra.mxu0 %v4190
        %4270 = vmatpush.msra.mxu0 %v4189
        %4271 = vmatpush.msra.mxu0 %v4188
        %4272 = vmatmul.f32.gmra.mxu0 %v4156
        %v4273 = vpop.f32.mrf.mxu0
        %v4274 = vadd.f32 %v4254, %v4273
        %4275 = vmatmul.f32.gmra.mxu0 %v4160
        %v4276 = vpop.f32.mrf.mxu0
        %v4277 = vadd.f32 %v4254, %v4276
        %4278 = vmatmul.f32.gmra.mxu0 %v4164
        %v4279 = vpop.f32.mrf.mxu0
        %v4280 = vadd.f32 %v4254, %v4279
        %4281 = vmatmul.f32.gmra.mxu0 %v4168
        %v4282 = vpop.f32.mrf.mxu0
        %v4283 = vadd.f32 %v4254, %v4282
        %4284 = vmatmul.f32.gmra.mxu0 %v4172
        %v4285 = vpop.f32.mrf.mxu0
        %v4286 = vadd.f32 %v4254, %v4285
        %4287 = vmatmul.f32.gmra.mxu0 %v4176
        %v4288 = vpop.f32.mrf.mxu0
        %v4289 = vadd.f32 %v4254, %v4288
        %4290 = vmatmul.f32.gmra.mxu0 %v4180
        %v4291 = vpop.f32.mrf.mxu0
        %v4292 = vadd.f32 %v4254, %v4291
        %4293 = vmatmul.f32.gmra.mxu0 %v4184
        %v4294 = vpop.f32.mrf.mxu0
        %v4295 = vadd.f32 %v4254, %v4294
        %4296 = vdwg.mxu0
        %4297 = vmatpush.msra.mxu0 %v4219
        %4298 = vmatpush.msra.mxu0 %v4218
        %4299 = vmatpush.msra.mxu0 %v4217
        %4300 = vmatpush.msra.mxu0 %v4216
        %4301 = vmatpush.msra.mxu0 %v4215
        %4302 = vmatpush.msra.mxu0 %v4214
        %4303 = vmatpush.msra.mxu0 %v4213
        %4304 = vmatpush.msra.mxu0 %v4212
        %4305 = vmatpush.msra.mxu0 %v4211
        %4306 = vmatpush.msra.mxu0 %v4210
        %4307 = vmatpush.msra.mxu0 %v4209
        %4308 = vmatpush.msra.mxu0 %v4208
        %4309 = vmatpush.msra.mxu0 %v4207
        %4310 = vmatpush.msra.mxu0 %v4206
        %4311 = vmatpush.msra.mxu0 %v4205
        %4312 = vmatpush.msra.mxu0 %v4204
        %4313 = vmatmul.f32.gmra.mxu0 %v4157
        %v4314 = vpop.f32.mrf.mxu0
        %v4315 = vadd.f32 %v4274, %v4314
        %4316 = vmatmul.f32.gmra.mxu0 %v4161
        %v4317 = vpop.f32.mrf.mxu0
        %v4318 = vadd.f32 %v4277, %v4317
        %4319 = vmatmul.f32.gmra.mxu0 %v4165
        %v4320 = vpop.f32.mrf.mxu0
        %v4321 = vadd.f32 %v4280, %v4320
        %4322 = vmatmul.f32.gmra.mxu0 %v4169
        %v4323 = vpop.f32.mrf.mxu0
        %v4324 = vadd.f32 %v4283, %v4323
        %4325 = vmatmul.f32.gmra.mxu0 %v4173
        %v4326 = vpop.f32.mrf.mxu0
        %v4327 = vadd.f32 %v4286, %v4326
        %4328 = vmatmul.f32.gmra.mxu0 %v4177
        %v4329 = vpop.f32.mrf.mxu0
        %v4330 = vadd.f32 %v4289, %v4329
        %4331 = vmatmul.f32.gmra.mxu0 %v4181
        %v4332 = vpop.f32.mrf.mxu0
        %v4333 = vadd.f32 %v4292, %v4332
        %4334 = vmatmul.f32.gmra.mxu0 %v4185
        %v4335 = vpop.f32.mrf.mxu0
        %v4336 = vadd.f32 %v4295, %v4335
        %4337 = vdwg.mxu0
        %4338 = vmatpush.msra.mxu0 %v4235
        %4339 = vmatpush.msra.mxu0 %v4234
        %4340 = vmatpush.msra.mxu0 %v4233
        %4341 = vmatpush.msra.mxu0 %v4232
        %4342 = vmatpush.msra.mxu0 %v4231
        %4343 = vmatpush.msra.mxu0 %v4230
        %4344 = vmatpush.msra.mxu0 %v4229
        %4345 = vmatpush.msra.mxu0 %v4228
        %4346 = vmatpush.msra.mxu0 %v4227
        %4347 = vmatpush.msra.mxu0 %v4226
        %4348 = vmatpush.msra.mxu0 %v4225
        %4349 = vmatpush.msra.mxu0 %v4224
        %4350 = vmatpush.msra.mxu0 %v4223
        %4351 = vmatpush.msra.mxu0 %v4222
        %4352 = vmatpush.msra.mxu0 %v4221
        %4353 = vmatpush.msra.mxu0 %v4220
        %4354 = vmatmul.f32.gmra.mxu0 %v4158
        %v4355 = vpop.f32.mrf.mxu0
        %v4356 = vadd.f32 %v4315, %v4355
        %4357 = vmatmul.f32.gmra.mxu0 %v4162
        %v4358 = vpop.f32.mrf.mxu0
        %v4359 = vadd.f32 %v4318, %v4358
        %4360 = vmatmul.f32.gmra.mxu0 %v4166
        %v4361 = vpop.f32.mrf.mxu0
        %v4362 = vadd.f32 %v4321, %v4361
        %4363 = vmatmul.f32.gmra.mxu0 %v4170
        %v4364 = vpop.f32.mrf.mxu0
        %v4365 = vadd.f32 %v4324, %v4364
        %4366 = vmatmul.f32.gmra.mxu0 %v4174
        %v4367 = vpop.f32.mrf.mxu0
        %v4368 = vadd.f32 %v4327, %v4367
        %4369 = vmatmul.f32.gmra.mxu0 %v4178
        %v4370 = vpop.f32.mrf.mxu0
        %v4371 = vadd.f32 %v4330, %v4370
        %4372 = vmatmul.f32.gmra.mxu0 %v4182
        %v4373 = vpop.f32.mrf.mxu0
        %v4374 = vadd.f32 %v4333, %v4373
        %4375 = vmatmul.f32.gmra.mxu0 %v4186
        %v4376 = vpop.f32.mrf.mxu0
        %v4377 = vadd.f32 %v4336, %v4376
        %4378 = vdwg.mxu0
        %4379 = vmatpush.msra.mxu0 %v4251
        %4380 = vmatpush.msra.mxu0 %v4250
        %4381 = vmatpush.msra.mxu0 %v4249
        %4382 = vmatpush.msra.mxu0 %v4248
        %4383 = vmatpush.msra.mxu0 %v4247
        %4384 = vmatpush.msra.mxu0 %v4246
        %4385 = vmatpush.msra.mxu0 %v4245
        %4386 = vmatpush.msra.mxu0 %v4244
        %4387 = vmatpush.msra.mxu0 %v4243
        %4388 = vmatpush.msra.mxu0 %v4242
        %4389 = vmatpush.msra.mxu0 %v4241
        %4390 = vmatpush.msra.mxu0 %v4240
        %4391 = vmatpush.msra.mxu0 %v4239
        %4392 = vmatpush.msra.mxu0 %v4238
        %4393 = vmatpush.msra.mxu0 %v4237
        %4394 = vmatpush.msra.mxu0 %v4236
        %4395 = vmatmul.f32.gmra.mxu0 %v4159
        %v4396 = vpop.f32.mrf.mxu0
        %v4397 = vadd.f32 %v4356, %v4396
        %4398 = vmatmul.f32.gmra.mxu0 %v4163
        %v4399 = vpop.f32.mrf.mxu0
        %v4400 = vadd.f32 %v4359, %v4399
        %4401 = vmatmul.f32.gmra.mxu0 %v4167
        %v4402 = vpop.f32.mrf.mxu0
        %v4403 = vadd.f32 %v4362, %v4402
        %4404 = vmatmul.f32.gmra.mxu0 %v4171
        %v4405 = vpop.f32.mrf.mxu0
        %v4406 = vadd.f32 %v4365, %v4405
        %4407 = vmatmul.f32.gmra.mxu0 %v4175
        %v4408 = vpop.f32.mrf.mxu0
        %v4409 = vadd.f32 %v4368, %v4408
        %4410 = vmatmul.f32.gmra.mxu0 %v4179
        %v4411 = vpop.f32.mrf.mxu0
        %v4412 = vadd.f32 %v4371, %v4411
        %4413 = vmatmul.f32.gmra.mxu0 %v4183
        %v4414 = vpop.f32.mrf.mxu0
        %v4415 = vadd.f32 %v4374, %v4414
        %4416 = vmatmul.f32.gmra.mxu0 %v4187
        %v4417 = vpop.f32.mrf.mxu0
        %v4418 = vadd.f32 %v4377, %v4417
        %4419 = vdwg.mxu0
        %vm4420 = vcmp.gt.f32.partialorder %v4397, 0.0
        %vm4421 = vcmp.gt.f32.partialorder %v4400, 0.0
        %vm4422 = vcmp.gt.f32.partialorder %v4403, 0.0
        %vm4423 = vcmp.gt.f32.partialorder %v4406, 0.0
        %vm4424 = vcmp.gt.f32.partialorder %v4409, 0.0
        %vm4425 = vcmp.gt.f32.partialorder %v4412, 0.0
        %vm4426 = vcmp.gt.f32.partialorder %v4415, 0.0
        %vm4427 = vcmp.gt.f32.partialorder %v4418, 0.0
        %v4428 = vmul.f32 %v4397, 0.01
        %v4429 = vmul.f32 %v4400, 0.01
        %v4430 = vmul.f32 %v4403, 0.01
        %v4431 = vmul.f32 %v4406, 0.01
        %v4432 = vmul.f32 %v4409, 0.01
        %v4433 = vmul.f32 %v4412, 0.01
        %v4434 = vmul.f32 %v4415, 0.01
        %v4435 = vmul.f32 %v4418, 0.01
        %v4436 = vsel %vm4420, %v4397, %v4428
        %v4437 = vsel %vm4421, %v4400, %v4429
        %v4438 = vsel %vm4422, %v4403, %v4430
        %v4439 = vsel %vm4423, %v4406, %v4431
        %v4440 = vsel %vm4424, %v4409, %v4432
        %v4441 = vsel %vm4425, %v4412, %v4433
        %v4442 = vsel %vm4426, %v4415, %v4434
        %v4443 = vsel %vm4427, %v4418, %v4435
        %vm4444 = vcmask 23552
        %4445 = vst.msk [vmem:[%s594] sm:$0xff] %vm4444, %v4436
        %4446 = vst.msk [vmem:[%s594 + $0x8] sm:$0xff] %vm4444, %v4437
        %4447 = vst.msk [vmem:[%s594 + $0x10] sm:$0xff] %vm4444, %v4438
        %4448 = vst.msk [vmem:[%s594 + $0x18] sm:$0xff] %vm4444, %v4439
        %4449 = vst.msk [vmem:[%s594 + $0x20] sm:$0xff] %vm4444, %v4440
        %4450 = vst.msk [vmem:[%s594 + $0x28] sm:$0xff] %vm4444, %v4441
        %4451 = vst.msk [vmem:[%s594 + $0x30] sm:$0xff] %vm4444, %v4442
        %4452 = vst.msk [vmem:[%s594 + $0x38] sm:$0xff] %vm4444, %v4443
        %s4453 = smul.u32 8, %s37
        %p4454 = scmp.lt.s32.totalorder %s36, 1
        %s4455 = scalar_select %p4454, %s36, 1
        %p4456 = scmp.lt.s32.totalorder %s4453, 7
        %s4457 = scalar_select %p4456, %s4453, 7
        %s4458 = smul.addr %s4455, 8
        %s4459 = sadd.s32 %s4457, %s4458
        %s4460 = smul.addr %s4459, 8
        %s4461 = scalar_lea.vmem %s12, %s4460
        // Predicated region
        $region101: #{tpu_custom_call.1} parent=67 // pred_check
          %p4462 = pneg %p331
        $region102: #{tpu_custom_call.1} parent=67 // pred_check_branch
          %4464 = sbr.rel (%p4462) target = $region104
        $region103: #{tpu_custom_call.1} parent=67 // pred_region
          %s4465 = smul.u32 8, %s37
        $region104: #{tpu_custom_call.1} parent=67 // pred_fallthru
          _
      $region68: #{tpu_custom_call.1} parent=5 // pred_fallthru
        _
      %p4466 = scmp.le.s32.totalorder 2, %s27
      // Predicated region
      $region105: #{tpu_custom_call.1} parent=5 // pred_check
        %p4467 = pneg %p4466
      $region106: #{tpu_custom_call.1} parent=5 // pred_check_branch
        %4469 = sbr.rel (%p4467) target = $region108
      $region107: #{tpu_custom_call.1} parent=5 // pred_region
        %s4470 = ssub.s32 %s27, 2
        // Predicated region
        $region109: #{tpu_custom_call.1} parent=107 // pred_check
          %p4471 = pneg %p337
        $region110: #{tpu_custom_call.1} parent=107 // pred_check_branch
          %4473 = sbr.rel (%p4471) target = $region112
        $region111: #{tpu_custom_call.1} parent=107 // pred_region
          %s4474 = smul.u32 8, %s39
          %p4475 = scmp.lt.s32.totalorder %s38, 1
          %s4476 = scalar_select %p4475, %s38, 1
          %p4477 = scmp.lt.s32.totalorder %s4474, 7
          %s4478 = scalar_select %p4477, %s4474, 7
          %s4479 = smul.addr %s4476, 8
          %s4480 = sadd.s32 %s4478, %s4479
          %s4481 = smul.addr %s4480, 8
          %s4482 = scalar_lea.vmem %s12, %s4481
        $region112: #{tpu_custom_call.1} parent=107 // pred_fallthru
          _
      $region108: #{tpu_custom_call.1} parent=5 // pred_fallthru
        _
    $region6: #{tpu_custom_call.1} parent=1 // loop_footer
      %s31 = sadd.s32 1, %s27
    $region7: #{tpu_custom_call.1} parent=1 // loop_footer_branch
      %26 = sbr.rel target = $region3
    $region8: #{tpu_custom_call.1} parent=1 // loop_exit
      _
    %4483 = vsyncpa [#allocation3], 1
    %s4484 = scalar_lea.sflag [#allocation3], 1
    %4485 = vsyncpa %s4484, 1
    %4486 = vsyncpa [#allocation5], 1
    %s4487 = scalar_lea.sflag [#allocation5], 1
    %4488 = vsyncpa %s4487, 1
    %4489 = vsyncpa [#allocation8], 1
    %4490 = vsyncpa [#allocation11], 1
    %4491 = vsyncpa [#allocation14], 1

</llo_original>
